<compile_context>
chip_gen: v7x
topology: tpu7x:2x2x1
jax: 0.10.0
libtpu: 0.0.40
codegen_flags: <defaults>
</compile_context>

<pallas_src>
import numpy as np

import jax
import jax.numpy as jnp
from jax import lax
from jax.experimental import pallas as pl
from jax.experimental.pallas import tpu as pltpu

# ---------------- model config (matches the reference module) ---------------
N_EMBD = 128          # n_embd
NUM_HEADS = 4
HEAD_DIM = N_EMBD // NUM_HEADS
NUM_LAYERS = 2
VOCAB_SIZE = 64       # "len(chars)" stand-in
V_PAD = 128           # LM-head output padded to a full lane group
BLOCK_SIZE = 128      # positional table size
EPS = 1e-5

# packed small-params slab layout
VEC_W = 4 * N_EMBD               # 512 lanes per row (widest vector = ff1 bias)
ROWS_PER_LAYER = 8
VEC_ROWS_PAD = 24                # 19 used rows, padded to a multiple of 8


def _layernorm(x, gamma, beta):
    mean = jnp.mean(x, axis=-1, keepdims=True)
    var = jnp.mean((x - mean) ** 2, axis=-1, keepdims=True)
    return (x - mean) * lax.rsqrt(var + EPS) * gamma + beta


# ---------------- fused Pallas kernel ----------------------------------------
def fused_transformer_kernel(idx_ref, pos_ref, temb_ref, vec_ref,
                             wqkv_ref, wout_ref, wff1_ref, wff2_ref,
                             whead_ref, o_ref):
    M = idx_ref.shape[0]            # flattened rows = B*T
    T = pos_ref.shape[0]
    B = M // T
    E, H, D = N_EMBD, NUM_HEADS, HEAD_DIM
    MA = H * M                      # rows of the fused (block-diag) attention

    # ---- fused embedding: one-hot(idx) @ token_emb + tiled positional ----
    onehot = jnp.where(
        idx_ref[...] == lax.broadcasted_iota(jnp.int32, (M, VOCAB_SIZE), 1),
        1.0, 0.0).astype(jnp.bfloat16)
    tok = jnp.dot(onehot, temb_ref[...], preferred_element_type=jnp.float32)
    pos = jnp.concatenate([pos_ref[...]] * B, axis=0)          # (M, E) f32
    x = tok + pos

    # ---- block-diagonal (per batch*head) causal additive mask, built once --
    # row ordering of the fused attention matrix: r = h*(B*T) + b*T + t
    # T is a power of two (asserted in the wrapper) -> shifts/ands only.
    shift = int(T).bit_length() - 1
    row = lax.broadcasted_iota(jnp.int32, (MA, MA), 0)
    col = lax.broadcasted_iota(jnp.int32, (MA, MA), 1)
    same_blk = jnp.right_shift(row, shift) == jnp.right_shift(col, shift)
    causal = jnp.bitwise_and(row, T - 1) >= jnp.bitwise_and(col, T - 1)
    mask_add = jnp.where(same_blk & causal, 0.0, -1e9).astype(jnp.float32)
    scale = 1.0 / (D ** 0.5)

    def vec_row(idx, width):
        return vec_ref[idx][:width]          # static row + lane slice

    for l in range(NUM_LAYERS):              # static unroll, L=2
        base = l * ROWS_PER_LAYER
        ln1_g = vec_row(base + 0, E)
        ln1_b = vec_row(base + 1, E)
        ln2_g = vec_row(base + 2, E)
        ln2_b = vec_row(base + 3, E)
        out_b = vec_row(base + 4, E)
        ff2_b = vec_row(base + 5, E)
        in_b = vec_row(base + 6, 3 * E)
        ff1_b = vec_row(base + 7, 4 * E)

        # ---- attention branch (pre-LN) ----
        xn = _layernorm(x, ln1_g, ln1_b)
        qkv = jnp.dot(xn.astype(jnp.bfloat16), wqkv_ref[l],
                      preferred_element_type=jnp.float32) + in_b
        q = qkv[:, :E] * scale
        k = qkv[:, E:2 * E]
        v = qkv[:, 2 * E:]

        # (M, H*D) -> (H*M, D): head-major stacking, one big score matmul
        qh = jnp.concatenate([q[:, h * D:(h + 1) * D] for h in range(H)], 0)
        kh = jnp.concatenate([k[:, h * D:(h + 1) * D] for h in range(H)], 0)
        vh = jnp.concatenate([v[:, h * D:(h + 1) * D] for h in range(H)], 0)

        s = lax.dot_general(qh.astype(jnp.bfloat16), kh.astype(jnp.bfloat16),
                            (((1,), (1,)), ((), ())),
                            preferred_element_type=jnp.float32)   # (MA, MA)
        s = s + mask_add
        s = s - jnp.max(s, axis=-1, keepdims=True)
        p = jnp.exp(s)
        p = p * pl.reciprocal(jnp.sum(p, axis=-1, keepdims=True), approx=True)
        pv = jnp.dot(p.astype(jnp.bfloat16), vh.astype(jnp.bfloat16),
                     preferred_element_type=jnp.float32)          # (MA, D)

        # back to (M, H*D); single out-projection matmul per layer
        attn = jnp.concatenate([pv[h * M:(h + 1) * M, :] for h in range(H)], 1)
        attn = jnp.dot(attn.astype(jnp.bfloat16), wout_ref[l],
                       preferred_element_type=jnp.float32) + out_b
        x = x + attn

        # ---- feed-forward branch (pre-LN) ----
        xn2 = _layernorm(x, ln2_g, ln2_b)
        h1 = jnp.dot(xn2.astype(jnp.bfloat16), wff1_ref[l],
                     preferred_element_type=jnp.float32) + ff1_b
        h1 = jnp.maximum(h1, 0.0)
        ff = jnp.dot(h1.astype(jnp.bfloat16), wff2_ref[l],
                     preferred_element_type=jnp.float32) + ff2_b
        x = x + ff

    # ---- final LayerNorm + LM head (lane-dense, padded to 128) ----
    fbase = ROWS_PER_LAYER * NUM_LAYERS
    lnf_g = vec_row(fbase + 0, E)
    lnf_b = vec_row(fbase + 1, E)
    head_b = vec_row(fbase + 2, V_PAD)
    xf = _layernorm(x, lnf_g, lnf_b)
    o_ref[...] = jnp.dot(xf.astype(jnp.bfloat16), whead_ref[...],
                         preferred_element_type=jnp.float32) + head_b


# ---------------- wrapper -----------------------------------------------------
def fused_forward(idx, fp):
    """Equivalent of Transformer.forward(idx) -> logits (targets=None)."""
    B, T = idx.shape
    M = B * T
    assert T & (T - 1) == 0, "kernel mask construction assumes power-of-two T"
    idx_flat = idx.reshape(M, 1).astype(jnp.int32)
    pos = fp["pos_emb"][:T]

    def full_spec(a):
        return pl.BlockSpec(a.shape, lambda i, _n=a.ndim: (0,) * _n)

    # Single invocation: B*T rows fit easily; weights (<1 MiB bf16) stay
    # resident in VMEM.  TODO(synk): for large B, grid over 128-row blocks and
    # use pltpu.CORE_PARALLEL to shard across v7x's two TensorCores.
    logits_pad = pl.pallas_call(
        fused_transformer_kernel,
        out_shape=jax.ShapeDtypeStruct((M, V_PAD), jnp.float32),
        grid=(1,),
        in_specs=[
            full_spec(idx_flat), full_spec(pos), full_spec(fp["token_emb"]),
            full_spec(fp["vec"]),
            full_spec(fp["w_qkv"]), full_spec(fp["w_out"]),
            full_spec(fp["w_ff1"]), full_spec(fp["w_ff2"]),
            full_spec(fp["w_head"]),
        ],
        out_specs=pl.BlockSpec((M, V_PAD), lambda i: (0, 0)),
        compiler_params=pltpu.CompilerParams(
            dimension_semantics=("arbitrary",)),
    )(idx_flat, pos, fp["token_emb"], fp["vec"], fp["w_qkv"], fp["w_out"],
      fp["w_ff1"], fp["w_ff2"], fp["w_head"])
    return logits_pad.reshape(B, T, V_PAD)[..., :VOCAB_SIZE]


# ---------------- parameter init (PyTorch-style shapes) -----------------------
def init_params(key):
    def nrm(k, shape, scale=0.02):
        return (scale * jax.random.normal(k, shape)).astype(jnp.float32)

    keys = jax.random.split(key, 4 + NUM_LAYERS)
    params = {
        "token_emb": nrm(keys[0], (VOCAB_SIZE, N_EMBD)),
        "pos_emb": nrm(keys[1], (BLOCK_SIZE, N_EMBD)),
        "lnf_g": jnp.ones((N_EMBD,), jnp.float32),
        "lnf_b": jnp.zeros((N_EMBD,), jnp.float32),
        "head_w": nrm(keys[2], (VOCAB_SIZE, N_EMBD)),     # (out, in)
        "head_b": jnp.zeros((VOCAB_SIZE,), jnp.float32),
        "blocks": [],
    }
    for l in range(NUM_LAYERS):
        lk = jax.random.split(keys[4 + l], 6)
        params["blocks"].append({
            "ln1_g": jnp.ones((N_EMBD,), jnp.float32),
            "ln1_b": jnp.zeros((N_EMBD,), jnp.float32),
            "ln2_g": jnp.ones((N_EMBD,), jnp.float32),
            "ln2_b": jnp.zeros((N_EMBD,), jnp.float32),
            "in_w": nrm(lk[0], (3 * N_EMBD, N_EMBD)),     # (out, in)
            "in_b": jnp.zeros((3 * N_EMBD,), jnp.float32),
            "out_w": nrm(lk[1], (N_EMBD, N_EMBD)),
            "out_b": jnp.zeros((N_EMBD,), jnp.float32),
            "ff1_w": nrm(lk[2], (4 * N_EMBD, N_EMBD)),
            "ff1_b": jnp.zeros((4 * N_EMBD,), jnp.float32),
            "ff2_w": nrm(lk[3], (N_EMBD, 4 * N_EMBD)),
            "ff2_b": jnp.zeros((N_EMBD,), jnp.float32),
        })
    return params


def prepare_fused_params(params):
    """Pre-transpose + bf16-cast weights, pack small vectors into one slab."""
    def t_bf16(w):                       # (out, in) -> (in, out), bf16
        return jnp.asarray(w.T, dtype=jnp.bfloat16)

    w_qkv = jnp.stack([t_bf16(b["in_w"]) for b in params["blocks"]])   # (L,E,3E)
    w_out = jnp.stack([t_bf16(b["out_w"]) for b in params["blocks"]])  # (L,E,E)
    w_ff1 = jnp.stack([t_bf16(b["ff1_w"]) for b in params["blocks"]])  # (L,E,4E)
    w_ff2 = jnp.stack([t_bf16(b["ff2_w"]) for b in params["blocks"]])  # (L,4E,E)

    head_t = np.zeros((N_EMBD, V_PAD), np.float32)
    head_t[:, :VOCAB_SIZE] = np.asarray(params["head_w"]).T
    w_head = jnp.asarray(head_t, dtype=jnp.bfloat16)                   # (E,Vp)

    vec = np.zeros((VEC_ROWS_PAD, VEC_W), np.float32)

    def put(r, v):
        v = np.asarray(v).reshape(-1)
        vec[r, :v.shape[0]] = v

    for l, b in enumerate(params["blocks"]):
        base = l * ROWS_PER_LAYER
        put(base + 0, b["ln1_g"]); put(base + 1, b["ln1_b"])
        put(base + 2, b["ln2_g"]); put(base + 3, b["ln2_b"])
        put(base + 4, b["out_b"]); put(base + 5, b["ff2_b"])
        put(base + 6, b["in_b"]);  put(base + 7, b["ff1_b"])
    fbase = ROWS_PER_LAYER * NUM_LAYERS
    put(fbase + 0, params["lnf_g"]); put(fbase + 1, params["lnf_b"])
    head_b = np.zeros((V_PAD,), np.float32)
    head_b[:VOCAB_SIZE] = np.asarray(params["head_b"])
    put(fbase + 2, head_b)

    return {
        "token_emb": jnp.asarray(params["token_emb"], dtype=jnp.bfloat16),
        "pos_emb": params["pos_emb"],
        "vec": jnp.asarray(vec),
        "w_qkv": w_qkv, "w_out": w_out, "w_ff1": w_ff1, "w_ff2": w_ff2,
        "w_head": w_head,
    }


# ---------------- pure-JAX f32 reference (same math as the nn.Module) ---------
def reference_forward(idx, params):
    B, T = idx.shape
    x = jnp.take(params["token_emb"], idx, axis=0) + params["pos_emb"][:T][None]
    causal = jnp.arange(T)[None, :] <= jnp.arange(T)[:, None]
    scale = 1.0 / (HEAD_DIM ** 0.5)
    for p in params["blocks"]:
        xn = _layernorm(x, p["ln1_g"], p["ln1_b"])
        qkv = xn @ p["in_w"].T + p["in_b"]
        q, k, v = jnp.split(qkv, 3, axis=-1)
        q = q.reshape(B, T, NUM_HEADS, HEAD_DIM).transpose(0, 2, 1, 3)
        k = k.reshape(B, T, NUM_HEADS, HEAD_DIM).transpose(0, 2, 1, 3)
        v = v.reshape(B, T, NUM_HEADS, HEAD_DIM).transpose(0, 2, 1, 3)
        s = jnp.einsum("bhqd,bhkd->bhqk", q, k) * scale
        s = jnp.where(causal[None, None], s, -jnp.inf)
        a = jax.nn.softmax(s, axis=-1)
        attn = jnp.einsum("bhqk,bhkd->bhqd", a, v)
        attn = attn.transpose(0, 2, 1, 3).reshape(B, T, N_EMBD)
        x = x + attn @ p["out_w"].T + p["out_b"]
        xn2 = _layernorm(x, p["ln2_g"], p["ln2_b"])
        h1 = jax.nn.relu(xn2 @ p["ff1_w"].T + p["ff1_b"])
        x = x + h1 @ p["ff2_w"].T + p["ff2_b"]
    xf = _layernorm(x, params["lnf_g"], params["lnf_b"])
    return xf @ params["head_w"].T + params["head_b"]


# ---------------- main ---------------------------------------------------------
if __name__ == "__main__":
    key = jax.random.PRNGKey(0)
    pkey, ikey = jax.random.split(key)
    params = init_params(pkey)
    fused = prepare_fused_params(params)

    B, T = 2, 16
    idx = jax.random.randint(ikey, (B, T), 0, VOCAB_SIZE, dtype=jnp.int32)

    fwd = jax.jit(fused_forward)
    logits = jax.block_until_ready(fwd(idx, fused))

    assert logits.shape == (B, T, VOCAB_SIZE)
    assert bool(jnp.all(jnp.isfinite(logits)))

    ref = jax.block_until_ready(reference_forward(idx, params))
    # bf16 matmul inputs / bf16 token table with f32 accumulation vs f32 ref
    np.testing.assert_allclose(np.asarray(logits), np.asarray(ref),
                               rtol=2e-2, atol=2e-2)

    # TODO(synk): training-mode dropout and the cross-entropy loss / generate()
    # sampling paths are intentionally not implemented (inference forward only).
    print("KERNEL_OK")
</pallas_src>

<mosaic_0001>
module attributes {stable_mosaic.version = 11 : i64} {
  func.func @fused_transformer_kernel(%arg0: i32, %arg1: memref<32x1xi32, #tpu.memory_space<vmem>>, %arg2: memref<16x128xf32, #tpu.memory_space<vmem>>, %arg3: memref<64x128xbf16, #tpu.memory_space<vmem>>, %arg4: memref<24x512xf32, #tpu.memory_space<vmem>>, %arg5: memref<2x128x384xbf16, #tpu.memory_space<vmem>>, %arg6: memref<2x128x128xbf16, #tpu.memory_space<vmem>>, %arg7: memref<2x128x512xbf16, #tpu.memory_space<vmem>>, %arg8: memref<2x512x128xbf16, #tpu.memory_space<vmem>>, %arg9: memref<128x128xbf16, #tpu.memory_space<vmem>>, %arg10: memref<32x128xf32, #tpu.memory_space<vmem>>) attributes {dimension_semantics = [#tpu.dimension_semantics<arbitrary>], iteration_bounds = array<i64: 1>, scalar_prefetch = 0 : i64, scratch_operands = 0 : i64, tpu.core_type = #tpu.core_type<tc>, window_params = [{pipeline_mode = #tpu.pipeline_mode<synchronous>, transform_indices = @transform_0, window_bounds = array<i64: 32, 1>}, {pipeline_mode = #tpu.pipeline_mode<synchronous>, transform_indices = @transform_1, window_bounds = array<i64: 16, 128>}, {pipeline_mode = #tpu.pipeline_mode<synchronous>, transform_indices = @transform_2, window_bounds = array<i64: 64, 128>}, {pipeline_mode = #tpu.pipeline_mode<synchronous>, transform_indices = @transform_3, window_bounds = array<i64: 24, 512>}, {pipeline_mode = #tpu.pipeline_mode<synchronous>, transform_indices = @transform_4, window_bounds = array<i64: 2, 128, 384>}, {pipeline_mode = #tpu.pipeline_mode<synchronous>, transform_indices = @transform_5, window_bounds = array<i64: 2, 128, 128>}, {pipeline_mode = #tpu.pipeline_mode<synchronous>, transform_indices = @transform_6, window_bounds = array<i64: 2, 128, 512>}, {pipeline_mode = #tpu.pipeline_mode<synchronous>, transform_indices = @transform_7, window_bounds = array<i64: 2, 512, 128>}, {pipeline_mode = #tpu.pipeline_mode<synchronous>, transform_indices = @transform_8, window_bounds = array<i64: 128, 128>}, {pipeline_mode = #tpu.pipeline_mode<synchronous>, transform_indices = @transform_9, window_bounds = array<i64: 32, 128>}]} {
    %c0 = arith.constant 0 : index
    %c0_0 = arith.constant 0 : index
    %0 = vector.load %arg1[%c0, %c0_0] : memref<32x1xi32, #tpu.memory_space<vmem>>, vector<32x1xi32>
    %1 = tpu.iota {dimensions = array<i32: 1>} : vector<32x64xi32>
    %2 = vector.broadcast %0 : vector<32x1xi32> to vector<32x64xi32>
    %3 = arith.cmpi eq, %2, %1 : vector<32x64xi32>
    %cst = arith.constant 1.000000e+00 : f32
    %cst_1 = arith.constant 0.000000e+00 : f32
    %4 = vector.broadcast %cst : f32 to vector<32x64xf32>
    %5 = vector.broadcast %cst_1 : f32 to vector<32x64xf32>
    %6 = arith.select %3, %4, %5 : vector<32x64xi1>, vector<32x64xf32>
    %7 = arith.truncf %6 : vector<32x64xf32> to vector<32x64xbf16>
    %c0_2 = arith.constant 0 : index
    %c0_3 = arith.constant 0 : index
    %8 = vector.load %arg3[%c0_2, %c0_3] : memref<64x128xbf16, #tpu.memory_space<vmem>>, vector<64x128xbf16>
    %cst_4 = arith.constant dense<0.000000e+00> : vector<32x128xf32>
    %9 = tpu.matmul %7, %8, %cst_4 {dimension_numbers = #tpu.dot_dimension_numbers<[1], [0], [0], [1], [0, 0, 1, 1], [], []>} : vector<32x64xbf16>, vector<64x128xbf16>, vector<32x128xf32> -> vector<32x128xf32>
    %c0_5 = arith.constant 0 : index
    %c0_6 = arith.constant 0 : index
    %10 = vector.load %arg2[%c0_5, %c0_6] : memref<16x128xf32, #tpu.memory_space<vmem>>, vector<16x128xf32>
    %11 = tpu.concatenate %10, %10 in 0 : vector<16x128xf32>, vector<16x128xf32> -> vector<32x128xf32>
    %12 = arith.addf %9, %11 : vector<32x128xf32>
    %13 = tpu.iota {dimensions = array<i32: 0>} : vector<128x128xi32>
    %14 = tpu.iota {dimensions = array<i32: 1>} : vector<128x128xi32>
    %c4_i32 = arith.constant 4 : i32
    %15 = vector.broadcast %c4_i32 : i32 to vector<128x128xi32>
    %16 = arith.shrsi %13, %15 : vector<128x128xi32>
    %c4_i32_7 = arith.constant 4 : i32
    %17 = vector.broadcast %c4_i32_7 : i32 to vector<128x128xi32>
    %18 = arith.shrsi %14, %17 : vector<128x128xi32>
    %19 = arith.cmpi eq, %16, %18 : vector<128x128xi32>
    %c15_i32 = arith.constant 15 : i32
    %20 = vector.broadcast %c15_i32 : i32 to vector<128x128xi32>
    %21 = arith.andi %13, %20 : vector<128x128xi32>
    %c15_i32_8 = arith.constant 15 : i32
    %22 = vector.broadcast %c15_i32_8 : i32 to vector<128x128xi32>
    %23 = arith.andi %14, %22 : vector<128x128xi32>
    %24 = arith.cmpi sge, %21, %23 : vector<128x128xi32>
    %25 = arith.andi %19, %24 : vector<128x128xi1>
    %cst_9 = arith.constant 0.000000e+00 : f32
    %cst_10 = arith.constant -1.000000e+09 : f32
    %26 = vector.broadcast %cst_9 : f32 to vector<128x128xf32>
    %27 = vector.broadcast %cst_10 : f32 to vector<128x128xf32>
    %28 = arith.select %25, %26, %27 : vector<128x128xi1>, vector<128x128xf32>
    %c0_11 = arith.constant 0 : index
    %c0_12 = arith.constant 0 : index
    %29 = vector.load %arg4[%c0_11, %c0_12] : memref<24x512xf32, #tpu.memory_space<vmem>>, vector<1x512xf32>
    %30 = vector.shape_cast %29 : vector<1x512xf32> to vector<512xf32>
    %31 = vector.extract_strided_slice %30 {offsets = [0], sizes = [128], strides = [1]} : vector<512xf32> to vector<128xf32>
    %c1 = arith.constant 1 : index
    %c0_13 = arith.constant 0 : index
    %32 = vector.load %arg4[%c1, %c0_13] : memref<24x512xf32, #tpu.memory_space<vmem>>, vector<1x512xf32>
    %33 = vector.shape_cast %32 : vector<1x512xf32> to vector<512xf32>
    %34 = vector.extract_strided_slice %33 {offsets = [0], sizes = [128], strides = [1]} : vector<512xf32> to vector<128xf32>
    %c2 = arith.constant 2 : index
    %c0_14 = arith.constant 0 : index
    %35 = vector.load %arg4[%c2, %c0_14] : memref<24x512xf32, #tpu.memory_space<vmem>>, vector<1x512xf32>
    %36 = vector.shape_cast %35 : vector<1x512xf32> to vector<512xf32>
    %37 = vector.extract_strided_slice %36 {offsets = [0], sizes = [128], strides = [1]} : vector<512xf32> to vector<128xf32>
    %c3 = arith.constant 3 : index
    %c0_15 = arith.constant 0 : index
    %38 = vector.load %arg4[%c3, %c0_15] : memref<24x512xf32, #tpu.memory_space<vmem>>, vector<1x512xf32>
    %39 = vector.shape_cast %38 : vector<1x512xf32> to vector<512xf32>
    %40 = vector.extract_strided_slice %39 {offsets = [0], sizes = [128], strides = [1]} : vector<512xf32> to vector<128xf32>
    %c4 = arith.constant 4 : index
    %c0_16 = arith.constant 0 : index
    %41 = vector.load %arg4[%c4, %c0_16] : memref<24x512xf32, #tpu.memory_space<vmem>>, vector<1x512xf32>
    %42 = vector.shape_cast %41 : vector<1x512xf32> to vector<512xf32>
    %43 = vector.extract_strided_slice %42 {offsets = [0], sizes = [128], strides = [1]} : vector<512xf32> to vector<128xf32>
    %c5 = arith.constant 5 : index
    %c0_17 = arith.constant 0 : index
    %44 = vector.load %arg4[%c5, %c0_17] : memref<24x512xf32, #tpu.memory_space<vmem>>, vector<1x512xf32>
    %45 = vector.shape_cast %44 : vector<1x512xf32> to vector<512xf32>
    %46 = vector.extract_strided_slice %45 {offsets = [0], sizes = [128], strides = [1]} : vector<512xf32> to vector<128xf32>
    %c6 = arith.constant 6 : index
    %c0_18 = arith.constant 0 : index
    %47 = vector.load %arg4[%c6, %c0_18] : memref<24x512xf32, #tpu.memory_space<vmem>>, vector<1x512xf32>
    %48 = vector.shape_cast %47 : vector<1x512xf32> to vector<512xf32>
    %49 = vector.extract_strided_slice %48 {offsets = [0], sizes = [384], strides = [1]} : vector<512xf32> to vector<384xf32>
    %c7 = arith.constant 7 : index
    %c0_19 = arith.constant 0 : index
    %50 = vector.load %arg4[%c7, %c0_19] : memref<24x512xf32, #tpu.memory_space<vmem>>, vector<1x512xf32>
    %51 = vector.shape_cast %50 : vector<1x512xf32> to vector<512xf32>
    %cst_20 = arith.constant dense<0.000000e+00> : vector<32xf32>
    %52 = vector.multi_reduction <add>, %12, %cst_20 [1] : vector<32x128xf32> to vector<32xf32>
    %53 = vector.shape_cast %52 : vector<32xf32> to vector<32x1xf32>
    %cst_21 = arith.constant 1.280000e+02 : f32
    %54 = vector.broadcast %cst_21 : f32 to vector<32x1xf32>
    %55 = arith.divf %53, %54 : vector<32x1xf32>
    %56 = vector.broadcast %55 : vector<32x1xf32> to vector<32x128xf32>
    %57 = arith.subf %12, %56 : vector<32x128xf32>
    %58 = arith.mulf %57, %57 : vector<32x128xf32>
    %cst_22 = arith.constant dense<0.000000e+00> : vector<32xf32>
    %59 = vector.multi_reduction <add>, %58, %cst_22 [1] : vector<32x128xf32> to vector<32xf32>
    %60 = vector.shape_cast %59 : vector<32xf32> to vector<32x1xf32>
    %cst_23 = arith.constant 1.280000e+02 : f32
    %61 = vector.broadcast %cst_23 : f32 to vector<32x1xf32>
    %62 = arith.divf %60, %61 : vector<32x1xf32>
    %63 = vector.broadcast %55 : vector<32x1xf32> to vector<32x128xf32>
    %64 = arith.subf %12, %63 : vector<32x128xf32>
    %cst_24 = arith.constant 9.99999974E-6 : f32
    %65 = vector.broadcast %cst_24 : f32 to vector<32x1xf32>
    %66 = arith.addf %62, %65 : vector<32x1xf32>
    %67 = math.rsqrt %66 : vector<32x1xf32>
    %68 = vector.broadcast %67 : vector<32x1xf32> to vector<32x128xf32>
    %69 = arith.mulf %64, %68 : vector<32x128xf32>
    %70 = vector.shape_cast %31 : vector<128xf32> to vector<1x128xf32>
    %71 = vector.broadcast %70 : vector<1x128xf32> to vector<32x128xf32>
    %72 = arith.mulf %69, %71 : vector<32x128xf32>
    %73 = vector.shape_cast %34 : vector<128xf32> to vector<1x128xf32>
    %74 = vector.broadcast %73 : vector<1x128xf32> to vector<32x128xf32>
    %75 = arith.addf %72, %74 : vector<32x128xf32>
    %76 = arith.truncf %75 : vector<32x128xf32> to vector<32x128xbf16>
    %c0_25 = arith.constant 0 : index
    %c0_26 = arith.constant 0 : index
    %c0_27 = arith.constant 0 : index
    %77 = vector.load %arg5[%c0_25, %c0_26, %c0_27] : memref<2x128x384xbf16, #tpu.memory_space<vmem>>, vector<1x128x384xbf16>
    %78 = vector.shape_cast %77 : vector<1x128x384xbf16> to vector<128x384xbf16>
    %cst_28 = arith.constant dense<0.000000e+00> : vector<32x384xf32>
    %79 = tpu.matmul %76, %78, %cst_28 {dimension_numbers = #tpu.dot_dimension_numbers<[1], [0], [0], [1], [0, 0, 1, 1], [], []>} : vector<32x128xbf16>, vector<128x384xbf16>, vector<32x384xf32> -> vector<32x384xf32>
    %80 = vector.shape_cast %49 : vector<384xf32> to vector<1x384xf32>
    %81 = vector.broadcast %80 : vector<1x384xf32> to vector<32x384xf32>
    %82 = arith.addf %79, %81 : vector<32x384xf32>
    %83 = vector.extract_strided_slice %82 {offsets = [0, 0], sizes = [32, 128], strides = [1, 1]} : vector<32x384xf32> to vector<32x128xf32>
    %cst_29 = arith.constant 0.176776692 : f32
    %84 = vector.broadcast %cst_29 : f32 to vector<32x128xf32>
    %85 = arith.mulf %83, %84 : vector<32x128xf32>
    %86 = vector.extract_strided_slice %82 {offsets = [0, 128], sizes = [32, 128], strides = [1, 1]} : vector<32x384xf32> to vector<32x128xf32>
    %87 = vector.extract_strided_slice %82 {offsets = [0, 256], sizes = [32, 128], strides = [1, 1]} : vector<32x384xf32> to vector<32x128xf32>
    %88 = vector.extract_strided_slice %85 {offsets = [0, 0], sizes = [32, 32], strides = [1, 1]} : vector<32x128xf32> to vector<32x32xf32>
    %89 = vector.extract_strided_slice %85 {offsets = [0, 32], sizes = [32, 32], strides = [1, 1]} : vector<32x128xf32> to vector<32x32xf32>
    %90 = vector.extract_strided_slice %85 {offsets = [0, 64], sizes = [32, 32], strides = [1, 1]} : vector<32x128xf32> to vector<32x32xf32>
    %91 = vector.extract_strided_slice %85 {offsets = [0, 96], sizes = [32, 32], strides = [1, 1]} : vector<32x128xf32> to vector<32x32xf32>
    %92 = tpu.concatenate %88, %89, %90, %91 in 0 : vector<32x32xf32>, vector<32x32xf32>, vector<32x32xf32>, vector<32x32xf32> -> vector<128x32xf32>
    %93 = vector.extract_strided_slice %86 {offsets = [0, 0], sizes = [32, 32], strides = [1, 1]} : vector<32x128xf32> to vector<32x32xf32>
    %94 = vector.extract_strided_slice %86 {offsets = [0, 32], sizes = [32, 32], strides = [1, 1]} : vector<32x128xf32> to vector<32x32xf32>
    %95 = vector.extract_strided_slice %86 {offsets = [0, 64], sizes = [32, 32], strides = [1, 1]} : vector<32x128xf32> to vector<32x32xf32>
    %96 = vector.extract_strided_slice %86 {offsets = [0, 96], sizes = [32, 32], strides = [1, 1]} : vector<32x128xf32> to vector<32x32xf32>
    %97 = tpu.concatenate %93, %94, %95, %96 in 0 : vector<32x32xf32>, vector<32x32xf32>, vector<32x32xf32>, vector<32x32xf32> -> vector<128x32xf32>
    %98 = vector.extract_strided_slice %87 {offsets = [0, 0], sizes = [32, 32], strides = [1, 1]} : vector<32x128xf32> to vector<32x32xf32>
    %99 = vector.extract_strided_slice %87 {offsets = [0, 32], sizes = [32, 32], strides = [1, 1]} : vector<32x128xf32> to vector<32x32xf32>
    %100 = vector.extract_strided_slice %87 {offsets = [0, 64], sizes = [32, 32], strides = [1, 1]} : vector<32x128xf32> to vector<32x32xf32>
    %101 = vector.extract_strided_slice %87 {offsets = [0, 96], sizes = [32, 32], strides = [1, 1]} : vector<32x128xf32> to vector<32x32xf32>
    %102 = tpu.concatenate %98, %99, %100, %101 in 0 : vector<32x32xf32>, vector<32x32xf32>, vector<32x32xf32>, vector<32x32xf32> -> vector<128x32xf32>
    %103 = arith.truncf %92 : vector<128x32xf32> to vector<128x32xbf16>
    %104 = arith.truncf %97 : vector<128x32xf32> to vector<128x32xbf16>
    %cst_30 = arith.constant dense<0.000000e+00> : vector<128x128xf32>
    %105 = tpu.matmul %103, %104, %cst_30 {dimension_numbers = #tpu.dot_dimension_numbers<[1], [1], [0], [0], [0, 0, 1, 0], [], []>} : vector<128x32xbf16>, vector<128x32xbf16>, vector<128x128xf32> -> vector<128x128xf32>
    %106 = arith.addf %105, %28 : vector<128x128xf32>
    %cst_31 = arith.constant dense<0xFF800000> : vector<128xf32>
    %107 = vector.multi_reduction <maximumf>, %106, %cst_31 [1] : vector<128x128xf32> to vector<128xf32>
    %108 = vector.shape_cast %107 : vector<128xf32> to vector<128x1xf32>
    %109 = vector.broadcast %108 : vector<128x1xf32> to vector<128x128xf32>
    %110 = arith.subf %106, %109 : vector<128x128xf32>
    %111 = math.exp %110 : vector<128x128xf32>
    %cst_32 = arith.constant dense<0.000000e+00> : vector<128xf32>
    %112 = vector.multi_reduction <add>, %111, %cst_32 [1] : vector<128x128xf32> to vector<128xf32>
    %113 = vector.shape_cast %112 : vector<128xf32> to vector<128x1xf32>
    %114 = tpu.reciprocal %113 {approx = true} : vector<128x1xf32> -> vector<128x1xf32>
    %115 = vector.broadcast %114 : vector<128x1xf32> to vector<128x128xf32>
    %116 = arith.mulf %111, %115 : vector<128x128xf32>
    %117 = arith.truncf %116 : vector<128x128xf32> to vector<128x128xbf16>
    %118 = arith.truncf %102 : vector<128x32xf32> to vector<128x32xbf16>
    %cst_33 = arith.constant dense<0.000000e+00> : vector<128x32xf32>
    %119 = tpu.matmul %117, %118, %cst_33 {dimension_numbers = #tpu.dot_dimension_numbers<[1], [0], [0], [1], [0, 0, 1, 1], [], []>} : vector<128x128xbf16>, vector<128x32xbf16>, vector<128x32xf32> -> vector<128x32xf32>
    %120 = vector.extract_strided_slice %119 {offsets = [0, 0], sizes = [32, 32], strides = [1, 1]} : vector<128x32xf32> to vector<32x32xf32>
    %121 = vector.extract_strided_slice %119 {offsets = [32, 0], sizes = [32, 32], strides = [1, 1]} : vector<128x32xf32> to vector<32x32xf32>
    %122 = vector.extract_strided_slice %119 {offsets = [64, 0], sizes = [32, 32], strides = [1, 1]} : vector<128x32xf32> to vector<32x32xf32>
    %123 = vector.extract_strided_slice %119 {offsets = [96, 0], sizes = [32, 32], strides = [1, 1]} : vector<128x32xf32> to vector<32x32xf32>
    %124 = tpu.concatenate %120, %121, %122, %123 in 1 : vector<32x32xf32>, vector<32x32xf32>, vector<32x32xf32>, vector<32x32xf32> -> vector<32x128xf32>
    %125 = arith.truncf %124 : vector<32x128xf32> to vector<32x128xbf16>
    %c0_34 = arith.constant 0 : index
    %c0_35 = arith.constant 0 : index
    %c0_36 = arith.constant 0 : index
    %126 = vector.load %arg6[%c0_34, %c0_35, %c0_36] : memref<2x128x128xbf16, #tpu.memory_space<vmem>>, vector<1x128x128xbf16>
    %127 = vector.shape_cast %126 : vector<1x128x128xbf16> to vector<128x128xbf16>
    %cst_37 = arith.constant dense<0.000000e+00> : vector<32x128xf32>
    %128 = tpu.matmul %125, %127, %cst_37 {dimension_numbers = #tpu.dot_dimension_numbers<[1], [0], [0], [1], [0, 0, 1, 1], [], []>} : vector<32x128xbf16>, vector<128x128xbf16>, vector<32x128xf32> -> vector<32x128xf32>
    %129 = vector.shape_cast %43 : vector<128xf32> to vector<1x128xf32>
    %130 = vector.broadcast %129 : vector<1x128xf32> to vector<32x128xf32>
    %131 = arith.addf %128, %130 : vector<32x128xf32>
    %132 = arith.addf %12, %131 : vector<32x128xf32>
    %cst_38 = arith.constant dense<0.000000e+00> : vector<32xf32>
    %133 = vector.multi_reduction <add>, %132, %cst_38 [1] : vector<32x128xf32> to vector<32xf32>
    %134 = vector.shape_cast %133 : vector<32xf32> to vector<32x1xf32>
    %cst_39 = arith.constant 1.280000e+02 : f32
    %135 = vector.broadcast %cst_39 : f32 to vector<32x1xf32>
    %136 = arith.divf %134, %135 : vector<32x1xf32>
    %137 = vector.broadcast %136 : vector<32x1xf32> to vector<32x128xf32>
    %138 = arith.subf %132, %137 : vector<32x128xf32>
    %139 = arith.mulf %138, %138 : vector<32x128xf32>
    %cst_40 = arith.constant dense<0.000000e+00> : vector<32xf32>
    %140 = vector.multi_reduction <add>, %139, %cst_40 [1] : vector<32x128xf32> to vector<32xf32>
    %141 = vector.shape_cast %140 : vector<32xf32> to vector<32x1xf32>
    %cst_41 = arith.constant 1.280000e+02 : f32
    %142 = vector.broadcast %cst_41 : f32 to vector<32x1xf32>
    %143 = arith.divf %141, %142 : vector<32x1xf32>
    %144 = vector.broadcast %136 : vector<32x1xf32> to vector<32x128xf32>
    %145 = arith.subf %132, %144 : vector<32x128xf32>
    %cst_42 = arith.constant 9.99999974E-6 : f32
    %146 = vector.broadcast %cst_42 : f32 to vector<32x1xf32>
    %147 = arith.addf %143, %146 : vector<32x1xf32>
    %148 = math.rsqrt %147 : vector<32x1xf32>
    %149 = vector.broadcast %148 : vector<32x1xf32> to vector<32x128xf32>
    %150 = arith.mulf %145, %149 : vector<32x128xf32>
    %151 = vector.shape_cast %37 : vector<128xf32> to vector<1x128xf32>
    %152 = vector.broadcast %151 : vector<1x128xf32> to vector<32x128xf32>
    %153 = arith.mulf %150, %152 : vector<32x128xf32>
    %154 = vector.shape_cast %40 : vector<128xf32> to vector<1x128xf32>
    %155 = vector.broadcast %154 : vector<1x128xf32> to vector<32x128xf32>
    %156 = arith.addf %153, %155 : vector<32x128xf32>
    %157 = arith.truncf %156 : vector<32x128xf32> to vector<32x128xbf16>
    %c0_43 = arith.constant 0 : index
    %c0_44 = arith.constant 0 : index
    %c0_45 = arith.constant 0 : index
    %158 = vector.load %arg7[%c0_43, %c0_44, %c0_45] : memref<2x128x512xbf16, #tpu.memory_space<vmem>>, vector<1x128x512xbf16>
    %159 = vector.shape_cast %158 : vector<1x128x512xbf16> to vector<128x512xbf16>
    %cst_46 = arith.constant dense<0.000000e+00> : vector<32x512xf32>
    %160 = tpu.matmul %157, %159, %cst_46 {dimension_numbers = #tpu.dot_dimension_numbers<[1], [0], [0], [1], [0, 0, 1, 1], [], []>} : vector<32x128xbf16>, vector<128x512xbf16>, vector<32x512xf32> -> vector<32x512xf32>
    %161 = vector.shape_cast %51 : vector<512xf32> to vector<1x512xf32>
    %162 = vector.broadcast %161 : vector<1x512xf32> to vector<32x512xf32>
    %163 = arith.addf %160, %162 : vector<32x512xf32>
    %cst_47 = arith.constant 0.000000e+00 : f32
    %164 = vector.broadcast %cst_47 : f32 to vector<32x512xf32>
    %165 = arith.maximumf %163, %164 : vector<32x512xf32>
    %166 = arith.truncf %165 : vector<32x512xf32> to vector<32x512xbf16>
    %c0_48 = arith.constant 0 : index
    %c0_49 = arith.constant 0 : index
    %c0_50 = arith.constant 0 : index
    %167 = vector.load %arg8[%c0_48, %c0_49, %c0_50] : memref<2x512x128xbf16, #tpu.memory_space<vmem>>, vector<1x512x128xbf16>
    %168 = vector.shape_cast %167 : vector<1x512x128xbf16> to vector<512x128xbf16>
    %cst_51 = arith.constant dense<0.000000e+00> : vector<32x128xf32>
    %169 = tpu.matmul %166, %168, %cst_51 {dimension_numbers = #tpu.dot_dimension_numbers<[1], [0], [0], [1], [0, 0, 1, 1], [], []>} : vector<32x512xbf16>, vector<512x128xbf16>, vector<32x128xf32> -> vector<32x128xf32>
    %170 = vector.shape_cast %46 : vector<128xf32> to vector<1x128xf32>
    %171 = vector.broadcast %170 : vector<1x128xf32> to vector<32x128xf32>
    %172 = arith.addf %169, %171 : vector<32x128xf32>
    %173 = arith.addf %132, %172 : vector<32x128xf32>
    %c8 = arith.constant 8 : index
    %c0_52 = arith.constant 0 : index
    %174 = vector.load %arg4[%c8, %c0_52] : memref<24x512xf32, #tpu.memory_space<vmem>>, vector<1x512xf32>
    %175 = vector.shape_cast %174 : vector<1x512xf32> to vector<512xf32>
    %176 = vector.extract_strided_slice %175 {offsets = [0], sizes = [128], strides = [1]} : vector<512xf32> to vector<128xf32>
    %c9 = arith.constant 9 : index
    %c0_53 = arith.constant 0 : index
    %177 = vector.load %arg4[%c9, %c0_53] : memref<24x512xf32, #tpu.memory_space<vmem>>, vector<1x512xf32>
    %178 = vector.shape_cast %177 : vector<1x512xf32> to vector<512xf32>
    %179 = vector.extract_strided_slice %178 {offsets = [0], sizes = [128], strides = [1]} : vector<512xf32> to vector<128xf32>
    %c10 = arith.constant 10 : index
    %c0_54 = arith.constant 0 : index
    %180 = vector.load %arg4[%c10, %c0_54] : memref<24x512xf32, #tpu.memory_space<vmem>>, vector<1x512xf32>
    %181 = vector.shape_cast %180 : vector<1x512xf32> to vector<512xf32>
    %182 = vector.extract_strided_slice %181 {offsets = [0], sizes = [128], strides = [1]} : vector<512xf32> to vector<128xf32>
    %c11 = arith.constant 11 : index
    %c0_55 = arith.constant 0 : index
    %183 = vector.load %arg4[%c11, %c0_55] : memref<24x512xf32, #tpu.memory_space<vmem>>, vector<1x512xf32>
    %184 = vector.shape_cast %183 : vector<1x512xf32> to vector<512xf32>
    %185 = vector.extract_strided_slice %184 {offsets = [0], sizes = [128], strides = [1]} : vector<512xf32> to vector<128xf32>
    %c12 = arith.constant 12 : index
    %c0_56 = arith.constant 0 : index
    %186 = vector.load %arg4[%c12, %c0_56] : memref<24x512xf32, #tpu.memory_space<vmem>>, vector<1x512xf32>
    %187 = vector.shape_cast %186 : vector<1x512xf32> to vector<512xf32>
    %188 = vector.extract_strided_slice %187 {offsets = [0], sizes = [128], strides = [1]} : vector<512xf32> to vector<128xf32>
    %c13 = arith.constant 13 : index
    %c0_57 = arith.constant 0 : index
    %189 = vector.load %arg4[%c13, %c0_57] : memref<24x512xf32, #tpu.memory_space<vmem>>, vector<1x512xf32>
    %190 = vector.shape_cast %189 : vector<1x512xf32> to vector<512xf32>
    %191 = vector.extract_strided_slice %190 {offsets = [0], sizes = [128], strides = [1]} : vector<512xf32> to vector<128xf32>
    %c14 = arith.constant 14 : index
    %c0_58 = arith.constant 0 : index
    %192 = vector.load %arg4[%c14, %c0_58] : memref<24x512xf32, #tpu.memory_space<vmem>>, vector<1x512xf32>
    %193 = vector.shape_cast %192 : vector<1x512xf32> to vector<512xf32>
    %194 = vector.extract_strided_slice %193 {offsets = [0], sizes = [384], strides = [1]} : vector<512xf32> to vector<384xf32>
    %c15 = arith.constant 15 : index
    %c0_59 = arith.constant 0 : index
    %195 = vector.load %arg4[%c15, %c0_59] : memref<24x512xf32, #tpu.memory_space<vmem>>, vector<1x512xf32>
    %196 = vector.shape_cast %195 : vector<1x512xf32> to vector<512xf32>
    %cst_60 = arith.constant dense<0.000000e+00> : vector<32xf32>
    %197 = vector.multi_reduction <add>, %173, %cst_60 [1] : vector<32x128xf32> to vector<32xf32>
    %198 = vector.shape_cast %197 : vector<32xf32> to vector<32x1xf32>
    %cst_61 = arith.constant 1.280000e+02 : f32
    %199 = vector.broadcast %cst_61 : f32 to vector<32x1xf32>
    %200 = arith.divf %198, %199 : vector<32x1xf32>
    %201 = vector.broadcast %200 : vector<32x1xf32> to vector<32x128xf32>
    %202 = arith.subf %173, %201 : vector<32x128xf32>
    %203 = arith.mulf %202, %202 : vector<32x128xf32>
    %cst_62 = arith.constant dense<0.000000e+00> : vector<32xf32>
    %204 = vector.multi_reduction <add>, %203, %cst_62 [1] : vector<32x128xf32> to vector<32xf32>
    %205 = vector.shape_cast %204 : vector<32xf32> to vector<32x1xf32>
    %cst_63 = arith.constant 1.280000e+02 : f32
    %206 = vector.broadcast %cst_63 : f32 to vector<32x1xf32>
    %207 = arith.divf %205, %206 : vector<32x1xf32>
    %208 = vector.broadcast %200 : vector<32x1xf32> to vector<32x128xf32>
    %209 = arith.subf %173, %208 : vector<32x128xf32>
    %cst_64 = arith.constant 9.99999974E-6 : f32
    %210 = vector.broadcast %cst_64 : f32 to vector<32x1xf32>
    %211 = arith.addf %207, %210 : vector<32x1xf32>
    %212 = math.rsqrt %211 : vector<32x1xf32>
    %213 = vector.broadcast %212 : vector<32x1xf32> to vector<32x128xf32>
    %214 = arith.mulf %209, %213 : vector<32x128xf32>
    %215 = vector.shape_cast %176 : vector<128xf32> to vector<1x128xf32>
    %216 = vector.broadcast %215 : vector<1x128xf32> to vector<32x128xf32>
    %217 = arith.mulf %214, %216 : vector<32x128xf32>
    %218 = vector.shape_cast %179 : vector<128xf32> to vector<1x128xf32>
    %219 = vector.broadcast %218 : vector<1x128xf32> to vector<32x128xf32>
    %220 = arith.addf %217, %219 : vector<32x128xf32>
    %221 = arith.truncf %220 : vector<32x128xf32> to vector<32x128xbf16>
    %c1_65 = arith.constant 1 : index
    %c0_66 = arith.constant 0 : index
    %c0_67 = arith.constant 0 : index
    %222 = vector.load %arg5[%c1_65, %c0_66, %c0_67] : memref<2x128x384xbf16, #tpu.memory_space<vmem>>, vector<1x128x384xbf16>
    %223 = vector.shape_cast %222 : vector<1x128x384xbf16> to vector<128x384xbf16>
    %cst_68 = arith.constant dense<0.000000e+00> : vector<32x384xf32>
    %224 = tpu.matmul %221, %223, %cst_68 {dimension_numbers = #tpu.dot_dimension_numbers<[1], [0], [0], [1], [0, 0, 1, 1], [], []>} : vector<32x128xbf16>, vector<128x384xbf16>, vector<32x384xf32> -> vector<32x384xf32>
    %225 = vector.shape_cast %194 : vector<384xf32> to vector<1x384xf32>
    %226 = vector.broadcast %225 : vector<1x384xf32> to vector<32x384xf32>
    %227 = arith.addf %224, %226 : vector<32x384xf32>
    %228 = vector.extract_strided_slice %227 {offsets = [0, 0], sizes = [32, 128], strides = [1, 1]} : vector<32x384xf32> to vector<32x128xf32>
    %cst_69 = arith.constant 0.176776692 : f32
    %229 = vector.broadcast %cst_69 : f32 to vector<32x128xf32>
    %230 = arith.mulf %228, %229 : vector<32x128xf32>
    %231 = vector.extract_strided_slice %227 {offsets = [0, 128], sizes = [32, 128], strides = [1, 1]} : vector<32x384xf32> to vector<32x128xf32>
    %232 = vector.extract_strided_slice %227 {offsets = [0, 256], sizes = [32, 128], strides = [1, 1]} : vector<32x384xf32> to vector<32x128xf32>
    %233 = vector.extract_strided_slice %230 {offsets = [0, 0], sizes = [32, 32], strides = [1, 1]} : vector<32x128xf32> to vector<32x32xf32>
    %234 = vector.extract_strided_slice %230 {offsets = [0, 32], sizes = [32, 32], strides = [1, 1]} : vector<32x128xf32> to vector<32x32xf32>
    %235 = vector.extract_strided_slice %230 {offsets = [0, 64], sizes = [32, 32], strides = [1, 1]} : vector<32x128xf32> to vector<32x32xf32>
    %236 = vector.extract_strided_slice %230 {offsets = [0, 96], sizes = [32, 32], strides = [1, 1]} : vector<32x128xf32> to vector<32x32xf32>
    %237 = tpu.concatenate %233, %234, %235, %236 in 0 : vector<32x32xf32>, vector<32x32xf32>, vector<32x32xf32>, vector<32x32xf32> -> vector<128x32xf32>
    %238 = vector.extract_strided_slice %231 {offsets = [0, 0], sizes = [32, 32], strides = [1, 1]} : vector<32x128xf32> to vector<32x32xf32>
    %239 = vector.extract_strided_slice %231 {offsets = [0, 32], sizes = [32, 32], strides = [1, 1]} : vector<32x128xf32> to vector<32x32xf32>
    %240 = vector.extract_strided_slice %231 {offsets = [0, 64], sizes = [32, 32], strides = [1, 1]} : vector<32x128xf32> to vector<32x32xf32>
    %241 = vector.extract_strided_slice %231 {offsets = [0, 96], sizes = [32, 32], strides = [1, 1]} : vector<32x128xf32> to vector<32x32xf32>
    %242 = tpu.concatenate %238, %239, %240, %241 in 0 : vector<32x32xf32>, vector<32x32xf32>, vector<32x32xf32>, vector<32x32xf32> -> vector<128x32xf32>
    %243 = vector.extract_strided_slice %232 {offsets = [0, 0], sizes = [32, 32], strides = [1, 1]} : vector<32x128xf32> to vector<32x32xf32>
    %244 = vector.extract_strided_slice %232 {offsets = [0, 32], sizes = [32, 32], strides = [1, 1]} : vector<32x128xf32> to vector<32x32xf32>
    %245 = vector.extract_strided_slice %232 {offsets = [0, 64], sizes = [32, 32], strides = [1, 1]} : vector<32x128xf32> to vector<32x32xf32>
    %246 = vector.extract_strided_slice %232 {offsets = [0, 96], sizes = [32, 32], strides = [1, 1]} : vector<32x128xf32> to vector<32x32xf32>
    %247 = tpu.concatenate %243, %244, %245, %246 in 0 : vector<32x32xf32>, vector<32x32xf32>, vector<32x32xf32>, vector<32x32xf32> -> vector<128x32xf32>
    %248 = arith.truncf %237 : vector<128x32xf32> to vector<128x32xbf16>
    %249 = arith.truncf %242 : vector<128x32xf32> to vector<128x32xbf16>
    %cst_70 = arith.constant dense<0.000000e+00> : vector<128x128xf32>
    %250 = tpu.matmul %248, %249, %cst_70 {dimension_numbers = #tpu.dot_dimension_numbers<[1], [1], [0], [0], [0, 0, 1, 0], [], []>} : vector<128x32xbf16>, vector<128x32xbf16>, vector<128x128xf32> -> vector<128x128xf32>
    %251 = arith.addf %250, %28 : vector<128x128xf32>
    %cst_71 = arith.constant dense<0xFF800000> : vector<128xf32>
    %252 = vector.multi_reduction <maximumf>, %251, %cst_71 [1] : vector<128x128xf32> to vector<128xf32>
    %253 = vector.shape_cast %252 : vector<128xf32> to vector<128x1xf32>
    %254 = vector.broadcast %253 : vector<128x1xf32> to vector<128x128xf32>
    %255 = arith.subf %251, %254 : vector<128x128xf32>
    %256 = math.exp %255 : vector<128x128xf32>
    %cst_72 = arith.constant dense<0.000000e+00> : vector<128xf32>
    %257 = vector.multi_reduction <add>, %256, %cst_72 [1] : vector<128x128xf32> to vector<128xf32>
    %258 = vector.shape_cast %257 : vector<128xf32> to vector<128x1xf32>
    %259 = tpu.reciprocal %258 {approx = true} : vector<128x1xf32> -> vector<128x1xf32>
    %260 = vector.broadcast %259 : vector<128x1xf32> to vector<128x128xf32>
    %261 = arith.mulf %256, %260 : vector<128x128xf32>
    %262 = arith.truncf %261 : vector<128x128xf32> to vector<128x128xbf16>
    %263 = arith.truncf %247 : vector<128x32xf32> to vector<128x32xbf16>
    %cst_73 = arith.constant dense<0.000000e+00> : vector<128x32xf32>
    %264 = tpu.matmul %262, %263, %cst_73 {dimension_numbers = #tpu.dot_dimension_numbers<[1], [0], [0], [1], [0, 0, 1, 1], [], []>} : vector<128x128xbf16>, vector<128x32xbf16>, vector<128x32xf32> -> vector<128x32xf32>
    %265 = vector.extract_strided_slice %264 {offsets = [0, 0], sizes = [32, 32], strides = [1, 1]} : vector<128x32xf32> to vector<32x32xf32>
    %266 = vector.extract_strided_slice %264 {offsets = [32, 0], sizes = [32, 32], strides = [1, 1]} : vector<128x32xf32> to vector<32x32xf32>
    %267 = vector.extract_strided_slice %264 {offsets = [64, 0], sizes = [32, 32], strides = [1, 1]} : vector<128x32xf32> to vector<32x32xf32>
    %268 = vector.extract_strided_slice %264 {offsets = [96, 0], sizes = [32, 32], strides = [1, 1]} : vector<128x32xf32> to vector<32x32xf32>
    %269 = tpu.concatenate %265, %266, %267, %268 in 1 : vector<32x32xf32>, vector<32x32xf32>, vector<32x32xf32>, vector<32x32xf32> -> vector<32x128xf32>
    %270 = arith.truncf %269 : vector<32x128xf32> to vector<32x128xbf16>
    %c1_74 = arith.constant 1 : index
    %c0_75 = arith.constant 0 : index
    %c0_76 = arith.constant 0 : index
    %271 = vector.load %arg6[%c1_74, %c0_75, %c0_76] : memref<2x128x128xbf16, #tpu.memory_space<vmem>>, vector<1x128x128xbf16>
    %272 = vector.shape_cast %271 : vector<1x128x128xbf16> to vector<128x128xbf16>
    %cst_77 = arith.constant dense<0.000000e+00> : vector<32x128xf32>
    %273 = tpu.matmul %270, %272, %cst_77 {dimension_numbers = #tpu.dot_dimension_numbers<[1], [0], [0], [1], [0, 0, 1, 1], [], []>} : vector<32x128xbf16>, vector<128x128xbf16>, vector<32x128xf32> -> vector<32x128xf32>
    %274 = vector.shape_cast %188 : vector<128xf32> to vector<1x128xf32>
    %275 = vector.broadcast %274 : vector<1x128xf32> to vector<32x128xf32>
    %276 = arith.addf %273, %275 : vector<32x128xf32>
    %277 = arith.addf %173, %276 : vector<32x128xf32>
    %cst_78 = arith.constant dense<0.000000e+00> : vector<32xf32>
    %278 = vector.multi_reduction <add>, %277, %cst_78 [1] : vector<32x128xf32> to vector<32xf32>
    %279 = vector.shape_cast %278 : vector<32xf32> to vector<32x1xf32>
    %cst_79 = arith.constant 1.280000e+02 : f32
    %280 = vector.broadcast %cst_79 : f32 to vector<32x1xf32>
    %281 = arith.divf %279, %280 : vector<32x1xf32>
    %282 = vector.broadcast %281 : vector<32x1xf32> to vector<32x128xf32>
    %283 = arith.subf %277, %282 : vector<32x128xf32>
    %284 = arith.mulf %283, %283 : vector<32x128xf32>
    %cst_80 = arith.constant dense<0.000000e+00> : vector<32xf32>
    %285 = vector.multi_reduction <add>, %284, %cst_80 [1] : vector<32x128xf32> to vector<32xf32>
    %286 = vector.shape_cast %285 : vector<32xf32> to vector<32x1xf32>
    %cst_81 = arith.constant 1.280000e+02 : f32
    %287 = vector.broadcast %cst_81 : f32 to vector<32x1xf32>
    %288 = arith.divf %286, %287 : vector<32x1xf32>
    %289 = vector.broadcast %281 : vector<32x1xf32> to vector<32x128xf32>
    %290 = arith.subf %277, %289 : vector<32x128xf32>
    %cst_82 = arith.constant 9.99999974E-6 : f32
    %291 = vector.broadcast %cst_82 : f32 to vector<32x1xf32>
    %292 = arith.addf %288, %291 : vector<32x1xf32>
    %293 = math.rsqrt %292 : vector<32x1xf32>
    %294 = vector.broadcast %293 : vector<32x1xf32> to vector<32x128xf32>
    %295 = arith.mulf %290, %294 : vector<32x128xf32>
    %296 = vector.shape_cast %182 : vector<128xf32> to vector<1x128xf32>
    %297 = vector.broadcast %296 : vector<1x128xf32> to vector<32x128xf32>
    %298 = arith.mulf %295, %297 : vector<32x128xf32>
    %299 = vector.shape_cast %185 : vector<128xf32> to vector<1x128xf32>
    %300 = vector.broadcast %299 : vector<1x128xf32> to vector<32x128xf32>
    %301 = arith.addf %298, %300 : vector<32x128xf32>
    %302 = arith.truncf %301 : vector<32x128xf32> to vector<32x128xbf16>
    %c1_83 = arith.constant 1 : index
    %c0_84 = arith.constant 0 : index
    %c0_85 = arith.constant 0 : index
    %303 = vector.load %arg7[%c1_83, %c0_84, %c0_85] : memref<2x128x512xbf16, #tpu.memory_space<vmem>>, vector<1x128x512xbf16>
    %304 = vector.shape_cast %303 : vector<1x128x512xbf16> to vector<128x512xbf16>
    %cst_86 = arith.constant dense<0.000000e+00> : vector<32x512xf32>
    %305 = tpu.matmul %302, %304, %cst_86 {dimension_numbers = #tpu.dot_dimension_numbers<[1], [0], [0], [1], [0, 0, 1, 1], [], []>} : vector<32x128xbf16>, vector<128x512xbf16>, vector<32x512xf32> -> vector<32x512xf32>
    %306 = vector.shape_cast %196 : vector<512xf32> to vector<1x512xf32>
    %307 = vector.broadcast %306 : vector<1x512xf32> to vector<32x512xf32>
    %308 = arith.addf %305, %307 : vector<32x512xf32>
    %cst_87 = arith.constant 0.000000e+00 : f32
    %309 = vector.broadcast %cst_87 : f32 to vector<32x512xf32>
    %310 = arith.maximumf %308, %309 : vector<32x512xf32>
    %311 = arith.truncf %310 : vector<32x512xf32> to vector<32x512xbf16>
    %c1_88 = arith.constant 1 : index
    %c0_89 = arith.constant 0 : index
    %c0_90 = arith.constant 0 : index
    %312 = vector.load %arg8[%c1_88, %c0_89, %c0_90] : memref<2x512x128xbf16, #tpu.memory_space<vmem>>, vector<1x512x128xbf16>
    %313 = vector.shape_cast %312 : vector<1x512x128xbf16> to vector<512x128xbf16>
    %cst_91 = arith.constant dense<0.000000e+00> : vector<32x128xf32>
    %314 = tpu.matmul %311, %313, %cst_91 {dimension_numbers = #tpu.dot_dimension_numbers<[1], [0], [0], [1], [0, 0, 1, 1], [], []>} : vector<32x512xbf16>, vector<512x128xbf16>, vector<32x128xf32> -> vector<32x128xf32>
    %315 = vector.shape_cast %191 : vector<128xf32> to vector<1x128xf32>
    %316 = vector.broadcast %315 : vector<1x128xf32> to vector<32x128xf32>
    %317 = arith.addf %314, %316 : vector<32x128xf32>
    %318 = arith.addf %277, %317 : vector<32x128xf32>
    %c16 = arith.constant 16 : index
    %c0_92 = arith.constant 0 : index
    %319 = vector.load %arg4[%c16, %c0_92] : memref<24x512xf32, #tpu.memory_space<vmem>>, vector<1x512xf32>
    %320 = vector.shape_cast %319 : vector<1x512xf32> to vector<512xf32>
    %321 = vector.extract_strided_slice %320 {offsets = [0], sizes = [128], strides = [1]} : vector<512xf32> to vector<128xf32>
    %c17 = arith.constant 17 : index
    %c0_93 = arith.constant 0 : index
    %322 = vector.load %arg4[%c17, %c0_93] : memref<24x512xf32, #tpu.memory_space<vmem>>, vector<1x512xf32>
    %323 = vector.shape_cast %322 : vector<1x512xf32> to vector<512xf32>
    %324 = vector.extract_strided_slice %323 {offsets = [0], sizes = [128], strides = [1]} : vector<512xf32> to vector<128xf32>
    %c18 = arith.constant 18 : index
    %c0_94 = arith.constant 0 : index
    %325 = vector.load %arg4[%c18, %c0_94] : memref<24x512xf32, #tpu.memory_space<vmem>>, vector<1x512xf32>
    %326 = vector.shape_cast %325 : vector<1x512xf32> to vector<512xf32>
    %327 = vector.extract_strided_slice %326 {offsets = [0], sizes = [128], strides = [1]} : vector<512xf32> to vector<128xf32>
    %cst_95 = arith.constant dense<0.000000e+00> : vector<32xf32>
    %328 = vector.multi_reduction <add>, %318, %cst_95 [1] : vector<32x128xf32> to vector<32xf32>
    %329 = vector.shape_cast %328 : vector<32xf32> to vector<32x1xf32>
    %cst_96 = arith.constant 1.280000e+02 : f32
    %330 = vector.broadcast %cst_96 : f32 to vector<32x1xf32>
    %331 = arith.divf %329, %330 : vector<32x1xf32>
    %332 = vector.broadcast %331 : vector<32x1xf32> to vector<32x128xf32>
    %333 = arith.subf %318, %332 : vector<32x128xf32>
    %334 = arith.mulf %333, %333 : vector<32x128xf32>
    %cst_97 = arith.constant dense<0.000000e+00> : vector<32xf32>
    %335 = vector.multi_reduction <add>, %334, %cst_97 [1] : vector<32x128xf32> to vector<32xf32>
    %336 = vector.shape_cast %335 : vector<32xf32> to vector<32x1xf32>
    %cst_98 = arith.constant 1.280000e+02 : f32
    %337 = vector.broadcast %cst_98 : f32 to vector<32x1xf32>
    %338 = arith.divf %336, %337 : vector<32x1xf32>
    %339 = vector.broadcast %331 : vector<32x1xf32> to vector<32x128xf32>
    %340 = arith.subf %318, %339 : vector<32x128xf32>
    %cst_99 = arith.constant 9.99999974E-6 : f32
    %341 = vector.broadcast %cst_99 : f32 to vector<32x1xf32>
    %342 = arith.addf %338, %341 : vector<32x1xf32>
    %343 = math.rsqrt %342 : vector<32x1xf32>
    %344 = vector.broadcast %343 : vector<32x1xf32> to vector<32x128xf32>
    %345 = arith.mulf %340, %344 : vector<32x128xf32>
    %346 = vector.shape_cast %321 : vector<128xf32> to vector<1x128xf32>
    %347 = vector.broadcast %346 : vector<1x128xf32> to vector<32x128xf32>
    %348 = arith.mulf %345, %347 : vector<32x128xf32>
    %349 = vector.shape_cast %324 : vector<128xf32> to vector<1x128xf32>
    %350 = vector.broadcast %349 : vector<1x128xf32> to vector<32x128xf32>
    %351 = arith.addf %348, %350 : vector<32x128xf32>
    %352 = arith.truncf %351 : vector<32x128xf32> to vector<32x128xbf16>
    %c0_100 = arith.constant 0 : index
    %c0_101 = arith.constant 0 : index
    %353 = vector.load %arg9[%c0_100, %c0_101] : memref<128x128xbf16, #tpu.memory_space<vmem>>, vector<128x128xbf16>
    %cst_102 = arith.constant dense<0.000000e+00> : vector<32x128xf32>
    %354 = tpu.matmul %352, %353, %cst_102 {dimension_numbers = #tpu.dot_dimension_numbers<[1], [0], [0], [1], [0, 0, 1, 1], [], []>} : vector<32x128xbf16>, vector<128x128xbf16>, vector<32x128xf32> -> vector<32x128xf32>
    %355 = vector.shape_cast %327 : vector<128xf32> to vector<1x128xf32>
    %356 = vector.broadcast %355 : vector<1x128xf32> to vector<32x128xf32>
    %357 = arith.addf %354, %356 : vector<32x128xf32>
    %c0_103 = arith.constant 0 : index
    %c0_104 = arith.constant 0 : index
    %358 = vector.load %arg10[%c0_103, %c0_104] : memref<32x128xf32, #tpu.memory_space<vmem>>, vector<32x128xf32>
    tpu.vector_store %arg10[%c0_103, %c0_104], %357 {strides = array<i32>} : memref<32x128xf32, #tpu.memory_space<vmem>>, vector<32x128xf32>,
    return
  }
  func.func @transform_0(%arg0: i32) -> (i32, i32) {
    %c0_i32 = arith.constant 0 : i32
    %c0_i32_0 = arith.constant 0 : i32
    %c0_i32_1 = arith.constant 0 : i32
    return %c0_i32, %c0_i32_0 : i32, i32
  }
  func.func @transform_1(%arg0: i32) -> (i32, i32) {
    %c0_i32 = arith.constant 0 : i32
    %c0_i32_0 = arith.constant 0 : i32
    %c0_i32_1 = arith.constant 0 : i32
    return %c0_i32, %c0_i32_0 : i32, i32
  }
  func.func @transform_2(%arg0: i32) -> (i32, i32) {
    %c0_i32 = arith.constant 0 : i32
    %c0_i32_0 = arith.constant 0 : i32
    %c0_i32_1 = arith.constant 0 : i32
    return %c0_i32, %c0_i32_0 : i32, i32
  }
  func.func @transform_3(%arg0: i32) -> (i32, i32) {
    %c0_i32 = arith.constant 0 : i32
    %c0_i32_0 = arith.constant 0 : i32
    %c0_i32_1 = arith.constant 0 : i32
    return %c0_i32, %c0_i32_0 : i32, i32
  }
  func.func @transform_4(%arg0: i32) -> (i32, i32, i32) {
    %c0_i32 = arith.constant 0 : i32
    %c0_i32_0 = arith.constant 0 : i32
    %c0_i32_1 = arith.constant 0 : i32
    %c0_i32_2 = arith.constant 0 : i32
    return %c0_i32, %c0_i32_0, %c0_i32_1 : i32, i32, i32
  }
  func.func @transform_5(%arg0: i32) -> (i32, i32, i32) {
    %c0_i32 = arith.constant 0 : i32
    %c0_i32_0 = arith.constant 0 : i32
    %c0_i32_1 = arith.constant 0 : i32
    %c0_i32_2 = arith.constant 0 : i32
    return %c0_i32, %c0_i32_0, %c0_i32_1 : i32, i32, i32
  }
  func.func @transform_6(%arg0: i32) -> (i32, i32, i32) {
    %c0_i32 = arith.constant 0 : i32
    %c0_i32_0 = arith.constant 0 : i32
    %c0_i32_1 = arith.constant 0 : i32
    %c0_i32_2 = arith.constant 0 : i32
    return %c0_i32, %c0_i32_0, %c0_i32_1 : i32, i32, i32
  }
  func.func @transform_7(%arg0: i32) -> (i32, i32, i32) {
    %c0_i32 = arith.constant 0 : i32
    %c0_i32_0 = arith.constant 0 : i32
    %c0_i32_1 = arith.constant 0 : i32
    %c0_i32_2 = arith.constant 0 : i32
    return %c0_i32, %c0_i32_0, %c0_i32_1 : i32, i32, i32
  }
  func.func @transform_8(%arg0: i32) -> (i32, i32) {
    %c0_i32 = arith.constant 0 : i32
    %c0_i32_0 = arith.constant 0 : i32
    %c0_i32_1 = arith.constant 0 : i32
    return %c0_i32, %c0_i32_0 : i32, i32
  }
  func.func @transform_9(%arg0: i32) -> (i32, i32) {
    %c0_i32 = arith.constant 0 : i32
    %c0_i32_0 = arith.constant 0 : i32
    %c0_i32_1 = arith.constant 0 : i32
    return %c0_i32, %c0_i32_0 : i32, i32
  }
}

</mosaic_0001>

<llo_original>
// kernel: fused_forward.1
$region0: #{fused_forward.1}
  #allocation0 [shape = 'u32[]', space=smem, size = 0x4, offset = 0x4, fixed_abs, tag = 'smem constant byte address 0x4 - core index']
  #allocation1 [shape = 'u32[144,128]{1,0:T(1,128)}', space=vmem, size = 0x12000, scoped, tag = 'internal scratch']
  %s0 = inlined_call_operand.vmem [shape: s32[32,1], index: 0, kind: input, shape index: {}]
  %s1 = inlined_call_operand.vmem [shape: f32[16,128], index: 1, kind: input, shape index: {}]
  %s2 = inlined_call_operand.hbm [shape: bf16[64,128], index: 2, kind: input, shape index: {}]
  %s3 = inlined_call_operand.hbm [shape: f32[24,512], index: 3, kind: input, shape index: {}]
  %s4 = inlined_call_operand.hbm [shape: bf16[2,128,384], index: 4, kind: input, shape index: {}]
  %s5 = inlined_call_operand.hbm [shape: bf16[2,128,128], index: 5, kind: input, shape index: {}]
  %s6 = inlined_call_operand.hbm [shape: bf16[2,128,512], index: 6, kind: input, shape index: {}]
  %s7 = inlined_call_operand.hbm [shape: bf16[2,512,128], index: 7, kind: input, shape index: {}]
  %s8 = inlined_call_operand.vmem [shape: bf16[128,128], index: 8, kind: input, shape index: {}]
  %s9 = inlined_call_operand.hbm [shape: f32[32,128], index: 9, kind: output, shape index: {}]
  %s10 = sld [smem:[#allocation0]]
  $region70: #{fused_forward.1} parent=0
    _
  %s12 = ssub.s32 1, %s10
  %s13 = scalar_select 0, %s12, %s10
  $region1: #{fused_forward.1} parent=0
    #allocation2 [shape = 'u8[16384]{0}', space=vmem, size = 0x4000, scoped, tag = 'input window, operand 2, single buffered']
    #allocation3 [shape = 's32[1]{0}', space=sflag, size = 0x4, scoped, tag = 'scoped memory for fused_forward.1']
    #allocation4 [shape = 's32[1]{0}', space=sflag, size = 0x4, scoped, tag = 'scoped memory for fused_forward.1']
    #allocation5 [shape = 'u8[49152]{0}', space=vmem, size = 0xc000, scoped, tag = 'input window, operand 3, single buffered']
    #allocation6 [shape = 's32[1]{0}', space=sflag, size = 0x4, scoped, tag = 'scoped memory for fused_forward.1']
    #allocation7 [shape = 'u8[196608]{0}', space=vmem, size = 0x30000, scoped, tag = 'input window, operand 4, single buffered']
    #allocation8 [shape = 'u8[65536]{0}', space=vmem, size = 0x10000, scoped, tag = 'input window, operand 5, single buffered']
    #allocation9 [shape = 's32[1]{0}', space=sflag, size = 0x4, scoped, tag = 'scoped memory for fused_forward.1']
    #allocation10 [shape = 'u8[262144]{0}', space=vmem, size = 0x40000, scoped, tag = 'input window, operand 6, single buffered']
    #allocation11 [shape = 'u8[262144]{0}', space=vmem, size = 0x40000, scoped, tag = 'input window, operand 7, single buffered']
    #allocation12 [shape = 's32[1]{0}', space=sflag, size = 0x4, scoped, tag = 'scoped memory for fused_forward.1']
    #allocation13 [shape = 'u8[16384]{0}', space=vmem, size = 0x4000, scoped, tag = 'output window, operand 0, single buffered']
    %14 = vsyncpa [#allocation3], 0
    %15 = vsyncpa [#allocation6], 0
    %16 = vsyncpa [#allocation9], 0
    %17 = vsyncpa [#allocation12], 0
    %18 = vsyncpa [#allocation4], 0
    // Predicated region
    $region2: #{fused_forward.1} parent=1 // pred_check
      _
    $region3: #{fused_forward.1} parent=1 // pred_check_branch
      %20 = sbr.rel (0) target = $region5
    $region4: #{fused_forward.1} parent=1 // pred_region
      _
    $region5: #{fused_forward.1} parent=1 // pred_fallthru
      _
    // Predicated region
    $region6: #{fused_forward.1} parent=1 // pred_check
      _
    $region7: #{fused_forward.1} parent=1 // pred_check_branch
      %22 = sbr.rel (0) target = $region9
    $region8: #{fused_forward.1} parent=1 // pred_region
      _
    $region9: #{fused_forward.1} parent=1 // pred_fallthru
      _
    // Predicated region
    $region10: #{fused_forward.1} parent=1 // pred_check
      _
    $region11: #{fused_forward.1} parent=1 // pred_check_branch
      %24 = sbr.rel (0) target = $region13
    $region12: #{fused_forward.1} parent=1 // pred_region
      %s26 = ssub.s32 512, 512
      %27 = vsyncadd [#allocation3], %s26
      %s28 = sshll.u32 [#allocation2], 4
      %s29 = int_to_ptr.vmem [resolvable:$true] %s28
      %34 = dma.hbm_to_vmem [thread:$0]  %s2, 512, %s29, [#allocation3], 64, 64, 4
    $region13: #{fused_forward.1} parent=1 // pred_fallthru
      _
    // Predicated region
    $region14: #{fused_forward.1} parent=1 // pred_check
      _
    $region15: #{fused_forward.1} parent=1 // pred_check_branch
      %36 = sbr.rel (0) target = $region17
    $region16: #{fused_forward.1} parent=1 // pred_region
      %s38 = ssub.s32 1536, 1536
      %39 = vsyncadd [#allocation6], %s38
      %s40 = sshll.u32 [#allocation5], 4
      %s41 = int_to_ptr.vmem [resolvable:$true] %s40
      %46 = dma.hbm_to_vmem [thread:$0]  %s3, 1536, %s41, [#allocation6], 512, 512, 32
    $region17: #{fused_forward.1} parent=1 // pred_fallthru
      _
    // Predicated region
    $region18: #{fused_forward.1} parent=1 // pred_check
      _
    $region19: #{fused_forward.1} parent=1 // pred_check_branch
      %48 = sbr.rel (0) target = $region21
    $region20: #{fused_forward.1} parent=1 // pred_region
      %s50 = ssub.s32 6144, 6144
      %51 = vsyncadd [#allocation6], %s50
      %s52 = sshll.u32 [#allocation7], 4
      %s53 = int_to_ptr.vmem [resolvable:$true] %s52
      %58 = dma.hbm_to_vmem [thread:$0]  %s4, 6144, %s53, [#allocation6], 192, 192, 12
    $region21: #{fused_forward.1} parent=1 // pred_fallthru
      _
    // Predicated region
    $region22: #{fused_forward.1} parent=1 // pred_check
      _
    $region23: #{fused_forward.1} parent=1 // pred_check_branch
      %60 = sbr.rel (0) target = $region25
    $region24: #{fused_forward.1} parent=1 // pred_region
      %s62 = ssub.s32 2048, 2048
      %63 = vsyncadd [#allocation9], %s62
      %s64 = sshll.u32 [#allocation8], 4
      %s65 = int_to_ptr.vmem [resolvable:$true] %s64
      %70 = dma.hbm_to_vmem [thread:$0]  %s5, 2048, %s65, [#allocation9], 64, 64, 4
    $region25: #{fused_forward.1} parent=1 // pred_fallthru
      _
    // Predicated region
    $region26: #{fused_forward.1} parent=1 // pred_check
      _
    $region27: #{fused_forward.1} parent=1 // pred_check_branch
      %72 = sbr.rel (0) target = $region29
    $region28: #{fused_forward.1} parent=1 // pred_region
      %s74 = ssub.s32 8192, 8192
      %75 = vsyncadd [#allocation9], %s74
      %s76 = sshll.u32 [#allocation10], 4
      %s77 = int_to_ptr.vmem [resolvable:$true] %s76
      %82 = dma.hbm_to_vmem [thread:$0]  %s6, 8192, %s77, [#allocation9], 256, 256, 16
    $region29: #{fused_forward.1} parent=1 // pred_fallthru
      _
    // Predicated region
    $region30: #{fused_forward.1} parent=1 // pred_check
      _
    $region31: #{fused_forward.1} parent=1 // pred_check_branch
      %84 = sbr.rel (0) target = $region33
    $region32: #{fused_forward.1} parent=1 // pred_region
      %s86 = ssub.s32 8192, 8192
      %87 = vsyncadd [#allocation12], %s86
      %s88 = sshll.u32 [#allocation11], 4
      %s89 = int_to_ptr.vmem [resolvable:$true] %s88
      %94 = dma.hbm_to_vmem [thread:$0]  %s7, 8192, %s89, [#allocation12], 64, 64, 4
    $region33: #{fused_forward.1} parent=1 // pred_fallthru
      _
    // Predicated region
    $region34: #{fused_forward.1} parent=1 // pred_check
      _
    $region35: #{fused_forward.1} parent=1 // pred_check_branch
      %96 = sbr.rel (0) target = $region37
    $region36: #{fused_forward.1} parent=1 // pred_region
      _
    $region37: #{fused_forward.1} parent=1 // pred_fallthru
      _
    // Predicated region
    $region38: #{fused_forward.1} parent=1 // pred_check
      _
    $region39: #{fused_forward.1} parent=1 // pred_check_branch
      %98 = sbr.rel (0) target = $region41
    $region40: #{fused_forward.1} parent=1 // pred_region
      %99 = dma.done [#allocation3], 512
    $region41: #{fused_forward.1} parent=1 // pred_fallthru
      _
    // Predicated region
    $region42: #{fused_forward.1} parent=1 // pred_check
      _
    $region43: #{fused_forward.1} parent=1 // pred_check_branch
      %101 = sbr.rel (0) target = $region45
    $region44: #{fused_forward.1} parent=1 // pred_region
      %102 = dma.done [#allocation6], 1536
    $region45: #{fused_forward.1} parent=1 // pred_fallthru
      _
    // Predicated region
    $region46: #{fused_forward.1} parent=1 // pred_check
      _
    $region47: #{fused_forward.1} parent=1 // pred_check_branch
      %104 = sbr.rel (0) target = $region49
    $region48: #{fused_forward.1} parent=1 // pred_region
      %105 = dma.done [#allocation6], 6144
    $region49: #{fused_forward.1} parent=1 // pred_fallthru
      _
    // Predicated region
    $region50: #{fused_forward.1} parent=1 // pred_check
      _
    $region51: #{fused_forward.1} parent=1 // pred_check_branch
      %107 = sbr.rel (0) target = $region53
    $region52: #{fused_forward.1} parent=1 // pred_region
      %108 = dma.done [#allocation9], 2048
    $region53: #{fused_forward.1} parent=1 // pred_fallthru
      _
    // Predicated region
    $region54: #{fused_forward.1} parent=1 // pred_check
      _
    $region55: #{fused_forward.1} parent=1 // pred_check_branch
      %110 = sbr.rel (0) target = $region57
    $region56: #{fused_forward.1} parent=1 // pred_region
      %111 = dma.done [#allocation9], 8192
    $region57: #{fused_forward.1} parent=1 // pred_fallthru
      _
    // Predicated region
    $region58: #{fused_forward.1} parent=1 // pred_check
      _
    $region59: #{fused_forward.1} parent=1 // pred_check_branch
      %113 = sbr.rel (0) target = $region61
    $region60: #{fused_forward.1} parent=1 // pred_region
      %114 = dma.done [#allocation12], 8192
    $region61: #{fused_forward.1} parent=1 // pred_fallthru
      _
    %v116 = vld [vmem:[%s0] sm:$0xff]
    %v117 = vld [vmem:[%s0 + $0x8] sm:$0xff]
    %v118 = vld [vmem:[%s0 + $0x10] sm:$0xff]
    %v119 = vld [vmem:[%s0 + $0x18] sm:$0xff]
    %v120 = vlaneseq
    %v121 = vand.u32 %v120, 127
    %122 = vset.pattern.permute.xlu0 0
    %123 = vperm.xlu0 %122, %v116
    %v124 = vpop.permute.xlu0 %123
    %125 = vset.pattern.permute.xlu0 0
    %126 = vperm.xlu0 %125, %v117
    %v127 = vpop.permute.xlu0 %126
    %128 = vset.pattern.permute.xlu0 0
    %129 = vperm.xlu0 %128, %v118
    %v130 = vpop.permute.xlu0 %129
    %131 = vset.pattern.permute.xlu0 0
    %132 = vperm.xlu0 %131, %v119
    %v133 = vpop.permute.xlu0 %132
    %vm134 = vcmp.eq.s32.totalorder %v124, %v121
    %vm135 = vcmp.eq.s32.totalorder %v127, %v121
    %vm136 = vcmp.eq.s32.totalorder %v130, %v121
    %vm137 = vcmp.eq.s32.totalorder %v133, %v121
    %v138 = vsel %vm134, 1.0, 0.0
    %v139 = vsel %vm135, 1.0, 0.0
    %v140 = vsel %vm136, 1.0, 0.0
    %v141 = vsel %vm137, 1.0, 0.0
    %v142 = vpack.c.bf16 %v139, %v138
    %v143 = vpack.c.bf16 %v141, %v140
    %v144 = vld [vmem:[#allocation2] sm:$0xf]
    %v145 = vld [vmem:[#allocation2 + $0x4] sm:$0xf]
    %v146 = vld [vmem:[#allocation2 + $0x8] sm:$0xf]
    %v147 = vld [vmem:[#allocation2 + $0xc] sm:$0xf]
    %v148 = vld [vmem:[#allocation2 + $0x10] sm:$0xf]
    %v149 = vld [vmem:[#allocation2 + $0x14] sm:$0xf]
    %v150 = vld [vmem:[#allocation2 + $0x18] sm:$0xf]
    %v151 = vld [vmem:[#allocation2 + $0x1c] sm:$0xf]
    %v152 = vld [vmem:[%s1] sm:$0xff]
    %v153 = vld [vmem:[%s1 + $0x8] sm:$0xff]
    %v162 = vunpack.c.l.b16 %v144
    %v163 = vunpack.c.l.b16 %v145
    %v164 = vunpack.c.l.b16 %v146
    %v165 = vunpack.c.l.b16 %v147
    %v166 = vunpack.c.l.b16 %v148
    %v167 = vunpack.c.l.b16 %v149
    %v168 = vunpack.c.l.b16 %v150
    %v169 = vunpack.c.l.b16 %v151
    %v170 = vpack.c.b16 %v163, %v162
    %v171 = vpack.c.b16 %v165, %v164
    %v172 = vpack.c.b16 %v167, %v166
    %v173 = vpack.c.b16 %v169, %v168
    %vm178 = vcmask 523264
    %v180 = vsel %vm178, %v142, 0
    %v183 = vsel %vm178, %v143, 0
    %185 = vmatprep.subr.bf16.mxu0 0
    %186 = vmatpush1.bf16.msra.mxu0 %v170
    %187 = vmatprep.subr.bf16.mxu0 0
    %188 = vmatpush1.bf16.msra.mxu0 %v171
    %189 = vmatprep.subr.bf16.mxu0 0
    %190 = vmatpush1.bf16.msra.mxu0 %v172
    %191 = vmatprep.subr.bf16.mxu0 0
    %192 = vmatpush1.bf16.msra.mxu0 %v173
    %193 = vmatprep.subr.bf16.mxu0 0
    %194 = vmatpush1.bf16.msra.mxu0 0
    %195 = vmatprep.subr.bf16.mxu0 0
    %196 = vmatpush1.bf16.msra.mxu0 0
    %197 = vmatprep.subr.bf16.mxu0 0
    %198 = vmatpush1.bf16.msra.mxu0 0
    %199 = vmatprep.subr.bf16.mxu0 0
    %200 = vmatpush1.bf16.msra.mxu0 0
    %201 = vmatprep.subr.bf16.mxu0 0
    %202 = vmatpush1.bf16.msra.mxu0 0
    %203 = vmatprep.subr.bf16.mxu0 0
    %204 = vmatpush1.bf16.msra.mxu0 0
    %205 = vmatprep.subr.bf16.mxu0 0
    %206 = vmatpush1.bf16.msra.mxu0 0
    %207 = vmatprep.subr.bf16.mxu0 0
    %208 = vmatpush1.bf16.msra.mxu0 0
    %209 = vmatprep.subr.bf16.mxu0 0
    %210 = vmatpush1.bf16.msra.mxu0 0
    %211 = vmatprep.subr.bf16.mxu0 0
    %212 = vmatpush1.bf16.msra.mxu0 0
    %213 = vmatprep.subr.bf16.mxu0 0
    %214 = vmatpush1.bf16.msra.mxu0 0
    %215 = vmatprep.subr.bf16.mxu0 0
    %216 = vmatpush1.bf16.msra.mxu0 0
    %217 = vmatprep.mubr.bf16.mxu0 0
    %218 = vmatmul.mubr.bf16.gmra.mrb[0].mxu0 %v180
    %v219 = vpop.f32.mrb[0].mxu0
    %v220 = vadd.f32 %v152, %v219
    %v221 = vpop.f32.mrb[0].mxu0
    %v222 = vpop.f32.mrb[0].mxu0
    %v223 = vadd.f32 %v153, %v222
    %v224 = vpop.f32.mrb[0].mxu0
    %225 = vmatprep.mubr.bf16.mxu0 0
    %226 = vmatmul.mubr.bf16.gmra.mrb[0].mxu0 %v183
    %v227 = vpop.f32.mrb[0].mxu0
    %v228 = vadd.f32 %v152, %v227
    %v229 = vpop.f32.mrb[0].mxu0
    %v230 = vpop.f32.mrb[0].mxu0
    %v231 = vadd.f32 %v153, %v230
    %v232 = vpop.f32.mrb[0].mxu0
    %233 = vdwg.mxu0
    %v234 = vlaneseq
    %v235 = vshrl.u32 %v234, 7
    %v236 = vadd.s32 %v235, 8
    %v237 = vadd.s32 %v235, 16
    %v238 = vadd.s32 %v235, 24
    %v239 = vadd.s32 %v235, 32
    %v240 = vadd.s32 %v235, 40
    %v241 = vadd.s32 %v235, 48
    %v242 = vadd.s32 %v235, 56
    %v243 = vadd.s32 %v235, 64
    %v244 = vadd.s32 %v235, 72
    %v245 = vadd.s32 %v235, 80
    %v246 = vadd.s32 %v235, 88
    %v247 = vadd.s32 %v235, 96
    %v248 = vadd.s32 %v235, 104
    %v249 = vadd.s32 %v235, 112
    %v250 = vadd.s32 %v235, 120
    %v251 = vshra.s32 %v235, 4
    %v252 = vshra.s32 %v236, 4
    %v253 = vshra.s32 %v237, 4
    %v254 = vshra.s32 %v238, 4
    %v255 = vshra.s32 %v239, 4
    %v256 = vshra.s32 %v240, 4
    %v257 = vshra.s32 %v241, 4
    %v258 = vshra.s32 %v242, 4
    %v259 = vshra.s32 %v243, 4
    %v260 = vshra.s32 %v244, 4
    %v261 = vshra.s32 %v245, 4
    %v262 = vshra.s32 %v246, 4
    %v263 = vshra.s32 %v247, 4
    %v264 = vshra.s32 %v248, 4
    %v265 = vshra.s32 %v249, 4
    %v266 = vshra.s32 %v250, 4
    %v267 = vshra.s32 %v121, 4
    %vm268 = vcmp.eq.s32.totalorder %v251, %v267
    %vm269 = vcmp.eq.s32.totalorder %v252, %v267
    %vm270 = vcmp.eq.s32.totalorder %v253, %v267
    %vm271 = vcmp.eq.s32.totalorder %v254, %v267
    %vm272 = vcmp.eq.s32.totalorder %v255, %v267
    %vm273 = vcmp.eq.s32.totalorder %v256, %v267
    %vm274 = vcmp.eq.s32.totalorder %v257, %v267
    %vm275 = vcmp.eq.s32.totalorder %v258, %v267
    %vm276 = vcmp.eq.s32.totalorder %v259, %v267
    %vm277 = vcmp.eq.s32.totalorder %v260, %v267
    %vm278 = vcmp.eq.s32.totalorder %v261, %v267
    %vm279 = vcmp.eq.s32.totalorder %v262, %v267
    %vm280 = vcmp.eq.s32.totalorder %v263, %v267
    %vm281 = vcmp.eq.s32.totalorder %v264, %v267
    %vm282 = vcmp.eq.s32.totalorder %v265, %v267
    %vm283 = vcmp.eq.s32.totalorder %v266, %v267
    %v284 = vand.u32 %v235, 15
    %v285 = vand.u32 %v236, 15
    %v286 = vand.u32 %v237, 15
    %v287 = vand.u32 %v238, 15
    %v288 = vand.u32 %v239, 15
    %v289 = vand.u32 %v240, 15
    %v290 = vand.u32 %v241, 15
    %v291 = vand.u32 %v242, 15
    %v292 = vand.u32 %v243, 15
    %v293 = vand.u32 %v244, 15
    %v294 = vand.u32 %v245, 15
    %v295 = vand.u32 %v246, 15
    %v296 = vand.u32 %v247, 15
    %v297 = vand.u32 %v248, 15
    %v298 = vand.u32 %v249, 15
    %v299 = vand.u32 %v250, 15
    %v300 = vand.u32 %v121, 15
    %vm301 = vcmp.ge.s32.totalorder %v284, %v300
    %vm302 = vcmp.ge.s32.totalorder %v285, %v300
    %vm303 = vcmp.ge.s32.totalorder %v286, %v300
    %vm304 = vcmp.ge.s32.totalorder %v287, %v300
    %vm305 = vcmp.ge.s32.totalorder %v288, %v300
    %vm306 = vcmp.ge.s32.totalorder %v289, %v300
    %vm307 = vcmp.ge.s32.totalorder %v290, %v300
    %vm308 = vcmp.ge.s32.totalorder %v291, %v300
    %vm309 = vcmp.ge.s32.totalorder %v292, %v300
    %vm310 = vcmp.ge.s32.totalorder %v293, %v300
    %vm311 = vcmp.ge.s32.totalorder %v294, %v300
    %vm312 = vcmp.ge.s32.totalorder %v295, %v300
    %vm313 = vcmp.ge.s32.totalorder %v296, %v300
    %vm314 = vcmp.ge.s32.totalorder %v297, %v300
    %vm315 = vcmp.ge.s32.totalorder %v298, %v300
    %vm316 = vcmp.ge.s32.totalorder %v299, %v300
    %vm317 = vmand %vm268, %vm301
    %vm318 = vmand %vm269, %vm302
    %vm319 = vmand %vm270, %vm303
    %vm320 = vmand %vm271, %vm304
    %vm321 = vmand %vm272, %vm305
    %vm322 = vmand %vm273, %vm306
    %vm323 = vmand %vm274, %vm307
    %vm324 = vmand %vm275, %vm308
    %vm325 = vmand %vm276, %vm309
    %vm326 = vmand %vm277, %vm310
    %vm327 = vmand %vm278, %vm311
    %vm328 = vmand %vm279, %vm312
    %vm329 = vmand %vm280, %vm313
    %vm330 = vmand %vm281, %vm314
    %vm331 = vmand %vm282, %vm315
    %vm332 = vmand %vm283, %vm316
    %v333 = vsel %vm317, 0.0, -1e+09
    %v334 = vsel %vm318, 0.0, -1e+09
    %v335 = vsel %vm319, 0.0, -1e+09
    %v336 = vsel %vm320, 0.0, -1e+09
    %v337 = vsel %vm321, 0.0, -1e+09
    %v338 = vsel %vm322, 0.0, -1e+09
    %v339 = vsel %vm323, 0.0, -1e+09
    %v340 = vsel %vm324, 0.0, -1e+09
    %v341 = vsel %vm325, 0.0, -1e+09
    %v342 = vsel %vm326, 0.0, -1e+09
    %v343 = vsel %vm327, 0.0, -1e+09
    %v344 = vsel %vm328, 0.0, -1e+09
    %v345 = vsel %vm329, 0.0, -1e+09
    %v346 = vsel %vm330, 0.0, -1e+09
    %v347 = vsel %vm331, 0.0, -1e+09
    %v348 = vsel %vm332, 0.0, -1e+09
    %v349 = vld [vmem:[#allocation5] ss:$8 sm:$0xf]
    %s350 = scalar_lea.vmem [#allocation5], 1
    %v351 = vld [vmem:[%s350] ss:$8 sm:$0xf]
    %s352 = scalar_lea.vmem [#allocation5], 2
    %v353 = vld [vmem:[%s352] ss:$8 sm:$0xf]
    %s354 = scalar_lea.vmem [#allocation5], 3
    %v355 = vld [vmem:[%s354] ss:$8 sm:$0xf]
    %s356 = scalar_lea.vmem [#allocation5], 4
    %v357 = vld [vmem:[%s356] ss:$8 sm:$0xf]
    %s358 = scalar_lea.vmem [#allocation5], 5
    %v359 = vld [vmem:[%s358] ss:$8 sm:$0xf]
    %s360 = scalar_lea.vmem [#allocation5], 6
    %v361 = vld [vmem:[%s360] ss:$8 sm:$0xf]
    %s362 = scalar_lea.vmem [#allocation5], 7
    %v363 = vld [vmem:[%s362] ss:$8 sm:$0xf]
    %364 = vadd.xlane.f32.xlu0 %v220
    %v365 = vpop.xlane.xlu0 %364
    %366 = vadd.xlane.f32.xlu0 %v223
    %v367 = vpop.xlane.xlu0 %366
    %368 = vadd.xlane.f32.xlu0 %v228
    %v369 = vpop.xlane.xlu0 %368
    %370 = vadd.xlane.f32.xlu0 %v231
    %v371 = vpop.xlane.xlu0 %370
    %v372 = vrcp.pop 128.0
    %v373 = vmul.f32 %v365, %v372
    %v374 = vmul.f32 %v367, %v372
    %v375 = vmul.f32 %v369, %v372
    %v376 = vmul.f32 %v371, %v372
    %v377 = vsub.f32 %v220, %v373
    %v378 = vsub.f32 %v223, %v374
    %v379 = vsub.f32 %v228, %v375
    %v380 = vsub.f32 %v231, %v376
    %v381 = vmul.f32 %v377, %v377
    %v382 = vmul.f32 %v378, %v378
    %v383 = vmul.f32 %v379, %v379
    %v384 = vmul.f32 %v380, %v380
    %385 = vadd.xlane.f32.xlu0 %v381
    %v386 = vpop.xlane.xlu0 %385
    %387 = vadd.xlane.f32.xlu0 %v382
    %v388 = vpop.xlane.xlu0 %387
    %389 = vadd.xlane.f32.xlu0 %v383
    %v390 = vpop.xlane.xlu0 %389
    %391 = vadd.xlane.f32.xlu0 %v384
    %v392 = vpop.xlane.xlu0 %391
    %v393 = vmul.f32 %v386, %v372
    %v394 = vmul.f32 %v388, %v372
    %v395 = vmul.f32 %v390, %v372
    %v396 = vmul.f32 %v392, %v372
    %v397 = vadd.f32 %v393, 1e-05
    %v398 = vadd.f32 %v394, 1e-05
    %v399 = vadd.f32 %v395, 1e-05
    %v400 = vadd.f32 %v396, 1e-05
    %v401 = vrsqrt.pop %v397
    %v402 = vrsqrt.pop %v398
    %v403 = vrsqrt.pop %v399
    %v404 = vrsqrt.pop %v400
    %v405 = vmul.f32 %v377, %v401
    %v406 = vmul.f32 %v378, %v402
    %v407 = vmul.f32 %v379, %v403
    %v408 = vmul.f32 %v380, %v404
    %v410 = vlaneseq
    %v411 = vshrl.u32 %v410, 7
    %v412 = vsub.s32 0, %v411
    %v413 = vrot.slane %v349, %v412
    %v415 = vmul.f32 %v405, %v413
    %v416 = vmul.f32 %v406, %v413
    %v417 = vmul.f32 %v407, %v413
    %v418 = vmul.f32 %v408, %v413
    %v420 = vlaneseq
    %v421 = vshrl.u32 %v420, 7
    %v422 = vsub.s32 0, %v421
    %v423 = vrot.slane %v351, %v422
    %v425 = vadd.f32 %v415, %v423
    %v426 = vadd.f32 %v416, %v423
    %v427 = vadd.f32 %v417, %v423
    %v428 = vadd.f32 %v418, %v423
    %v429 = vpack.c.bf16 %v426, %v425
    %v430 = vpack.c.bf16 %v428, %v427
    %v431 = vld [vmem:[#allocation7] sm:$0xff]
    %v432 = vld [vmem:[#allocation7 + $0x8] sm:$0xf]
    %v433 = vld [vmem:[#allocation7 + $0xc] sm:$0xff]
    %v434 = vld [vmem:[#allocation7 + $0x14] sm:$0xf]
    %v435 = vld [vmem:[#allocation7 + $0x18] sm:$0xff]
    %v436 = vld [vmem:[#allocation7 + $0x20] sm:$0xf]
    %v437 = vld [vmem:[#allocation7 + $0x24] sm:$0xff]
    %v438 = vld [vmem:[#allocation7 + $0x2c] sm:$0xf]
    %v439 = vld [vmem:[#allocation7 + $0x30] sm:$0xff]
    %v440 = vld [vmem:[#allocation7 + $0x38] sm:$0xf]
    %v441 = vld [vmem:[#allocation7 + $0x3c] sm:$0xff]
    %v442 = vld [vmem:[#allocation7 + $0x44] sm:$0xf]
    %v443 = vld [vmem:[#allocation7 + $0x48] sm:$0xff]
    %v444 = vld [vmem:[#allocation7 + $0x50] sm:$0xf]
    %v445 = vld [vmem:[#allocation7 + $0x54] sm:$0xff]
    %v446 = vld [vmem:[#allocation7 + $0x5c] sm:$0xf]
    %v447 = vld [vmem:[#allocation7 + $0x60] sm:$0xff]
    %v448 = vld [vmem:[#allocation7 + $0x68] sm:$0xf]
    %v449 = vld [vmem:[#allocation7 + $0x6c] sm:$0xff]
    %v450 = vld [vmem:[#allocation7 + $0x74] sm:$0xf]
    %v451 = vld [vmem:[#allocation7 + $0x78] sm:$0xff]
    %v452 = vld [vmem:[#allocation7 + $0x80] sm:$0xf]
    %v453 = vld [vmem:[#allocation7 + $0x84] sm:$0xff]
    %v454 = vld [vmem:[#allocation7 + $0x8c] sm:$0xf]
    %v455 = vld [vmem:[#allocation7 + $0x90] sm:$0xff]
    %v456 = vld [vmem:[#allocation7 + $0x98] sm:$0xf]
    %v457 = vld [vmem:[#allocation7 + $0x9c] sm:$0xff]
    %v458 = vld [vmem:[#allocation7 + $0xa4] sm:$0xf]
    %v459 = vld [vmem:[#allocation7 + $0xa8] sm:$0xff]
    %v460 = vld [vmem:[#allocation7 + $0xb0] sm:$0xf]
    %v461 = vld [vmem:[#allocation7 + $0xb4] sm:$0xff]
    %v462 = vld [vmem:[#allocation7 + $0xbc] sm:$0xf]
    %v464 = vlaneseq
    %v465 = vshrl.u32 %v464, 7
    %v466 = vsub.s32 0, %v465
    %v467 = vrot.slane %v361, %v466
    %v468 = vlaneseq
    %v469 = vshrl.u32 %v468, 7
    %v470 = vsub.s32 1, %v469
    %v471 = vrot.slane %v361, %v470
    %v472 = vlaneseq
    %v473 = vshrl.u32 %v472, 7
    %v474 = vsub.s32 2, %v473
    %v475 = vrot.slane %v361, %v474
    %v511 = vunpack.c.l.b16 %v431
    %v512 = vunpack.c.h.b16 %v431
    %v513 = vunpack.c.l.b16 %v432
    %v514 = vunpack.c.l.b16 %v433
    %v515 = vunpack.c.h.b16 %v433
    %v516 = vunpack.c.l.b16 %v434
    %v517 = vunpack.c.l.b16 %v435
    %v518 = vunpack.c.h.b16 %v435
    %v519 = vunpack.c.l.b16 %v436
    %v520 = vunpack.c.l.b16 %v437
    %v521 = vunpack.c.h.b16 %v437
    %v522 = vunpack.c.l.b16 %v438
    %v523 = vunpack.c.l.b16 %v439
    %v524 = vunpack.c.h.b16 %v439
    %v525 = vunpack.c.l.b16 %v440
    %v526 = vunpack.c.l.b16 %v441
    %v527 = vunpack.c.h.b16 %v441
    %v528 = vunpack.c.l.b16 %v442
    %v529 = vunpack.c.l.b16 %v443
    %v530 = vunpack.c.h.b16 %v443
    %v531 = vunpack.c.l.b16 %v444
    %v532 = vunpack.c.l.b16 %v445
    %v533 = vunpack.c.h.b16 %v445
    %v534 = vunpack.c.l.b16 %v446
    %v535 = vunpack.c.l.b16 %v447
    %v536 = vunpack.c.h.b16 %v447
    %v537 = vunpack.c.l.b16 %v448
    %v538 = vunpack.c.l.b16 %v449
    %v539 = vunpack.c.h.b16 %v449
    %v540 = vunpack.c.l.b16 %v450
    %v541 = vunpack.c.l.b16 %v451
    %v542 = vunpack.c.h.b16 %v451
    %v543 = vunpack.c.l.b16 %v452
    %v544 = vunpack.c.l.b16 %v453
    %v545 = vunpack.c.h.b16 %v453
    %v546 = vunpack.c.l.b16 %v454
    %v547 = vunpack.c.l.b16 %v455
    %v548 = vunpack.c.h.b16 %v455
    %v549 = vunpack.c.l.b16 %v456
    %v550 = vunpack.c.l.b16 %v457
    %v551 = vunpack.c.h.b16 %v457
    %v552 = vunpack.c.l.b16 %v458
    %v553 = vunpack.c.l.b16 %v459
    %v554 = vunpack.c.h.b16 %v459
    %v555 = vunpack.c.l.b16 %v460
    %v556 = vunpack.c.l.b16 %v461
    %v557 = vunpack.c.h.b16 %v461
    %v558 = vunpack.c.l.b16 %v462
    %v559 = vpack.c.b16 %v514, %v511
    %v560 = vpack.c.b16 %v515, %v512
    %v561 = vpack.c.b16 %v516, %v513
    %v562 = vpack.c.b16 %v520, %v517
    %v563 = vpack.c.b16 %v521, %v518
    %v564 = vpack.c.b16 %v522, %v519
    %v565 = vpack.c.b16 %v526, %v523
    %v566 = vpack.c.b16 %v527, %v524
    %v567 = vpack.c.b16 %v528, %v525
    %v568 = vpack.c.b16 %v532, %v529
    %v569 = vpack.c.b16 %v533, %v530
    %v570 = vpack.c.b16 %v534, %v531
    %v571 = vpack.c.b16 %v538, %v535
    %v572 = vpack.c.b16 %v539, %v536
    %v573 = vpack.c.b16 %v540, %v537
    %v574 = vpack.c.b16 %v544, %v541
    %v575 = vpack.c.b16 %v545, %v542
    %v576 = vpack.c.b16 %v546, %v543
    %v577 = vpack.c.b16 %v550, %v547
    %v578 = vpack.c.b16 %v551, %v548
    %v579 = vpack.c.b16 %v552, %v549
    %v580 = vpack.c.b16 %v556, %v553
    %v581 = vpack.c.b16 %v557, %v554
    %v582 = vpack.c.b16 %v558, %v555
    %607 = vmatprep.subr.bf16.mxu0 %v560
    %608 = vmatpush1.bf16.msra.mxu0 %v559
    %609 = vmatprep.subr.bf16.mxu0 %v563
    %610 = vmatpush1.bf16.msra.mxu0 %v562
    %611 = vmatprep.subr.bf16.mxu0 %v566
    %612 = vmatpush1.bf16.msra.mxu0 %v565
    %613 = vmatprep.subr.bf16.mxu0 %v569
    %614 = vmatpush1.bf16.msra.mxu0 %v568
    %615 = vmatprep.subr.bf16.mxu0 %v572
    %616 = vmatpush1.bf16.msra.mxu0 %v571
    %617 = vmatprep.subr.bf16.mxu0 %v575
    %618 = vmatpush1.bf16.msra.mxu0 %v574
    %619 = vmatprep.subr.bf16.mxu0 %v578
    %620 = vmatpush1.bf16.msra.mxu0 %v577
    %621 = vmatprep.subr.bf16.mxu0 %v581
    %622 = vmatpush1.bf16.msra.mxu0 %v580
    %623 = vmatprep.subr.bf16.mxu0 0
    %624 = vmatpush1.bf16.msra.mxu0 0
    %625 = vmatprep.subr.bf16.mxu0 0
    %626 = vmatpush1.bf16.msra.mxu0 0
    %627 = vmatprep.subr.bf16.mxu0 0
    %628 = vmatpush1.bf16.msra.mxu0 0
    %629 = vmatprep.subr.bf16.mxu0 0
    %630 = vmatpush1.bf16.msra.mxu0 0
    %631 = vmatprep.subr.bf16.mxu0 0
    %632 = vmatpush1.bf16.msra.mxu0 0
    %633 = vmatprep.subr.bf16.mxu0 0
    %634 = vmatpush1.bf16.msra.mxu0 0
    %635 = vmatprep.subr.bf16.mxu0 0
    %636 = vmatpush1.bf16.msra.mxu0 0
    %637 = vmatprep.subr.bf16.mxu0 0
    %638 = vmatpush1.bf16.msra.mxu0 0
    %639 = vmatprep.mubr.bf16.mxu0 0
    %640 = vmatmul.mubr.bf16.gmra.mrb[0].mxu0 %v429
    %v641 = vpop.f32.mrb[0].mxu0
    %v642 = vadd.f32 %v467, %v641
    %v643 = vpop.f32.mrb[0].mxu0
    %v644 = vadd.f32 %v471, %v643
    %v645 = vpop.f32.mrb[0].mxu0
    %v646 = vadd.f32 %v467, %v645
    %v647 = vpop.f32.mrb[0].mxu0
    %v648 = vadd.f32 %v471, %v647
    %649 = vmatprep.mubr.bf16.mxu0 0
    %650 = vmatmul.mubr.bf16.gmra.mrb[0].mxu0 %v430
    %v651 = vpop.f32.mrb[0].mxu0
    %v652 = vadd.f32 %v467, %v651
    %v653 = vpop.f32.mrb[0].mxu0
    %v654 = vadd.f32 %v471, %v653
    %v655 = vpop.f32.mrb[0].mxu0
    %v656 = vadd.f32 %v467, %v655
    %v657 = vpop.f32.mrb[0].mxu0
    %v658 = vadd.f32 %v471, %v657
    %659 = vdwg.mxu0
    %660 = vmatprep.subr.bf16.mxu0 0
    %661 = vmatpush1.bf16.msra.mxu0 %v561
    %662 = vmatprep.subr.bf16.mxu0 0
    %663 = vmatpush1.bf16.msra.mxu0 %v564
    %664 = vmatprep.subr.bf16.mxu0 0
    %665 = vmatpush1.bf16.msra.mxu0 %v567
    %666 = vmatprep.subr.bf16.mxu0 0
    %667 = vmatpush1.bf16.msra.mxu0 %v570
    %668 = vmatprep.subr.bf16.mxu0 0
    %669 = vmatpush1.bf16.msra.mxu0 %v573
    %670 = vmatprep.subr.bf16.mxu0 0
    %671 = vmatpush1.bf16.msra.mxu0 %v576
    %672 = vmatprep.subr.bf16.mxu0 0
    %673 = vmatpush1.bf16.msra.mxu0 %v579
    %674 = vmatprep.subr.bf16.mxu0 0
    %675 = vmatpush1.bf16.msra.mxu0 %v582
    %676 = vmatprep.subr.bf16.mxu0 0
    %677 = vmatpush1.bf16.msra.mxu0 0
    %678 = vmatprep.subr.bf16.mxu0 0
    %679 = vmatpush1.bf16.msra.mxu0 0
    %680 = vmatprep.subr.bf16.mxu0 0
    %681 = vmatpush1.bf16.msra.mxu0 0
    %682 = vmatprep.subr.bf16.mxu0 0
    %683 = vmatpush1.bf16.msra.mxu0 0
    %684 = vmatprep.subr.bf16.mxu0 0
    %685 = vmatpush1.bf16.msra.mxu0 0
    %686 = vmatprep.subr.bf16.mxu0 0
    %687 = vmatpush1.bf16.msra.mxu0 0
    %688 = vmatprep.subr.bf16.mxu0 0
    %689 = vmatpush1.bf16.msra.mxu0 0
    %690 = vmatprep.subr.bf16.mxu0 0
    %691 = vmatpush1.bf16.msra.mxu0 0
    %692 = vmatprep.mubr.bf16.mxu0 0
    %693 = vmatmul.mubr.bf16.gmra.mrb[0].mxu0 %v429
    %v694 = vpop.f32.mrb[0].mxu0
    %v695 = vadd.f32 %v475, %v694
    %v696 = vpop.f32.mrb[0].mxu0
    %v697 = vpop.f32.mrb[0].mxu0
    %v698 = vadd.f32 %v475, %v697
    %v699 = vpop.f32.mrb[0].mxu0
    %700 = vmatprep.mubr.bf16.mxu0 0
    %701 = vmatmul.mubr.bf16.gmra.mrb[0].mxu0 %v430
    %v702 = vpop.f32.mrb[0].mxu0
    %v703 = vadd.f32 %v475, %v702
    %v704 = vpop.f32.mrb[0].mxu0
    %v705 = vpop.f32.mrb[0].mxu0
    %v706 = vadd.f32 %v475, %v705
    %v707 = vpop.f32.mrb[0].mxu0
    %708 = vdwg.mxu0
    %v709 = vmul.f32 %v642, 0.17677669
    %v710 = vmul.f32 %v646, 0.17677669
    %v711 = vmul.f32 %v652, 0.17677669
    %v712 = vmul.f32 %v656, 0.17677669
    %717 = vrot.lane.b32.xlu0 %v709, 96
    %v718 = vpop.permute.xlu0 %717
    %719 = vrot.lane.b32.xlu0 %v710, 96
    %v720 = vpop.permute.xlu0 %719
    %721 = vrot.lane.b32.xlu0 %v711, 96
    %v722 = vpop.permute.xlu0 %721
    %723 = vrot.lane.b32.xlu0 %v712, 96
    %v724 = vpop.permute.xlu0 %723
    %729 = vrot.lane.b32.xlu0 %v709, 64
    %v730 = vpop.permute.xlu0 %729
    %731 = vrot.lane.b32.xlu0 %v710, 64
    %v732 = vpop.permute.xlu0 %731
    %733 = vrot.lane.b32.xlu0 %v711, 64
    %v734 = vpop.permute.xlu0 %733
    %735 = vrot.lane.b32.xlu0 %v712, 64
    %v736 = vpop.permute.xlu0 %735
    %741 = vrot.lane.b32.xlu0 %v709, 32
    %v742 = vpop.permute.xlu0 %741
    %743 = vrot.lane.b32.xlu0 %v710, 32
    %v744 = vpop.permute.xlu0 %743
    %745 = vrot.lane.b32.xlu0 %v711, 32
    %v746 = vpop.permute.xlu0 %745
    %747 = vrot.lane.b32.xlu0 %v712, 32
    %v748 = vpop.permute.xlu0 %747
    %757 = vrot.lane.b32.xlu0 %v644, 96
    %v758 = vpop.permute.xlu0 %757
    %759 = vrot.lane.b32.xlu0 %v648, 96
    %v760 = vpop.permute.xlu0 %759
    %761 = vrot.lane.b32.xlu0 %v654, 96
    %v762 = vpop.permute.xlu0 %761
    %763 = vrot.lane.b32.xlu0 %v658, 96
    %v764 = vpop.permute.xlu0 %763
    %769 = vrot.lane.b32.xlu0 %v644, 64
    %v770 = vpop.permute.xlu0 %769
    %771 = vrot.lane.b32.xlu0 %v648, 64
    %v772 = vpop.permute.xlu0 %771
    %773 = vrot.lane.b32.xlu0 %v654, 64
    %v774 = vpop.permute.xlu0 %773
    %775 = vrot.lane.b32.xlu0 %v658, 64
    %v776 = vpop.permute.xlu0 %775
    %781 = vrot.lane.b32.xlu0 %v644, 32
    %v782 = vpop.permute.xlu0 %781
    %783 = vrot.lane.b32.xlu0 %v648, 32
    %v784 = vpop.permute.xlu0 %783
    %785 = vrot.lane.b32.xlu0 %v654, 32
    %v786 = vpop.permute.xlu0 %785
    %787 = vrot.lane.b32.xlu0 %v658, 32
    %v788 = vpop.permute.xlu0 %787
    %797 = vrot.lane.b32.xlu0 %v695, 96
    %v798 = vpop.permute.xlu0 %797
    %799 = vrot.lane.b32.xlu0 %v698, 96
    %v800 = vpop.permute.xlu0 %799
    %801 = vrot.lane.b32.xlu0 %v703, 96
    %v802 = vpop.permute.xlu0 %801
    %803 = vrot.lane.b32.xlu0 %v706, 96
    %v804 = vpop.permute.xlu0 %803
    %809 = vrot.lane.b32.xlu0 %v695, 64
    %v810 = vpop.permute.xlu0 %809
    %811 = vrot.lane.b32.xlu0 %v698, 64
    %v812 = vpop.permute.xlu0 %811
    %813 = vrot.lane.b32.xlu0 %v703, 64
    %v814 = vpop.permute.xlu0 %813
    %815 = vrot.lane.b32.xlu0 %v706, 64
    %v816 = vpop.permute.xlu0 %815
    %821 = vrot.lane.b32.xlu0 %v695, 32
    %v822 = vpop.permute.xlu0 %821
    %823 = vrot.lane.b32.xlu0 %v698, 32
    %v824 = vpop.permute.xlu0 %823
    %825 = vrot.lane.b32.xlu0 %v703, 32
    %v826 = vpop.permute.xlu0 %825
    %827 = vrot.lane.b32.xlu0 %v706, 32
    %v828 = vpop.permute.xlu0 %827
    %v833 = vpack.c.bf16 %v710, %v709
    %v834 = vpack.c.bf16 %v712, %v711
    %v835 = vpack.c.bf16 %v720, %v718
    %v836 = vpack.c.bf16 %v724, %v722
    %v837 = vpack.c.bf16 %v732, %v730
    %v838 = vpack.c.bf16 %v736, %v734
    %v839 = vpack.c.bf16 %v744, %v742
    %v840 = vpack.c.bf16 %v748, %v746
    %v841 = vpack.c.bf16 %v648, %v644
    %v842 = vpack.c.bf16 %v658, %v654
    %v843 = vpack.c.bf16 %v760, %v758
    %v844 = vpack.c.bf16 %v764, %v762
    %v845 = vpack.c.bf16 %v772, %v770
    %v846 = vpack.c.bf16 %v776, %v774
    %v847 = vpack.c.bf16 %v784, %v782
    %v848 = vpack.c.bf16 %v788, %v786
    %vm849 = vcmask 261120
    %v851 = vsel %vm849, %v833, 0
    %v854 = vsel %vm849, %v834, 0
    %v857 = vsel %vm849, %v835, 0
    %v860 = vsel %vm849, %v836, 0
    %v863 = vsel %vm849, %v837, 0
    %v866 = vsel %vm849, %v838, 0
    %v869 = vsel %vm849, %v839, 0
    %v872 = vsel %vm849, %v840, 0
    %v875 = vsel %vm849, %v841, 0
    %v878 = vsel %vm849, %v842, 0
    %v881 = vsel %vm849, %v843, 0
    %v884 = vsel %vm849, %v844, 0
    %v887 = vsel %vm849, %v845, 0
    %v890 = vsel %vm849, %v846, 0
    %v893 = vsel %vm849, %v847, 0
    %v896 = vsel %vm849, %v848, 0
    %898 = vmatprep.subr.bf16.mxu0 0
    %899 = vmatpush1.bf16.xpose.msra.mxu0 %v875
    %900 = vmatprep.subr.bf16.mxu0 0
    %901 = vmatpush1.bf16.xpose.msra.mxu0 %v878
    %902 = vmatprep.subr.bf16.mxu0 0
    %903 = vmatpush1.bf16.xpose.msra.mxu0 %v881
    %904 = vmatprep.subr.bf16.mxu0 0
    %905 = vmatpush1.bf16.xpose.msra.mxu0 %v884
    %906 = vmatprep.subr.bf16.mxu0 0
    %907 = vmatpush1.bf16.xpose.msra.mxu0 %v887
    %908 = vmatprep.subr.bf16.mxu0 0
    %909 = vmatpush1.bf16.xpose.msra.mxu0 %v890
    %910 = vmatprep.subr.bf16.mxu0 0
    %911 = vmatpush1.bf16.xpose.msra.mxu0 %v893
    %912 = vmatprep.subr.bf16.mxu0 0
    %913 = vmatpush1.bf16.xpose.msra.mxu0 %v896
    %914 = vmatprep.subr.bf16.mxu0 0
    %915 = vmatpush1.bf16.xpose.msra.mxu0 0
    %916 = vmatprep.subr.bf16.mxu0 0
    %917 = vmatpush1.bf16.xpose.msra.mxu0 0
    %918 = vmatprep.subr.bf16.mxu0 0
    %919 = vmatpush1.bf16.xpose.msra.mxu0 0
    %920 = vmatprep.subr.bf16.mxu0 0
    %921 = vmatpush1.bf16.xpose.msra.mxu0 0
    %922 = vmatprep.subr.bf16.mxu0 0
    %923 = vmatpush1.bf16.xpose.msra.mxu0 0
    %924 = vmatprep.subr.bf16.mxu0 0
    %925 = vmatpush1.bf16.xpose.msra.mxu0 0
    %926 = vmatprep.subr.bf16.mxu0 0
    %927 = vmatpush1.bf16.xpose.msra.mxu0 0
    %928 = vmatprep.subr.bf16.mxu0 0
    %929 = vmatpush1.bf16.xpose.msra.mxu0 0
    %930 = vmatprep.mubr.bf16.mxu0 0
    %931 = vmatmul.mubr.bf16.gmra.mrb[0].mxu0 %v851
    %v932 = vpop.f32.mrb[0].mxu0
    %v933 = vadd.f32 %v333, %v932
    %v934 = vpop.f32.mrb[0].mxu0
    %v935 = vpop.f32.mrb[0].mxu0
    %v936 = vadd.f32 %v334, %v935
    %v937 = vpop.f32.mrb[0].mxu0
    %938 = vmatprep.mubr.bf16.mxu0 0
    %939 = vmatmul.mubr.bf16.gmra.mrb[0].mxu0 %v854
    %v940 = vpop.f32.mrb[0].mxu0
    %v941 = vadd.f32 %v335, %v940
    %v942 = vpop.f32.mrb[0].mxu0
    %v943 = vpop.f32.mrb[0].mxu0
    %v944 = vadd.f32 %v336, %v943
    %v945 = vpop.f32.mrb[0].mxu0
    %946 = vmatprep.mubr.bf16.mxu0 0
    %947 = vmatmul.mubr.bf16.gmra.mrb[0].mxu0 %v857
    %v948 = vpop.f32.mrb[0].mxu0
    %v949 = vadd.f32 %v337, %v948
    %v950 = vpop.f32.mrb[0].mxu0
    %v951 = vpop.f32.mrb[0].mxu0
    %v952 = vadd.f32 %v338, %v951
    %v953 = vpop.f32.mrb[0].mxu0
    %954 = vmatprep.mubr.bf16.mxu0 0
    %955 = vmatmul.mubr.bf16.gmra.mrb[0].mxu0 %v860
    %v956 = vpop.f32.mrb[0].mxu0
    %v957 = vadd.f32 %v339, %v956
    %v958 = vpop.f32.mrb[0].mxu0
    %v959 = vpop.f32.mrb[0].mxu0
    %v960 = vadd.f32 %v340, %v959
    %v961 = vpop.f32.mrb[0].mxu0
    %962 = vmatprep.mubr.bf16.mxu0 0
    %963 = vmatmul.mubr.bf16.gmra.mrb[0].mxu0 %v863
    %v964 = vpop.f32.mrb[0].mxu0
    %v965 = vadd.f32 %v341, %v964
    %v966 = vpop.f32.mrb[0].mxu0
    %v967 = vpop.f32.mrb[0].mxu0
    %v968 = vadd.f32 %v342, %v967
    %v969 = vpop.f32.mrb[0].mxu0
    %970 = vmatprep.mubr.bf16.mxu0 0
    %971 = vmatmul.mubr.bf16.gmra.mrb[0].mxu0 %v866
    %v972 = vpop.f32.mrb[0].mxu0
    %v973 = vadd.f32 %v343, %v972
    %v974 = vpop.f32.mrb[0].mxu0
    %v975 = vpop.f32.mrb[0].mxu0
    %v976 = vadd.f32 %v344, %v975
    %v977 = vpop.f32.mrb[0].mxu0
    %978 = vmatprep.mubr.bf16.mxu0 0
    %979 = vmatmul.mubr.bf16.gmra.mrb[0].mxu0 %v869
    %v980 = vpop.f32.mrb[0].mxu0
    %v981 = vadd.f32 %v345, %v980
    %v982 = vpop.f32.mrb[0].mxu0
    %v983 = vpop.f32.mrb[0].mxu0
    %v984 = vadd.f32 %v346, %v983
    %v985 = vpop.f32.mrb[0].mxu0
    %986 = vmatprep.mubr.bf16.mxu0 0
    %987 = vmatmul.mubr.bf16.gmra.mrb[0].mxu0 %v872
    %v988 = vpop.f32.mrb[0].mxu0
    %v989 = vadd.f32 %v347, %v988
    %v990 = vpop.f32.mrb[0].mxu0
    %v991 = vpop.f32.mrb[0].mxu0
    %v992 = vadd.f32 %v348, %v991
    %v993 = vpop.f32.mrb[0].mxu0
    %994 = vdwg.mxu0
    %995 = vmax.xlane.f32.xlu0 %v933
    %v996 = vpop.xlane.xlu0 %995
    %997 = vmax.xlane.f32.xlu0 %v936
    %v998 = vpop.xlane.xlu0 %997
    %999 = vmax.xlane.f32.xlu0 %v941
    %v1000 = vpop.xlane.xlu0 %999
    %1001 = vmax.xlane.f32.xlu0 %v944
    %v1002 = vpop.xlane.xlu0 %1001
    %1003 = vmax.xlane.f32.xlu0 %v949
    %v1004 = vpop.xlane.xlu0 %1003
    %1005 = vmax.xlane.f32.xlu0 %v952
    %v1006 = vpop.xlane.xlu0 %1005
    %1007 = vmax.xlane.f32.xlu0 %v957
    %v1008 = vpop.xlane.xlu0 %1007
    %1009 = vmax.xlane.f32.xlu0 %v960
    %v1010 = vpop.xlane.xlu0 %1009
    %1011 = vmax.xlane.f32.xlu0 %v965
    %v1012 = vpop.xlane.xlu0 %1011
    %1013 = vmax.xlane.f32.xlu0 %v968
    %v1014 = vpop.xlane.xlu0 %1013
    %1015 = vmax.xlane.f32.xlu0 %v973
    %v1016 = vpop.xlane.xlu0 %1015
    %1017 = vmax.xlane.f32.xlu0 %v976
    %v1018 = vpop.xlane.xlu0 %1017
    %1019 = vmax.xlane.f32.xlu0 %v981
    %v1020 = vpop.xlane.xlu0 %1019
    %1021 = vmax.xlane.f32.xlu0 %v984
    %v1022 = vpop.xlane.xlu0 %1021
    %1023 = vmax.xlane.f32.xlu0 %v989
    %v1024 = vpop.xlane.xlu0 %1023
    %1025 = vmax.xlane.f32.xlu0 %v992
    %v1026 = vpop.xlane.xlu0 %1025
    %v1027 = vsub.f32 %v933, %v996
    %v1028 = vsub.f32 %v936, %v998
    %v1029 = vsub.f32 %v941, %v1000
    %v1030 = vsub.f32 %v944, %v1002
    %v1031 = vsub.f32 %v949, %v1004
    %v1032 = vsub.f32 %v952, %v1006
    %v1033 = vsub.f32 %v957, %v1008
    %v1034 = vsub.f32 %v960, %v1010
    %v1035 = vsub.f32 %v965, %v1012
    %v1036 = vsub.f32 %v968, %v1014
    %v1037 = vsub.f32 %v973, %v1016
    %v1038 = vsub.f32 %v976, %v1018
    %v1039 = vsub.f32 %v981, %v1020
    %v1040 = vsub.f32 %v984, %v1022
    %v1041 = vsub.f32 %v989, %v1024
    %v1042 = vsub.f32 %v992, %v1026
    %v1043 = vmul.f32 %v1027, 1.442695
    %v1044 = vpow.pop %v1043
    %v1045 = vmul.f32 %v1028, 1.442695
    %v1046 = vpow.pop %v1045
    %v1047 = vmul.f32 %v1029, 1.442695
    %v1048 = vpow.pop %v1047
    %v1049 = vmul.f32 %v1030, 1.442695
    %v1050 = vpow.pop %v1049
    %v1051 = vmul.f32 %v1031, 1.442695
    %v1052 = vpow.pop %v1051
    %v1053 = vmul.f32 %v1032, 1.442695
    %v1054 = vpow.pop %v1053
    %v1055 = vmul.f32 %v1033, 1.442695
    %v1056 = vpow.pop %v1055
    %v1057 = vmul.f32 %v1034, 1.442695
    %v1058 = vpow.pop %v1057
    %v1059 = vmul.f32 %v1035, 1.442695
    %v1060 = vpow.pop %v1059
    %v1061 = vmul.f32 %v1036, 1.442695
    %v1062 = vpow.pop %v1061
    %v1063 = vmul.f32 %v1037, 1.442695
    %v1064 = vpow.pop %v1063
    %v1065 = vmul.f32 %v1038, 1.442695
    %v1066 = vpow.pop %v1065
    %v1067 = vmul.f32 %v1039, 1.442695
    %v1068 = vpow.pop %v1067
    %v1069 = vmul.f32 %v1040, 1.442695
    %v1070 = vpow.pop %v1069
    %v1071 = vmul.f32 %v1041, 1.442695
    %v1072 = vpow.pop %v1071
    %v1073 = vmul.f32 %v1042, 1.442695
    %v1074 = vpow.pop %v1073
    %1075 = vadd.xlane.f32.xlu0 %v1044
    %v1076 = vpop.xlane.xlu0 %1075
    %1077 = vadd.xlane.f32.xlu0 %v1046
    %v1078 = vpop.xlane.xlu0 %1077
    %1079 = vadd.xlane.f32.xlu0 %v1048
    %v1080 = vpop.xlane.xlu0 %1079
    %1081 = vadd.xlane.f32.xlu0 %v1050
    %v1082 = vpop.xlane.xlu0 %1081
    %1083 = vadd.xlane.f32.xlu0 %v1052
    %v1084 = vpop.xlane.xlu0 %1083
    %1085 = vadd.xlane.f32.xlu0 %v1054
    %v1086 = vpop.xlane.xlu0 %1085
    %1087 = vadd.xlane.f32.xlu0 %v1056
    %v1088 = vpop.xlane.xlu0 %1087
    %1089 = vadd.xlane.f32.xlu0 %v1058
    %v1090 = vpop.xlane.xlu0 %1089
    %1091 = vadd.xlane.f32.xlu0 %v1060
    %v1092 = vpop.xlane.xlu0 %1091
    %1093 = vadd.xlane.f32.xlu0 %v1062
    %v1094 = vpop.xlane.xlu0 %1093
    %1095 = vadd.xlane.f32.xlu0 %v1064
    %v1096 = vpop.xlane.xlu0 %1095
    %1097 = vadd.xlane.f32.xlu0 %v1066
    %v1098 = vpop.xlane.xlu0 %1097
    %1099 = vadd.xlane.f32.xlu0 %v1068
    %v1100 = vpop.xlane.xlu0 %1099
    %1101 = vadd.xlane.f32.xlu0 %v1070
    %v1102 = vpop.xlane.xlu0 %1101
    %1103 = vadd.xlane.f32.xlu0 %v1072
    %v1104 = vpop.xlane.xlu0 %1103
    %1105 = vadd.xlane.f32.xlu0 %v1074
    %v1106 = vpop.xlane.xlu0 %1105
    %v1107 = vrcp.pop %v1076
    %v1108 = vrcp.pop %v1078
    %v1109 = vrcp.pop %v1080
    %v1110 = vrcp.pop %v1082
    %v1111 = vrcp.pop %v1084
    %v1112 = vrcp.pop %v1086
    %v1113 = vrcp.pop %v1088
    %v1114 = vrcp.pop %v1090
    %v1115 = vrcp.pop %v1092
    %v1116 = vrcp.pop %v1094
    %v1117 = vrcp.pop %v1096
    %v1118 = vrcp.pop %v1098
    %v1119 = vrcp.pop %v1100
    %v1120 = vrcp.pop %v1102
    %v1121 = vrcp.pop %v1104
    %v1122 = vrcp.pop %v1106
    %v1123 = vmul.f32 %v1044, %v1107
    %v1124 = vmul.f32 %v1046, %v1108
    %v1125 = vmul.f32 %v1048, %v1109
    %v1126 = vmul.f32 %v1050, %v1110
    %v1127 = vmul.f32 %v1052, %v1111
    %v1128 = vmul.f32 %v1054, %v1112
    %v1129 = vmul.f32 %v1056, %v1113
    %v1130 = vmul.f32 %v1058, %v1114
    %v1131 = vmul.f32 %v1060, %v1115
    %v1132 = vmul.f32 %v1062, %v1116
    %v1133 = vmul.f32 %v1064, %v1117
    %v1134 = vmul.f32 %v1066, %v1118
    %v1135 = vmul.f32 %v1068, %v1119
    %v1136 = vmul.f32 %v1070, %v1120
    %v1137 = vmul.f32 %v1072, %v1121
    %v1138 = vmul.f32 %v1074, %v1122
    %v1139 = vpack.c.bf16 %v1124, %v1123
    %v1140 = vpack.c.bf16 %v1126, %v1125
    %v1141 = vpack.c.bf16 %v1128, %v1127
    %v1142 = vpack.c.bf16 %v1130, %v1129
    %v1143 = vpack.c.bf16 %v1132, %v1131
    %v1144 = vpack.c.bf16 %v1134, %v1133
    %v1145 = vpack.c.bf16 %v1136, %v1135
    %v1146 = vpack.c.bf16 %v1138, %v1137
    %v1147 = vpack.c.bf16 %v698, %v695
    %v1148 = vpack.c.bf16 %v706, %v703
    %v1149 = vpack.c.bf16 %v800, %v798
    %v1150 = vpack.c.bf16 %v804, %v802
    %v1151 = vpack.c.bf16 %v812, %v810
    %v1152 = vpack.c.bf16 %v816, %v814
    %v1153 = vpack.c.bf16 %v824, %v822
    %v1154 = vpack.c.bf16 %v828, %v826
    %1155 = vmatprep.subr.bf16.mxu0 0
    %1156 = vmatpush1.bf16.msra.mxu0 %v1147
    %1157 = vmatprep.subr.bf16.mxu0 0
    %1158 = vmatpush1.bf16.msra.mxu0 %v1148
    %1159 = vmatprep.subr.bf16.mxu0 0
    %1160 = vmatpush1.bf16.msra.mxu0 %v1149
    %1161 = vmatprep.subr.bf16.mxu0 0
    %1162 = vmatpush1.bf16.msra.mxu0 %v1150
    %1163 = vmatprep.subr.bf16.mxu0 0
    %1164 = vmatpush1.bf16.msra.mxu0 %v1151
    %1165 = vmatprep.subr.bf16.mxu0 0
    %1166 = vmatpush1.bf16.msra.mxu0 %v1152
    %1167 = vmatprep.subr.bf16.mxu0 0
    %1168 = vmatpush1.bf16.msra.mxu0 %v1153
    %1169 = vmatprep.subr.bf16.mxu0 0
    %1170 = vmatpush1.bf16.msra.mxu0 %v1154
    %1171 = vmatprep.subr.bf16.mxu0 0
    %1172 = vmatpush1.bf16.msra.mxu0 0
    %1173 = vmatprep.subr.bf16.mxu0 0
    %1174 = vmatpush1.bf16.msra.mxu0 0
    %1175 = vmatprep.subr.bf16.mxu0 0
    %1176 = vmatpush1.bf16.msra.mxu0 0
    %1177 = vmatprep.subr.bf16.mxu0 0
    %1178 = vmatpush1.bf16.msra.mxu0 0
    %1179 = vmatprep.subr.bf16.mxu0 0
    %1180 = vmatpush1.bf16.msra.mxu0 0
    %1181 = vmatprep.subr.bf16.mxu0 0
    %1182 = vmatpush1.bf16.msra.mxu0 0
    %1183 = vmatprep.subr.bf16.mxu0 0
    %1184 = vmatpush1.bf16.msra.mxu0 0
    %1185 = vmatprep.subr.bf16.mxu0 0
    %1186 = vmatpush1.bf16.msra.mxu0 0
    %1187 = vmatprep.mubr.bf16.mxu0 0
    %1188 = vmatmul.mubr.bf16.gmra.mrb[0].mxu0 %v1139
    %v1189 = vpop.f32.mrb[0].mxu0
    %v1190 = vadd.f32 0.0, %v1189
    %v1191 = vpop.f32.mrb[0].mxu0
    %v1192 = vpop.f32.mrb[0].mxu0
    %v1193 = vadd.f32 0.0, %v1192
    %v1194 = vpop.f32.mrb[0].mxu0
    %1195 = vmatprep.mubr.bf16.mxu0 0
    %1196 = vmatmul.mubr.bf16.gmra.mrb[0].mxu0 %v1140
    %v1197 = vpop.f32.mrb[0].mxu0
    %v1198 = vadd.f32 0.0, %v1197
    %v1199 = vpop.f32.mrb[0].mxu0
    %v1200 = vpop.f32.mrb[0].mxu0
    %v1201 = vadd.f32 0.0, %v1200
    %v1202 = vpop.f32.mrb[0].mxu0
    %1203 = vmatprep.mubr.bf16.mxu0 0
    %1204 = vmatmul.mubr.bf16.gmra.mrb[0].mxu0 %v1141
    %v1205 = vpop.f32.mrb[0].mxu0
    %v1206 = vadd.f32 0.0, %v1205
    %v1207 = vpop.f32.mrb[0].mxu0
    %v1208 = vpop.f32.mrb[0].mxu0
    %v1209 = vadd.f32 0.0, %v1208
    %v1210 = vpop.f32.mrb[0].mxu0
    %1211 = vmatprep.mubr.bf16.mxu0 0
    %1212 = vmatmul.mubr.bf16.gmra.mrb[0].mxu0 %v1142
    %v1213 = vpop.f32.mrb[0].mxu0
    %v1214 = vadd.f32 0.0, %v1213
    %v1215 = vpop.f32.mrb[0].mxu0
    %v1216 = vpop.f32.mrb[0].mxu0
    %v1217 = vadd.f32 0.0, %v1216
    %v1218 = vpop.f32.mrb[0].mxu0
    %1219 = vmatprep.mubr.bf16.mxu0 0
    %1220 = vmatmul.mubr.bf16.gmra.mrb[0].mxu0 %v1143
    %v1221 = vpop.f32.mrb[0].mxu0
    %v1222 = vadd.f32 0.0, %v1221
    %v1223 = vpop.f32.mrb[0].mxu0
    %v1224 = vpop.f32.mrb[0].mxu0
    %v1225 = vadd.f32 0.0, %v1224
    %v1226 = vpop.f32.mrb[0].mxu0
    %1227 = vmatprep.mubr.bf16.mxu0 0
    %1228 = vmatmul.mubr.bf16.gmra.mrb[0].mxu0 %v1144
    %v1229 = vpop.f32.mrb[0].mxu0
    %v1230 = vadd.f32 0.0, %v1229
    %v1231 = vpop.f32.mrb[0].mxu0
    %v1232 = vpop.f32.mrb[0].mxu0
    %v1233 = vadd.f32 0.0, %v1232
    %v1234 = vpop.f32.mrb[0].mxu0
    %1235 = vmatprep.mubr.bf16.mxu0 0
    %1236 = vmatmul.mubr.bf16.gmra.mrb[0].mxu0 %v1145
    %v1237 = vpop.f32.mrb[0].mxu0
    %v1238 = vadd.f32 0.0, %v1237
    %v1239 = vpop.f32.mrb[0].mxu0
    %v1240 = vpop.f32.mrb[0].mxu0
    %v1241 = vadd.f32 0.0, %v1240
    %v1242 = vpop.f32.mrb[0].mxu0
    %1243 = vmatprep.mubr.bf16.mxu0 0
    %1244 = vmatmul.mubr.bf16.gmra.mrb[0].mxu0 %v1146
    %v1245 = vpop.f32.mrb[0].mxu0
    %v1246 = vadd.f32 0.0, %v1245
    %v1247 = vpop.f32.mrb[0].mxu0
    %v1248 = vpop.f32.mrb[0].mxu0
    %v1249 = vadd.f32 0.0, %v1248
    %v1250 = vpop.f32.mrb[0].mxu0
    %1251 = vdwg.mxu0
    %1256 = vrot.lane.b32.xlu0 %v1206, 32
    %v1257 = vpop.permute.xlu0 %1256
    %1258 = vrot.lane.b32.xlu0 %v1209, 32
    %v1259 = vpop.permute.xlu0 %1258
    %1260 = vrot.lane.b32.xlu0 %v1214, 32
    %v1261 = vpop.permute.xlu0 %1260
    %1262 = vrot.lane.b32.xlu0 %v1217, 32
    %v1263 = vpop.permute.xlu0 %1262
    %1272 = vrot.lane.b32.xlu0 %v1222, 64
    %v1273 = vpop.permute.xlu0 %1272
    %1274 = vrot.lane.b32.xlu0 %v1225, 64
    %v1275 = vpop.permute.xlu0 %1274
    %1276 = vrot.lane.b32.xlu0 %v1230, 64
    %v1277 = vpop.permute.xlu0 %1276
    %1278 = vrot.lane.b32.xlu0 %v1233, 64
    %v1279 = vpop.permute.xlu0 %1278
    %1288 = vrot.lane.b32.xlu0 %v1238, 96
    %v1289 = vpop.permute.xlu0 %1288
    %1290 = vrot.lane.b32.xlu0 %v1241, 96
    %v1291 = vpop.permute.xlu0 %1290
    %1292 = vrot.lane.b32.xlu0 %v1246, 96
    %v1293 = vpop.permute.xlu0 %1292
    %1294 = vrot.lane.b32.xlu0 %v1249, 96
    %v1295 = vpop.permute.xlu0 %1294
    %v1300 = vsel %vm849, %v1190, %v1257
    %v1301 = vsel %vm849, %v1193, %v1259
    %v1302 = vsel %vm849, %v1198, %v1261
    %v1303 = vsel %vm849, %v1201, %v1263
    %v1304 = vsel %vm178, %v1300, %v1273
    %v1305 = vsel %vm178, %v1301, %v1275
    %v1306 = vsel %vm178, %v1302, %v1277
    %v1307 = vsel %vm178, %v1303, %v1279
    %vm1308 = vcmask 785408
    %v1309 = vsel %vm1308, %v1304, %v1289
    %v1310 = vsel %vm1308, %v1305, %v1291
    %v1311 = vsel %vm1308, %v1306, %v1293
    %v1312 = vsel %vm1308, %v1307, %v1295
    %v1313 = vpack.c.bf16 %v1310, %v1309
    %v1314 = vpack.c.bf16 %v1312, %v1311
    %v1315 = vld [vmem:[#allocation8] sm:$0xf]
    %v1316 = vld [vmem:[#allocation8 + $0x4] sm:$0xf]
    %v1317 = vld [vmem:[#allocation8 + $0x8] sm:$0xf]
    %v1318 = vld [vmem:[#allocation8 + $0xc] sm:$0xf]
    %v1319 = vld [vmem:[#allocation8 + $0x10] sm:$0xf]
    %v1320 = vld [vmem:[#allocation8 + $0x14] sm:$0xf]
    %v1321 = vld [vmem:[#allocation8 + $0x18] sm:$0xf]
    %v1322 = vld [vmem:[#allocation8 + $0x1c] sm:$0xf]
    %v1323 = vld [vmem:[#allocation8 + $0x20] sm:$0xf]
    %v1324 = vld [vmem:[#allocation8 + $0x24] sm:$0xf]
    %v1325 = vld [vmem:[#allocation8 + $0x28] sm:$0xf]
    %v1326 = vld [vmem:[#allocation8 + $0x2c] sm:$0xf]
    %v1327 = vld [vmem:[#allocation8 + $0x30] sm:$0xf]
    %v1328 = vld [vmem:[#allocation8 + $0x34] sm:$0xf]
    %v1329 = vld [vmem:[#allocation8 + $0x38] sm:$0xf]
    %v1330 = vld [vmem:[#allocation8 + $0x3c] sm:$0xf]
    %v1332 = vlaneseq
    %v1333 = vshrl.u32 %v1332, 7
    %v1334 = vsub.s32 0, %v1333
    %v1335 = vrot.slane %v357, %v1334
    %v1353 = vunpack.c.l.b16 %v1315
    %v1354 = vunpack.c.l.b16 %v1316
    %v1355 = vunpack.c.l.b16 %v1317
    %v1356 = vunpack.c.l.b16 %v1318
    %v1357 = vunpack.c.l.b16 %v1319
    %v1358 = vunpack.c.l.b16 %v1320
    %v1359 = vunpack.c.l.b16 %v1321
    %v1360 = vunpack.c.l.b16 %v1322
    %v1361 = vunpack.c.l.b16 %v1323
    %v1362 = vunpack.c.l.b16 %v1324
    %v1363 = vunpack.c.l.b16 %v1325
    %v1364 = vunpack.c.l.b16 %v1326
    %v1365 = vunpack.c.l.b16 %v1327
    %v1366 = vunpack.c.l.b16 %v1328
    %v1367 = vunpack.c.l.b16 %v1329
    %v1368 = vunpack.c.l.b16 %v1330
    %v1369 = vpack.c.b16 %v1354, %v1353
    %v1370 = vpack.c.b16 %v1356, %v1355
    %v1371 = vpack.c.b16 %v1358, %v1357
    %v1372 = vpack.c.b16 %v1360, %v1359
    %v1373 = vpack.c.b16 %v1362, %v1361
    %v1374 = vpack.c.b16 %v1364, %v1363
    %v1375 = vpack.c.b16 %v1366, %v1365
    %v1376 = vpack.c.b16 %v1368, %v1367
    %1385 = vmatprep.subr.bf16.mxu0 0
    %1386 = vmatpush1.bf16.msra.mxu0 %v1369
    %1387 = vmatprep.subr.bf16.mxu0 0
    %1388 = vmatpush1.bf16.msra.mxu0 %v1370
    %1389 = vmatprep.subr.bf16.mxu0 0
    %1390 = vmatpush1.bf16.msra.mxu0 %v1371
    %1391 = vmatprep.subr.bf16.mxu0 0
    %1392 = vmatpush1.bf16.msra.mxu0 %v1372
    %1393 = vmatprep.subr.bf16.mxu0 0
    %1394 = vmatpush1.bf16.msra.mxu0 %v1373
    %1395 = vmatprep.subr.bf16.mxu0 0
    %1396 = vmatpush1.bf16.msra.mxu0 %v1374
    %1397 = vmatprep.subr.bf16.mxu0 0
    %1398 = vmatpush1.bf16.msra.mxu0 %v1375
    %1399 = vmatprep.subr.bf16.mxu0 0
    %1400 = vmatpush1.bf16.msra.mxu0 %v1376
    %1401 = vmatprep.subr.bf16.mxu0 0
    %1402 = vmatpush1.bf16.msra.mxu0 0
    %1403 = vmatprep.subr.bf16.mxu0 0
    %1404 = vmatpush1.bf16.msra.mxu0 0
    %1405 = vmatprep.subr.bf16.mxu0 0
    %1406 = vmatpush1.bf16.msra.mxu0 0
    %1407 = vmatprep.subr.bf16.mxu0 0
    %1408 = vmatpush1.bf16.msra.mxu0 0
    %1409 = vmatprep.subr.bf16.mxu0 0
    %1410 = vmatpush1.bf16.msra.mxu0 0
    %1411 = vmatprep.subr.bf16.mxu0 0
    %1412 = vmatpush1.bf16.msra.mxu0 0
    %1413 = vmatprep.subr.bf16.mxu0 0
    %1414 = vmatpush1.bf16.msra.mxu0 0
    %1415 = vmatprep.subr.bf16.mxu0 0
    %1416 = vmatpush1.bf16.msra.mxu0 0
    %1417 = vmatprep.mubr.bf16.mxu0 0
    %1418 = vmatmul.mubr.bf16.gmra.mrb[0].mxu0 %v1313
    %v1419 = vpop.f32.mrb[0].mxu0
    %v1420 = vadd.f32 %v1335, %v1419
    %v1421 = vpop.f32.mrb[0].mxu0
    %v1422 = vpop.f32.mrb[0].mxu0
    %v1423 = vadd.f32 %v1335, %v1422
    %v1424 = vpop.f32.mrb[0].mxu0
    %1425 = vmatprep.mubr.bf16.mxu0 0
    %1426 = vmatmul.mubr.bf16.gmra.mrb[0].mxu0 %v1314
    %v1427 = vpop.f32.mrb[0].mxu0
    %v1428 = vadd.f32 %v1335, %v1427
    %v1429 = vpop.f32.mrb[0].mxu0
    %v1430 = vpop.f32.mrb[0].mxu0
    %v1431 = vadd.f32 %v1335, %v1430
    %v1432 = vpop.f32.mrb[0].mxu0
    %1433 = vdwg.mxu0
    %v1434 = vadd.f32 %v220, %v1420
    %v1435 = vadd.f32 %v223, %v1423
    %v1436 = vadd.f32 %v228, %v1428
    %v1437 = vadd.f32 %v231, %v1431
    %1438 = vadd.xlane.f32.xlu0 %v1434
    %v1439 = vpop.xlane.xlu0 %1438
    %1440 = vadd.xlane.f32.xlu0 %v1435
    %v1441 = vpop.xlane.xlu0 %1440
    %1442 = vadd.xlane.f32.xlu0 %v1436
    %v1443 = vpop.xlane.xlu0 %1442
    %1444 = vadd.xlane.f32.xlu0 %v1437
    %v1445 = vpop.xlane.xlu0 %1444
    %v1446 = vmul.f32 %v1439, %v372
    %v1447 = vmul.f32 %v1441, %v372
    %v1448 = vmul.f32 %v1443, %v372
    %v1449 = vmul.f32 %v1445, %v372
    %v1450 = vsub.f32 %v1434, %v1446
    %v1451 = vsub.f32 %v1435, %v1447
    %v1452 = vsub.f32 %v1436, %v1448
    %v1453 = vsub.f32 %v1437, %v1449
    %v1454 = vmul.f32 %v1450, %v1450
    %v1455 = vmul.f32 %v1451, %v1451
    %v1456 = vmul.f32 %v1452, %v1452
    %v1457 = vmul.f32 %v1453, %v1453
    %1458 = vadd.xlane.f32.xlu0 %v1454
    %v1459 = vpop.xlane.xlu0 %1458
    %1460 = vadd.xlane.f32.xlu0 %v1455
    %v1461 = vpop.xlane.xlu0 %1460
    %1462 = vadd.xlane.f32.xlu0 %v1456
    %v1463 = vpop.xlane.xlu0 %1462
    %1464 = vadd.xlane.f32.xlu0 %v1457
    %v1465 = vpop.xlane.xlu0 %1464
    %v1466 = vmul.f32 %v1459, %v372
    %v1467 = vmul.f32 %v1461, %v372
    %v1468 = vmul.f32 %v1463, %v372
    %v1469 = vmul.f32 %v1465, %v372
    %v1470 = vadd.f32 %v1466, 1e-05
    %v1471 = vadd.f32 %v1467, 1e-05
    %v1472 = vadd.f32 %v1468, 1e-05
    %v1473 = vadd.f32 %v1469, 1e-05
    %v1474 = vrsqrt.pop %v1470
    %v1475 = vrsqrt.pop %v1471
    %v1476 = vrsqrt.pop %v1472
    %v1477 = vrsqrt.pop %v1473
    %v1478 = vmul.f32 %v1450, %v1474
    %v1479 = vmul.f32 %v1451, %v1475
    %v1480 = vmul.f32 %v1452, %v1476
    %v1481 = vmul.f32 %v1453, %v1477
    %v1483 = vlaneseq
    %v1484 = vshrl.u32 %v1483, 7
    %v1485 = vsub.s32 0, %v1484
    %v1486 = vrot.slane %v353, %v1485
    %v1488 = vmul.f32 %v1478, %v1486
    %v1489 = vmul.f32 %v1479, %v1486
    %v1490 = vmul.f32 %v1480, %v1486
    %v1491 = vmul.f32 %v1481, %v1486
    %v1493 = vlaneseq
    %v1494 = vshrl.u32 %v1493, 7
    %v1495 = vsub.s32 0, %v1494
    %v1496 = vrot.slane %v355, %v1495
    %v1498 = vadd.f32 %v1488, %v1496
    %v1499 = vadd.f32 %v1489, %v1496
    %v1500 = vadd.f32 %v1490, %v1496
    %v1501 = vadd.f32 %v1491, %v1496
    %v1502 = vpack.c.bf16 %v1499, %v1498
    %v1503 = vpack.c.bf16 %v1501, %v1500
    %v1504 = vld [vmem:[#allocation10] sm:$0xff]
    %v1505 = vld [vmem:[#allocation10 + $0x8] sm:$0xff]
    %v1506 = vld [vmem:[#allocation10 + $0x10] sm:$0xff]
    %v1507 = vld [vmem:[#allocation10 + $0x18] sm:$0xff]
    %v1508 = vld [vmem:[#allocation10 + $0x20] sm:$0xff]
    %v1509 = vld [vmem:[#allocation10 + $0x28] sm:$0xff]
    %v1510 = vld [vmem:[#allocation10 + $0x30] sm:$0xff]
    %v1511 = vld [vmem:[#allocation10 + $0x38] sm:$0xff]
    %v1512 = vld [vmem:[#allocation10 + $0x40] sm:$0xff]
    %v1513 = vld [vmem:[#allocation10 + $0x48] sm:$0xff]
    %v1514 = vld [vmem:[#allocation10 + $0x50] sm:$0xff]
    %v1515 = vld [vmem:[#allocation10 + $0x58] sm:$0xff]
    %v1516 = vld [vmem:[#allocation10 + $0x60] sm:$0xff]
    %v1517 = vld [vmem:[#allocation10 + $0x68] sm:$0xff]
    %v1518 = vld [vmem:[#allocation10 + $0x70] sm:$0xff]
    %v1519 = vld [vmem:[#allocation10 + $0x78] sm:$0xff]
    %v1520 = vld [vmem:[#allocation10 + $0x80] sm:$0xff]
    %v1521 = vld [vmem:[#allocation10 + $0x88] sm:$0xff]
    %v1522 = vld [vmem:[#allocation10 + $0x90] sm:$0xff]
    %v1523 = vld [vmem:[#allocation10 + $0x98] sm:$0xff]
    %v1524 = vld [vmem:[#allocation10 + $0xa0] sm:$0xff]
    %v1525 = vld [vmem:[#allocation10 + $0xa8] sm:$0xff]
    %v1526 = vld [vmem:[#allocation10 + $0xb0] sm:$0xff]
    %v1527 = vld [vmem:[#allocation10 + $0xb8] sm:$0xff]
    %v1528 = vld [vmem:[#allocation10 + $0xc0] sm:$0xff]
    %v1529 = vld [vmem:[#allocation10 + $0xc8] sm:$0xff]
    %v1530 = vld [vmem:[#allocation10 + $0xd0] sm:$0xff]
    %v1531 = vld [vmem:[#allocation10 + $0xd8] sm:$0xff]
    %v1532 = vld [vmem:[#allocation10 + $0xe0] sm:$0xff]
    %v1533 = vld [vmem:[#allocation10 + $0xe8] sm:$0xff]
    %v1534 = vld [vmem:[#allocation10 + $0xf0] sm:$0xff]
    %v1535 = vld [vmem:[#allocation10 + $0xf8] sm:$0xff]
    %v1537 = vlaneseq
    %v1538 = vshrl.u32 %v1537, 7
    %v1539 = vsub.s32 0, %v1538
    %v1540 = vrot.slane %v363, %v1539
    %v1541 = vlaneseq
    %v1542 = vshrl.u32 %v1541, 7
    %v1543 = vsub.s32 1, %v1542
    %v1544 = vrot.slane %v363, %v1543
    %v1545 = vlaneseq
    %v1546 = vshrl.u32 %v1545, 7
    %v1547 = vsub.s32 2, %v1546
    %v1548 = vrot.slane %v363, %v1547
    %v1549 = vlaneseq
    %v1550 = vshrl.u32 %v1549, 7
    %v1551 = vsub.s32 3, %v1550
    %v1552 = vrot.slane %v363, %v1551
    %v1589 = vunpack.c.l.b16 %v1504
    %v1590 = vunpack.c.h.b16 %v1504
    %v1591 = vunpack.c.l.b16 %v1505
    %v1592 = vunpack.c.h.b16 %v1505
    %v1593 = vunpack.c.l.b16 %v1506
    %v1594 = vunpack.c.h.b16 %v1506
    %v1595 = vunpack.c.l.b16 %v1507
    %v1596 = vunpack.c.h.b16 %v1507
    %v1597 = vunpack.c.l.b16 %v1508
    %v1598 = vunpack.c.h.b16 %v1508
    %v1599 = vunpack.c.l.b16 %v1509
    %v1600 = vunpack.c.h.b16 %v1509
    %v1601 = vunpack.c.l.b16 %v1510
    %v1602 = vunpack.c.h.b16 %v1510
    %v1603 = vunpack.c.l.b16 %v1511
    %v1604 = vunpack.c.h.b16 %v1511
    %v1605 = vunpack.c.l.b16 %v1512
    %v1606 = vunpack.c.h.b16 %v1512
    %v1607 = vunpack.c.l.b16 %v1513
    %v1608 = vunpack.c.h.b16 %v1513
    %v1609 = vunpack.c.l.b16 %v1514
    %v1610 = vunpack.c.h.b16 %v1514
    %v1611 = vunpack.c.l.b16 %v1515
    %v1612 = vunpack.c.h.b16 %v1515
    %v1613 = vunpack.c.l.b16 %v1516
    %v1614 = vunpack.c.h.b16 %v1516
    %v1615 = vunpack.c.l.b16 %v1517
    %v1616 = vunpack.c.h.b16 %v1517
    %v1617 = vunpack.c.l.b16 %v1518
    %v1618 = vunpack.c.h.b16 %v1518
    %v1619 = vunpack.c.l.b16 %v1519
    %v1620 = vunpack.c.h.b16 %v1519
    %v1621 = vunpack.c.l.b16 %v1520
    %v1622 = vunpack.c.h.b16 %v1520
    %v1623 = vunpack.c.l.b16 %v1521
    %v1624 = vunpack.c.h.b16 %v1521
    %v1625 = vunpack.c.l.b16 %v1522
    %v1626 = vunpack.c.h.b16 %v1522
    %v1627 = vunpack.c.l.b16 %v1523
    %v1628 = vunpack.c.h.b16 %v1523
    %v1629 = vunpack.c.l.b16 %v1524
    %v1630 = vunpack.c.h.b16 %v1524
    %v1631 = vunpack.c.l.b16 %v1525
    %v1632 = vunpack.c.h.b16 %v1525
    %v1633 = vunpack.c.l.b16 %v1526
    %v1634 = vunpack.c.h.b16 %v1526
    %v1635 = vunpack.c.l.b16 %v1527
    %v1636 = vunpack.c.h.b16 %v1527
    %v1637 = vunpack.c.l.b16 %v1528
    %v1638 = vunpack.c.h.b16 %v1528
    %v1639 = vunpack.c.l.b16 %v1529
    %v1640 = vunpack.c.h.b16 %v1529
    %v1641 = vunpack.c.l.b16 %v1530
    %v1642 = vunpack.c.h.b16 %v1530
    %v1643 = vunpack.c.l.b16 %v1531
    %v1644 = vunpack.c.h.b16 %v1531
    %v1645 = vunpack.c.l.b16 %v1532
    %v1646 = vunpack.c.h.b16 %v1532
    %v1647 = vunpack.c.l.b16 %v1533
    %v1648 = vunpack.c.h.b16 %v1533
    %v1649 = vunpack.c.l.b16 %v1534
    %v1650 = vunpack.c.h.b16 %v1534
    %v1651 = vunpack.c.l.b16 %v1535
    %v1652 = vunpack.c.h.b16 %v1535
    %v1653 = vpack.c.b16 %v1593, %v1589
    %v1654 = vpack.c.b16 %v1594, %v1590
    %v1655 = vpack.c.b16 %v1595, %v1591
    %v1656 = vpack.c.b16 %v1596, %v1592
    %v1657 = vpack.c.b16 %v1601, %v1597
    %v1658 = vpack.c.b16 %v1602, %v1598
    %v1659 = vpack.c.b16 %v1603, %v1599
    %v1660 = vpack.c.b16 %v1604, %v1600
    %v1661 = vpack.c.b16 %v1609, %v1605
    %v1662 = vpack.c.b16 %v1610, %v1606
    %v1663 = vpack.c.b16 %v1611, %v1607
    %v1664 = vpack.c.b16 %v1612, %v1608
    %v1665 = vpack.c.b16 %v1617, %v1613
    %v1666 = vpack.c.b16 %v1618, %v1614
    %v1667 = vpack.c.b16 %v1619, %v1615
    %v1668 = vpack.c.b16 %v1620, %v1616
    %v1669 = vpack.c.b16 %v1625, %v1621
    %v1670 = vpack.c.b16 %v1626, %v1622
    %v1671 = vpack.c.b16 %v1627, %v1623
    %v1672 = vpack.c.b16 %v1628, %v1624
    %v1673 = vpack.c.b16 %v1633, %v1629
    %v1674 = vpack.c.b16 %v1634, %v1630
    %v1675 = vpack.c.b16 %v1635, %v1631
    %v1676 = vpack.c.b16 %v1636, %v1632
    %v1677 = vpack.c.b16 %v1641, %v1637
    %v1678 = vpack.c.b16 %v1642, %v1638
    %v1679 = vpack.c.b16 %v1643, %v1639
    %v1680 = vpack.c.b16 %v1644, %v1640
    %v1681 = vpack.c.b16 %v1649, %v1645
    %v1682 = vpack.c.b16 %v1650, %v1646
    %v1683 = vpack.c.b16 %v1651, %v1647
    %v1684 = vpack.c.b16 %v1652, %v1648
    %1717 = vmatprep.subr.bf16.mxu0 %v1654
    %1718 = vmatpush1.bf16.msra.mxu0 %v1653
    %1719 = vmatprep.subr.bf16.mxu0 %v1658
    %1720 = vmatpush1.bf16.msra.mxu0 %v1657
    %1721 = vmatprep.subr.bf16.mxu0 %v1662
    %1722 = vmatpush1.bf16.msra.mxu0 %v1661
    %1723 = vmatprep.subr.bf16.mxu0 %v1666
    %1724 = vmatpush1.bf16.msra.mxu0 %v1665
    %1725 = vmatprep.subr.bf16.mxu0 %v1670
    %1726 = vmatpush1.bf16.msra.mxu0 %v1669
    %1727 = vmatprep.subr.bf16.mxu0 %v1674
    %1728 = vmatpush1.bf16.msra.mxu0 %v1673
    %1729 = vmatprep.subr.bf16.mxu0 %v1678
    %1730 = vmatpush1.bf16.msra.mxu0 %v1677
    %1731 = vmatprep.subr.bf16.mxu0 %v1682
    %1732 = vmatpush1.bf16.msra.mxu0 %v1681
    %1733 = vmatprep.subr.bf16.mxu0 0
    %1734 = vmatpush1.bf16.msra.mxu0 0
    %1735 = vmatprep.subr.bf16.mxu0 0
    %1736 = vmatpush1.bf16.msra.mxu0 0
    %1737 = vmatprep.subr.bf16.mxu0 0
    %1738 = vmatpush1.bf16.msra.mxu0 0
    %1739 = vmatprep.subr.bf16.mxu0 0
    %1740 = vmatpush1.bf16.msra.mxu0 0
    %1741 = vmatprep.subr.bf16.mxu0 0
    %1742 = vmatpush1.bf16.msra.mxu0 0
    %1743 = vmatprep.subr.bf16.mxu0 0
    %1744 = vmatpush1.bf16.msra.mxu0 0
    %1745 = vmatprep.subr.bf16.mxu0 0
    %1746 = vmatpush1.bf16.msra.mxu0 0
    %1747 = vmatprep.subr.bf16.mxu0 0
    %1748 = vmatpush1.bf16.msra.mxu0 0
    %1749 = vmatprep.mubr.bf16.mxu0 0
    %1750 = vmatmul.mubr.bf16.gmra.mrb[0].mxu0 %v1502
    %v1751 = vpop.f32.mrb[0].mxu0
    %v1752 = vadd.f32 %v1540, %v1751
    %v1753 = vpop.f32.mrb[0].mxu0
    %v1754 = vadd.f32 %v1544, %v1753
    %v1755 = vpop.f32.mrb[0].mxu0
    %v1756 = vadd.f32 %v1540, %v1755
    %v1757 = vpop.f32.mrb[0].mxu0
    %v1758 = vadd.f32 %v1544, %v1757
    %1759 = vmatprep.mubr.bf16.mxu0 0
    %1760 = vmatmul.mubr.bf16.gmra.mrb[0].mxu0 %v1503
    %v1761 = vpop.f32.mrb[0].mxu0
    %v1762 = vadd.f32 %v1540, %v1761
    %v1763 = vpop.f32.mrb[0].mxu0
    %v1764 = vadd.f32 %v1544, %v1763
    %v1765 = vpop.f32.mrb[0].mxu0
    %v1766 = vadd.f32 %v1540, %v1765
    %v1767 = vpop.f32.mrb[0].mxu0
    %v1768 = vadd.f32 %v1544, %v1767
    %1769 = vdwg.mxu0
    %1770 = vmatprep.subr.bf16.mxu0 %v1656
    %1771 = vmatpush1.bf16.msra.mxu0 %v1655
    %1772 = vmatprep.subr.bf16.mxu0 %v1660
    %1773 = vmatpush1.bf16.msra.mxu0 %v1659
    %1774 = vmatprep.subr.bf16.mxu0 %v1664
    %1775 = vmatpush1.bf16.msra.mxu0 %v1663
    %1776 = vmatprep.subr.bf16.mxu0 %v1668
    %1777 = vmatpush1.bf16.msra.mxu0 %v1667
    %1778 = vmatprep.subr.bf16.mxu0 %v1672
    %1779 = vmatpush1.bf16.msra.mxu0 %v1671
    %1780 = vmatprep.subr.bf16.mxu0 %v1676
    %1781 = vmatpush1.bf16.msra.mxu0 %v1675
    %1782 = vmatprep.subr.bf16.mxu0 %v1680
    %1783 = vmatpush1.bf16.msra.mxu0 %v1679
    %1784 = vmatprep.subr.bf16.mxu0 %v1684
    %1785 = vmatpush1.bf16.msra.mxu0 %v1683
    %1786 = vmatprep.subr.bf16.mxu0 0
    %1787 = vmatpush1.bf16.msra.mxu0 0
    %1788 = vmatprep.subr.bf16.mxu0 0
    %1789 = vmatpush1.bf16.msra.mxu0 0
    %1790 = vmatprep.subr.bf16.mxu0 0
    %1791 = vmatpush1.bf16.msra.mxu0 0
    %1792 = vmatprep.subr.bf16.mxu0 0
    %1793 = vmatpush1.bf16.msra.mxu0 0
    %1794 = vmatprep.subr.bf16.mxu0 0
    %1795 = vmatpush1.bf16.msra.mxu0 0
    %1796 = vmatprep.subr.bf16.mxu0 0
    %1797 = vmatpush1.bf16.msra.mxu0 0
    %1798 = vmatprep.subr.bf16.mxu0 0
    %1799 = vmatpush1.bf16.msra.mxu0 0
    %1800 = vmatprep.subr.bf16.mxu0 0
    %1801 = vmatpush1.bf16.msra.mxu0 0
    %1802 = vmatprep.mubr.bf16.mxu0 0
    %1803 = vmatmul.mubr.bf16.gmra.mrb[0].mxu0 %v1502
    %v1804 = vpop.f32.mrb[0].mxu0
    %v1805 = vadd.f32 %v1548, %v1804
    %v1806 = vpop.f32.mrb[0].mxu0
    %v1807 = vadd.f32 %v1552, %v1806
    %v1808 = vpop.f32.mrb[0].mxu0
    %v1809 = vadd.f32 %v1548, %v1808
    %v1810 = vpop.f32.mrb[0].mxu0
    %v1811 = vadd.f32 %v1552, %v1810
    %1812 = vmatprep.mubr.bf16.mxu0 0
    %1813 = vmatmul.mubr.bf16.gmra.mrb[0].mxu0 %v1503
    %v1814 = vpop.f32.mrb[0].mxu0
    %v1815 = vadd.f32 %v1548, %v1814
    %v1816 = vpop.f32.mrb[0].mxu0
    %v1817 = vadd.f32 %v1552, %v1816
    %v1818 = vpop.f32.mrb[0].mxu0
    %v1819 = vadd.f32 %v1548, %v1818
    %v1820 = vpop.f32.mrb[0].mxu0
    %v1821 = vadd.f32 %v1552, %v1820
    %1822 = vdwg.mxu0
    %v1823 = vmax.f32 %v1752, 0.0
    %v1824 = vmax.f32 %v1754, 0.0
    %v1825 = vmax.f32 %v1805, 0.0
    %v1826 = vmax.f32 %v1807, 0.0
    %v1827 = vmax.f32 %v1756, 0.0
    %v1828 = vmax.f32 %v1758, 0.0
    %v1829 = vmax.f32 %v1809, 0.0
    %v1830 = vmax.f32 %v1811, 0.0
    %v1831 = vmax.f32 %v1762, 0.0
    %v1832 = vmax.f32 %v1764, 0.0
    %v1833 = vmax.f32 %v1815, 0.0
    %v1834 = vmax.f32 %v1817, 0.0
    %v1835 = vmax.f32 %v1766, 0.0
    %v1836 = vmax.f32 %v1768, 0.0
    %v1837 = vmax.f32 %v1819, 0.0
    %v1838 = vmax.f32 %v1821, 0.0
    %v1839 = vpack.c.bf16 %v1827, %v1823
    %v1840 = vpack.c.bf16 %v1828, %v1824
    %v1841 = vpack.c.bf16 %v1829, %v1825
    %v1842 = vpack.c.bf16 %v1830, %v1826
    %v1843 = vpack.c.bf16 %v1835, %v1831
    %v1844 = vpack.c.bf16 %v1836, %v1832
    %v1845 = vpack.c.bf16 %v1837, %v1833
    %v1846 = vpack.c.bf16 %v1838, %v1834
    %v1847 = vld [vmem:[#allocation11] sm:$0xf]
    %v1848 = vld [vmem:[#allocation11 + $0x4] sm:$0xf]
    %v1849 = vld [vmem:[#allocation11 + $0x8] sm:$0xf]
    %v1850 = vld [vmem:[#allocation11 + $0xc] sm:$0xf]
    %v1851 = vld [vmem:[#allocation11 + $0x10] sm:$0xf]
    %v1852 = vld [vmem:[#allocation11 + $0x14] sm:$0xf]
    %v1853 = vld [vmem:[#allocation11 + $0x18] sm:$0xf]
    %v1854 = vld [vmem:[#allocation11 + $0x1c] sm:$0xf]
    %v1855 = vld [vmem:[#allocation11 + $0x20] sm:$0xf]
    %v1856 = vld [vmem:[#allocation11 + $0x24] sm:$0xf]
    %v1857 = vld [vmem:[#allocation11 + $0x28] sm:$0xf]
    %v1858 = vld [vmem:[#allocation11 + $0x2c] sm:$0xf]
    %v1859 = vld [vmem:[#allocation11 + $0x30] sm:$0xf]
    %v1860 = vld [vmem:[#allocation11 + $0x34] sm:$0xf]
    %v1861 = vld [vmem:[#allocation11 + $0x38] sm:$0xf]
    %v1862 = vld [vmem:[#allocation11 + $0x3c] sm:$0xf]
    %v1863 = vld [vmem:[#allocation11 + $0x40] sm:$0xf]
    %v1864 = vld [vmem:[#allocation11 + $0x44] sm:$0xf]
    %v1865 = vld [vmem:[#allocation11 + $0x48] sm:$0xf]
    %v1866 = vld [vmem:[#allocation11 + $0x4c] sm:$0xf]
    %v1867 = vld [vmem:[#allocation11 + $0x50] sm:$0xf]
    %v1868 = vld [vmem:[#allocation11 + $0x54] sm:$0xf]
    %v1869 = vld [vmem:[#allocation11 + $0x58] sm:$0xf]
    %v1870 = vld [vmem:[#allocation11 + $0x5c] sm:$0xf]
    %v1871 = vld [vmem:[#allocation11 + $0x60] sm:$0xf]
    %v1872 = vld [vmem:[#allocation11 + $0x64] sm:$0xf]
    %v1873 = vld [vmem:[#allocation11 + $0x68] sm:$0xf]
    %v1874 = vld [vmem:[#allocation11 + $0x6c] sm:$0xf]
    %v1875 = vld [vmem:[#allocation11 + $0x70] sm:$0xf]
    %v1876 = vld [vmem:[#allocation11 + $0x74] sm:$0xf]
    %v1877 = vld [vmem:[#allocation11 + $0x78] sm:$0xf]
    %v1878 = vld [vmem:[#allocation11 + $0x7c] sm:$0xf]
    %v1879 = vld [vmem:[#allocation11 + $0x80] sm:$0xf]
    %v1880 = vld [vmem:[#allocation11 + $0x84] sm:$0xf]
    %v1881 = vld [vmem:[#allocation11 + $0x88] sm:$0xf]
    %v1882 = vld [vmem:[#allocation11 + $0x8c] sm:$0xf]
    %v1883 = vld [vmem:[#allocation11 + $0x90] sm:$0xf]
    %v1884 = vld [vmem:[#allocation11 + $0x94] sm:$0xf]
    %v1885 = vld [vmem:[#allocation11 + $0x98] sm:$0xf]
    %v1886 = vld [vmem:[#allocation11 + $0x9c] sm:$0xf]
    %v1887 = vld [vmem:[#allocation11 + $0xa0] sm:$0xf]
    %v1888 = vld [vmem:[#allocation11 + $0xa4] sm:$0xf]
    %v1889 = vld [vmem:[#allocation11 + $0xa8] sm:$0xf]
    %v1890 = vld [vmem:[#allocation11 + $0xac] sm:$0xf]
    %v1891 = vld [vmem:[#allocation11 + $0xb0] sm:$0xf]
    %v1892 = vld [vmem:[#allocation11 + $0xb4] sm:$0xf]
    %v1893 = vld [vmem:[#allocation11 + $0xb8] sm:$0xf]
    %v1894 = vld [vmem:[#allocation11 + $0xbc] sm:$0xf]
    %v1895 = vld [vmem:[#allocation11 + $0xc0] sm:$0xf]
    %v1896 = vld [vmem:[#allocation11 + $0xc4] sm:$0xf]
    %v1897 = vld [vmem:[#allocation11 + $0xc8] sm:$0xf]
    %v1898 = vld [vmem:[#allocation11 + $0xcc] sm:$0xf]
    %v1899 = vld [vmem:[#allocation11 + $0xd0] sm:$0xf]
    %v1900 = vld [vmem:[#allocation11 + $0xd4] sm:$0xf]
    %v1901 = vld [vmem:[#allocation11 + $0xd8] sm:$0xf]
    %v1902 = vld [vmem:[#allocation11 + $0xdc] sm:$0xf]
    %v1903 = vld [vmem:[#allocation11 + $0xe0] sm:$0xf]
    %v1904 = vld [vmem:[#allocation11 + $0xe4] sm:$0xf]
    %v1905 = vld [vmem:[#allocation11 + $0xe8] sm:$0xf]
    %v1906 = vld [vmem:[#allocation11 + $0xec] sm:$0xf]
    %v1907 = vld [vmem:[#allocation11 + $0xf0] sm:$0xf]
    %v1908 = vld [vmem:[#allocation11 + $0xf4] sm:$0xf]
    %v1909 = vld [vmem:[#allocation11 + $0xf8] sm:$0xf]
    %v1910 = vld [vmem:[#allocation11 + $0xfc] sm:$0xf]
    %v1912 = vlaneseq
    %v1913 = vshrl.u32 %v1912, 7
    %v1914 = vsub.s32 0, %v1913
    %v1915 = vrot.slane %v359, %v1914
    %v1981 = vunpack.c.l.b16 %v1847
    %v1982 = vunpack.c.l.b16 %v1848
    %v1983 = vunpack.c.l.b16 %v1849
    %v1984 = vunpack.c.l.b16 %v1850
    %v1985 = vunpack.c.l.b16 %v1851
    %v1986 = vunpack.c.l.b16 %v1852
    %v1987 = vunpack.c.l.b16 %v1853
    %v1988 = vunpack.c.l.b16 %v1854
    %v1989 = vunpack.c.l.b16 %v1855
    %v1990 = vunpack.c.l.b16 %v1856
    %v1991 = vunpack.c.l.b16 %v1857
    %v1992 = vunpack.c.l.b16 %v1858
    %v1993 = vunpack.c.l.b16 %v1859
    %v1994 = vunpack.c.l.b16 %v1860
    %v1995 = vunpack.c.l.b16 %v1861
    %v1996 = vunpack.c.l.b16 %v1862
    %v1997 = vunpack.c.l.b16 %v1863
    %v1998 = vunpack.c.l.b16 %v1864
    %v1999 = vunpack.c.l.b16 %v1865
    %v2000 = vunpack.c.l.b16 %v1866
    %v2001 = vunpack.c.l.b16 %v1867
    %v2002 = vunpack.c.l.b16 %v1868
    %v2003 = vunpack.c.l.b16 %v1869
    %v2004 = vunpack.c.l.b16 %v1870
    %v2005 = vunpack.c.l.b16 %v1871
    %v2006 = vunpack.c.l.b16 %v1872
    %v2007 = vunpack.c.l.b16 %v1873
    %v2008 = vunpack.c.l.b16 %v1874
    %v2009 = vunpack.c.l.b16 %v1875
    %v2010 = vunpack.c.l.b16 %v1876
    %v2011 = vunpack.c.l.b16 %v1877
    %v2012 = vunpack.c.l.b16 %v1878
    %v2013 = vunpack.c.l.b16 %v1879
    %v2014 = vunpack.c.l.b16 %v1880
    %v2015 = vunpack.c.l.b16 %v1881
    %v2016 = vunpack.c.l.b16 %v1882
    %v2017 = vunpack.c.l.b16 %v1883
    %v2018 = vunpack.c.l.b16 %v1884
    %v2019 = vunpack.c.l.b16 %v1885
    %v2020 = vunpack.c.l.b16 %v1886
    %v2021 = vunpack.c.l.b16 %v1887
    %v2022 = vunpack.c.l.b16 %v1888
    %v2023 = vunpack.c.l.b16 %v1889
    %v2024 = vunpack.c.l.b16 %v1890
    %v2025 = vunpack.c.l.b16 %v1891
    %v2026 = vunpack.c.l.b16 %v1892
    %v2027 = vunpack.c.l.b16 %v1893
    %v2028 = vunpack.c.l.b16 %v1894
    %v2029 = vunpack.c.l.b16 %v1895
    %v2030 = vunpack.c.l.b16 %v1896
    %v2031 = vunpack.c.l.b16 %v1897
    %v2032 = vunpack.c.l.b16 %v1898
    %v2033 = vunpack.c.l.b16 %v1899
    %v2034 = vunpack.c.l.b16 %v1900
    %v2035 = vunpack.c.l.b16 %v1901
    %v2036 = vunpack.c.l.b16 %v1902
    %v2037 = vunpack.c.l.b16 %v1903
    %v2038 = vunpack.c.l.b16 %v1904
    %v2039 = vunpack.c.l.b16 %v1905
    %v2040 = vunpack.c.l.b16 %v1906
    %v2041 = vunpack.c.l.b16 %v1907
    %v2042 = vunpack.c.l.b16 %v1908
    %v2043 = vunpack.c.l.b16 %v1909
    %v2044 = vunpack.c.l.b16 %v1910
    %v2045 = vpack.c.b16 %v1982, %v1981
    %v2046 = vpack.c.b16 %v1984, %v1983
    %v2047 = vpack.c.b16 %v1986, %v1985
    %v2048 = vpack.c.b16 %v1988, %v1987
    %v2049 = vpack.c.b16 %v1990, %v1989
    %v2050 = vpack.c.b16 %v1992, %v1991
    %v2051 = vpack.c.b16 %v1994, %v1993
    %v2052 = vpack.c.b16 %v1996, %v1995
    %v2053 = vpack.c.b16 %v1998, %v1997
    %v2054 = vpack.c.b16 %v2000, %v1999
    %v2055 = vpack.c.b16 %v2002, %v2001
    %v2056 = vpack.c.b16 %v2004, %v2003
    %v2057 = vpack.c.b16 %v2006, %v2005
    %v2058 = vpack.c.b16 %v2008, %v2007
    %v2059 = vpack.c.b16 %v2010, %v2009
    %v2060 = vpack.c.b16 %v2012, %v2011
    %v2061 = vpack.c.b16 %v2014, %v2013
    %v2062 = vpack.c.b16 %v2016, %v2015
    %v2063 = vpack.c.b16 %v2018, %v2017
    %v2064 = vpack.c.b16 %v2020, %v2019
    %v2065 = vpack.c.b16 %v2022, %v2021
    %v2066 = vpack.c.b16 %v2024, %v2023
    %v2067 = vpack.c.b16 %v2026, %v2025
    %v2068 = vpack.c.b16 %v2028, %v2027
    %v2069 = vpack.c.b16 %v2030, %v2029
    %v2070 = vpack.c.b16 %v2032, %v2031
    %v2071 = vpack.c.b16 %v2034, %v2033
    %v2072 = vpack.c.b16 %v2036, %v2035
    %v2073 = vpack.c.b16 %v2038, %v2037
    %v2074 = vpack.c.b16 %v2040, %v2039
    %v2075 = vpack.c.b16 %v2042, %v2041
    %v2076 = vpack.c.b16 %v2044, %v2043
    %2109 = vmatprep.subr.bf16.mxu0 0
    %2110 = vmatpush1.bf16.msra.mxu0 %v2045
    %2111 = vmatprep.subr.bf16.mxu0 0
    %2112 = vmatpush1.bf16.msra.mxu0 %v2046
    %2113 = vmatprep.subr.bf16.mxu0 0
    %2114 = vmatpush1.bf16.msra.mxu0 %v2047
    %2115 = vmatprep.subr.bf16.mxu0 0
    %2116 = vmatpush1.bf16.msra.mxu0 %v2048
    %2117 = vmatprep.subr.bf16.mxu0 0
    %2118 = vmatpush1.bf16.msra.mxu0 %v2049
    %2119 = vmatprep.subr.bf16.mxu0 0
    %2120 = vmatpush1.bf16.msra.mxu0 %v2050
    %2121 = vmatprep.subr.bf16.mxu0 0
    %2122 = vmatpush1.bf16.msra.mxu0 %v2051
    %2123 = vmatprep.subr.bf16.mxu0 0
    %2124 = vmatpush1.bf16.msra.mxu0 %v2052
    %2125 = vmatprep.subr.bf16.mxu0 0
    %2126 = vmatpush1.bf16.msra.mxu0 %v2053
    %2127 = vmatprep.subr.bf16.mxu0 0
    %2128 = vmatpush1.bf16.msra.mxu0 %v2054
    %2129 = vmatprep.subr.bf16.mxu0 0
    %2130 = vmatpush1.bf16.msra.mxu0 %v2055
    %2131 = vmatprep.subr.bf16.mxu0 0
    %2132 = vmatpush1.bf16.msra.mxu0 %v2056
    %2133 = vmatprep.subr.bf16.mxu0 0
    %2134 = vmatpush1.bf16.msra.mxu0 %v2057
    %2135 = vmatprep.subr.bf16.mxu0 0
    %2136 = vmatpush1.bf16.msra.mxu0 %v2058
    %2137 = vmatprep.subr.bf16.mxu0 0
    %2138 = vmatpush1.bf16.msra.mxu0 %v2059
    %2139 = vmatprep.subr.bf16.mxu0 0
    %2140 = vmatpush1.bf16.msra.mxu0 %v2060
    %2141 = vmatprep.mubr.bf16.mxu0 %v1840
    %2142 = vmatmul.mubr.bf16.gmra.mrb[0].mxu0 %v1839
    %v2143 = vpop.f32.mrb[0].mxu0
    %v2144 = vadd.f32 %v1915, %v2143
    %v2145 = vpop.f32.mrb[0].mxu0
    %v2146 = vpop.f32.mrb[0].mxu0
    %v2147 = vadd.f32 %v1915, %v2146
    %v2148 = vpop.f32.mrb[0].mxu0
    %2149 = vmatprep.mubr.bf16.mxu0 %v1844
    %2150 = vmatmul.mubr.bf16.gmra.mrb[0].mxu0 %v1843
    %v2151 = vpop.f32.mrb[0].mxu0
    %v2152 = vadd.f32 %v1915, %v2151
    %v2153 = vpop.f32.mrb[0].mxu0
    %v2154 = vpop.f32.mrb[0].mxu0
    %v2155 = vadd.f32 %v1915, %v2154
    %v2156 = vpop.f32.mrb[0].mxu0
    %2157 = vdwg.mxu0
    %2158 = vmatprep.subr.bf16.mxu0 0
    %2159 = vmatpush1.bf16.msra.mxu0 %v2061
    %2160 = vmatprep.subr.bf16.mxu0 0
    %2161 = vmatpush1.bf16.msra.mxu0 %v2062
    %2162 = vmatprep.subr.bf16.mxu0 0
    %2163 = vmatpush1.bf16.msra.mxu0 %v2063
    %2164 = vmatprep.subr.bf16.mxu0 0
    %2165 = vmatpush1.bf16.msra.mxu0 %v2064
    %2166 = vmatprep.subr.bf16.mxu0 0
    %2167 = vmatpush1.bf16.msra.mxu0 %v2065
    %2168 = vmatprep.subr.bf16.mxu0 0
    %2169 = vmatpush1.bf16.msra.mxu0 %v2066
    %2170 = vmatprep.subr.bf16.mxu0 0
    %2171 = vmatpush1.bf16.msra.mxu0 %v2067
    %2172 = vmatprep.subr.bf16.mxu0 0
    %2173 = vmatpush1.bf16.msra.mxu0 %v2068
    %2174 = vmatprep.subr.bf16.mxu0 0
    %2175 = vmatpush1.bf16.msra.mxu0 %v2069
    %2176 = vmatprep.subr.bf16.mxu0 0
    %2177 = vmatpush1.bf16.msra.mxu0 %v2070
    %2178 = vmatprep.subr.bf16.mxu0 0
    %2179 = vmatpush1.bf16.msra.mxu0 %v2071
    %2180 = vmatprep.subr.bf16.mxu0 0
    %2181 = vmatpush1.bf16.msra.mxu0 %v2072
    %2182 = vmatprep.subr.bf16.mxu0 0
    %2183 = vmatpush1.bf16.msra.mxu0 %v2073
    %2184 = vmatprep.subr.bf16.mxu0 0
    %2185 = vmatpush1.bf16.msra.mxu0 %v2074
    %2186 = vmatprep.subr.bf16.mxu0 0
    %2187 = vmatpush1.bf16.msra.mxu0 %v2075
    %2188 = vmatprep.subr.bf16.mxu0 0
    %2189 = vmatpush1.bf16.msra.mxu0 %v2076
    %2190 = vmatprep.mubr.bf16.mxu0 %v1842
    %2191 = vmatmul.mubr.bf16.gmra.mrb[0].mxu0 %v1841
    %v2192 = vpop.f32.mrb[0].mxu0
    %v2193 = vadd.f32 %v2144, %v2192
    %v2194 = vpop.f32.mrb[0].mxu0
    %v2195 = vpop.f32.mrb[0].mxu0
    %v2196 = vadd.f32 %v2147, %v2195
    %v2197 = vpop.f32.mrb[0].mxu0
    %2198 = vmatprep.mubr.bf16.mxu0 %v1846
    %2199 = vmatmul.mubr.bf16.gmra.mrb[0].mxu0 %v1845
    %v2200 = vpop.f32.mrb[0].mxu0
    %v2201 = vadd.f32 %v2152, %v2200
    %v2202 = vpop.f32.mrb[0].mxu0
    %v2203 = vpop.f32.mrb[0].mxu0
    %v2204 = vadd.f32 %v2155, %v2203
    %v2205 = vpop.f32.mrb[0].mxu0
    %2206 = vdwg.mxu0
    %v2207 = vadd.f32 %v1434, %v2193
    %v2208 = vadd.f32 %v1435, %v2196
    %v2209 = vadd.f32 %v1436, %v2201
    %v2210 = vadd.f32 %v1437, %v2204
    %s2211 = scalar_lea.vmem [#allocation5], 32
    %v2212 = vld [vmem:[%s2211] ss:$8 sm:$0xf]
    %s2213 = scalar_lea.vmem [#allocation5], 33
    %v2214 = vld [vmem:[%s2213] ss:$8 sm:$0xf]
    %s2215 = scalar_lea.vmem [#allocation5], 34
    %v2216 = vld [vmem:[%s2215] ss:$8 sm:$0xf]
    %s2217 = scalar_lea.vmem [#allocation5], 35
    %v2218 = vld [vmem:[%s2217] ss:$8 sm:$0xf]
    %s2219 = scalar_lea.vmem [#allocation5], 36
    %v2220 = vld [vmem:[%s2219] ss:$8 sm:$0xf]
    %s2221 = scalar_lea.vmem [#allocation5], 37
    %v2222 = vld [vmem:[%s2221] ss:$8 sm:$0xf]
    %s2223 = scalar_lea.vmem [#allocation5], 38
    %v2224 = vld [vmem:[%s2223] ss:$8 sm:$0xf]
    %s2225 = scalar_lea.vmem [#allocation5], 39
    %v2226 = vld [vmem:[%s2225] ss:$8 sm:$0xf]
    %2227 = vadd.xlane.f32.xlu0 %v2207
    %v2228 = vpop.xlane.xlu0 %2227
    %2229 = vadd.xlane.f32.xlu0 %v2208
    %v2230 = vpop.xlane.xlu0 %2229
    %2231 = vadd.xlane.f32.xlu0 %v2209
    %v2232 = vpop.xlane.xlu0 %2231
    %2233 = vadd.xlane.f32.xlu0 %v2210
    %v2234 = vpop.xlane.xlu0 %2233
    %v2235 = vmul.f32 %v2228, %v372
    %v2236 = vmul.f32 %v2230, %v372
    %v2237 = vmul.f32 %v2232, %v372
    %v2238 = vmul.f32 %v2234, %v372
    %v2239 = vsub.f32 %v2207, %v2235
    %v2240 = vsub.f32 %v2208, %v2236
    %v2241 = vsub.f32 %v2209, %v2237
    %v2242 = vsub.f32 %v2210, %v2238
    %v2243 = vmul.f32 %v2239, %v2239
    %v2244 = vmul.f32 %v2240, %v2240
    %v2245 = vmul.f32 %v2241, %v2241
    %v2246 = vmul.f32 %v2242, %v2242
    %2247 = vadd.xlane.f32.xlu0 %v2243
    %v2248 = vpop.xlane.xlu0 %2247
    %2249 = vadd.xlane.f32.xlu0 %v2244
    %v2250 = vpop.xlane.xlu0 %2249
    %2251 = vadd.xlane.f32.xlu0 %v2245
    %v2252 = vpop.xlane.xlu0 %2251
    %2253 = vadd.xlane.f32.xlu0 %v2246
    %v2254 = vpop.xlane.xlu0 %2253
    %v2255 = vmul.f32 %v2248, %v372
    %v2256 = vmul.f32 %v2250, %v372
    %v2257 = vmul.f32 %v2252, %v372
    %v2258 = vmul.f32 %v2254, %v372
    %v2259 = vadd.f32 %v2255, 1e-05
    %v2260 = vadd.f32 %v2256, 1e-05
    %v2261 = vadd.f32 %v2257, 1e-05
    %v2262 = vadd.f32 %v2258, 1e-05
    %v2263 = vrsqrt.pop %v2259
    %v2264 = vrsqrt.pop %v2260
    %v2265 = vrsqrt.pop %v2261
    %v2266 = vrsqrt.pop %v2262
    %v2267 = vmul.f32 %v2239, %v2263
    %v2268 = vmul.f32 %v2240, %v2264
    %v2269 = vmul.f32 %v2241, %v2265
    %v2270 = vmul.f32 %v2242, %v2266
    %v2272 = vlaneseq
    %v2273 = vshrl.u32 %v2272, 7
    %v2274 = vsub.s32 0, %v2273
    %v2275 = vrot.slane %v2212, %v2274
    %v2277 = vmul.f32 %v2267, %v2275
    %v2278 = vmul.f32 %v2268, %v2275
    %v2279 = vmul.f32 %v2269, %v2275
    %v2280 = vmul.f32 %v2270, %v2275
    %v2282 = vlaneseq
    %v2283 = vshrl.u32 %v2282, 7
    %v2284 = vsub.s32 0, %v2283
    %v2285 = vrot.slane %v2214, %v2284
    %v2287 = vadd.f32 %v2277, %v2285
    %v2288 = vadd.f32 %v2278, %v2285
    %v2289 = vadd.f32 %v2279, %v2285
    %v2290 = vadd.f32 %v2280, %v2285
    %v2291 = vpack.c.bf16 %v2288, %v2287
    %v2292 = vpack.c.bf16 %v2290, %v2289
    %s2293 = scalar_lea.vmem [#allocation7], 192
    %v2294 = vld [vmem:[%s2293] sm:$0xff]
    %v2295 = vld [vmem:[%s2293 + $0x8] sm:$0xf]
    %v2296 = vld [vmem:[%s2293 + $0xc] sm:$0xff]
    %v2297 = vld [vmem:[%s2293 + $0x14] sm:$0xf]
    %v2298 = vld [vmem:[%s2293 + $0x18] sm:$0xff]
    %v2299 = vld [vmem:[%s2293 + $0x20] sm:$0xf]
    %v2300 = vld [vmem:[%s2293 + $0x24] sm:$0xff]
    %v2301 = vld [vmem:[%s2293 + $0x2c] sm:$0xf]
    %v2302 = vld [vmem:[%s2293 + $0x30] sm:$0xff]
    %v2303 = vld [vmem:[%s2293 + $0x38] sm:$0xf]
    %v2304 = vld [vmem:[%s2293 + $0x3c] sm:$0xff]
    %v2305 = vld [vmem:[%s2293 + $0x44] sm:$0xf]
    %v2306 = vld [vmem:[%s2293 + $0x48] sm:$0xff]
    %v2307 = vld [vmem:[%s2293 + $0x50] sm:$0xf]
    %v2308 = vld [vmem:[%s2293 + $0x54] sm:$0xff]
    %v2309 = vld [vmem:[%s2293 + $0x5c] sm:$0xf]
    %v2310 = vld [vmem:[%s2293 + $0x60] sm:$0xff]
    %v2311 = vld [vmem:[%s2293 + $0x68] sm:$0xf]
    %v2312 = vld [vmem:[%s2293 + $0x6c] sm:$0xff]
    %v2313 = vld [vmem:[%s2293 + $0x74] sm:$0xf]
    %v2314 = vld [vmem:[%s2293 + $0x78] sm:$0xff]
    %v2315 = vld [vmem:[%s2293 + $0x80] sm:$0xf]
    %v2316 = vld [vmem:[%s2293 + $0x84] sm:$0xff]
    %v2317 = vld [vmem:[%s2293 + $0x8c] sm:$0xf]
    %v2318 = vld [vmem:[%s2293 + $0x90] sm:$0xff]
    %v2319 = vld [vmem:[%s2293 + $0x98] sm:$0xf]
    %v2320 = vld [vmem:[%s2293 + $0x9c] sm:$0xff]
    %v2321 = vld [vmem:[%s2293 + $0xa4] sm:$0xf]
    %v2322 = vld [vmem:[%s2293 + $0xa8] sm:$0xff]
    %v2323 = vld [vmem:[%s2293 + $0xb0] sm:$0xf]
    %v2324 = vld [vmem:[%s2293 + $0xb4] sm:$0xff]
    %v2325 = vld [vmem:[%s2293 + $0xbc] sm:$0xf]
    %v2327 = vlaneseq
    %v2328 = vshrl.u32 %v2327, 7
    %v2329 = vsub.s32 0, %v2328
    %v2330 = vrot.slane %v2224, %v2329
    %v2331 = vlaneseq
    %v2332 = vshrl.u32 %v2331, 7
    %v2333 = vsub.s32 1, %v2332
    %v2334 = vrot.slane %v2224, %v2333
    %v2335 = vlaneseq
    %v2336 = vshrl.u32 %v2335, 7
    %v2337 = vsub.s32 2, %v2336
    %v2338 = vrot.slane %v2224, %v2337
    %v2374 = vunpack.c.l.b16 %v2294
    %v2375 = vunpack.c.h.b16 %v2294
    %v2376 = vunpack.c.l.b16 %v2295
    %v2377 = vunpack.c.l.b16 %v2296
    %v2378 = vunpack.c.h.b16 %v2296
    %v2379 = vunpack.c.l.b16 %v2297
    %v2380 = vunpack.c.l.b16 %v2298
    %v2381 = vunpack.c.h.b16 %v2298
    %v2382 = vunpack.c.l.b16 %v2299
    %v2383 = vunpack.c.l.b16 %v2300
    %v2384 = vunpack.c.h.b16 %v2300
    %v2385 = vunpack.c.l.b16 %v2301
    %v2386 = vunpack.c.l.b16 %v2302
    %v2387 = vunpack.c.h.b16 %v2302
    %v2388 = vunpack.c.l.b16 %v2303
    %v2389 = vunpack.c.l.b16 %v2304
    %v2390 = vunpack.c.h.b16 %v2304
    %v2391 = vunpack.c.l.b16 %v2305
    %v2392 = vunpack.c.l.b16 %v2306
    %v2393 = vunpack.c.h.b16 %v2306
    %v2394 = vunpack.c.l.b16 %v2307
    %v2395 = vunpack.c.l.b16 %v2308
    %v2396 = vunpack.c.h.b16 %v2308
    %v2397 = vunpack.c.l.b16 %v2309
    %v2398 = vunpack.c.l.b16 %v2310
    %v2399 = vunpack.c.h.b16 %v2310
    %v2400 = vunpack.c.l.b16 %v2311
    %v2401 = vunpack.c.l.b16 %v2312
    %v2402 = vunpack.c.h.b16 %v2312
    %v2403 = vunpack.c.l.b16 %v2313
    %v2404 = vunpack.c.l.b16 %v2314
    %v2405 = vunpack.c.h.b16 %v2314
    %v2406 = vunpack.c.l.b16 %v2315
    %v2407 = vunpack.c.l.b16 %v2316
    %v2408 = vunpack.c.h.b16 %v2316
    %v2409 = vunpack.c.l.b16 %v2317
    %v2410 = vunpack.c.l.b16 %v2318
    %v2411 = vunpack.c.h.b16 %v2318
    %v2412 = vunpack.c.l.b16 %v2319
    %v2413 = vunpack.c.l.b16 %v2320
    %v2414 = vunpack.c.h.b16 %v2320
    %v2415 = vunpack.c.l.b16 %v2321
    %v2416 = vunpack.c.l.b16 %v2322
    %v2417 = vunpack.c.h.b16 %v2322
    %v2418 = vunpack.c.l.b16 %v2323
    %v2419 = vunpack.c.l.b16 %v2324
    %v2420 = vunpack.c.h.b16 %v2324
    %v2421 = vunpack.c.l.b16 %v2325
    %v2422 = vpack.c.b16 %v2377, %v2374
    %v2423 = vpack.c.b16 %v2378, %v2375
    %v2424 = vpack.c.b16 %v2379, %v2376
    %v2425 = vpack.c.b16 %v2383, %v2380
    %v2426 = vpack.c.b16 %v2384, %v2381
    %v2427 = vpack.c.b16 %v2385, %v2382
    %v2428 = vpack.c.b16 %v2389, %v2386
    %v2429 = vpack.c.b16 %v2390, %v2387
    %v2430 = vpack.c.b16 %v2391, %v2388
    %v2431 = vpack.c.b16 %v2395, %v2392
    %v2432 = vpack.c.b16 %v2396, %v2393
    %v2433 = vpack.c.b16 %v2397, %v2394
    %v2434 = vpack.c.b16 %v2401, %v2398
    %v2435 = vpack.c.b16 %v2402, %v2399
    %v2436 = vpack.c.b16 %v2403, %v2400
    %v2437 = vpack.c.b16 %v2407, %v2404
    %v2438 = vpack.c.b16 %v2408, %v2405
    %v2439 = vpack.c.b16 %v2409, %v2406
    %v2440 = vpack.c.b16 %v2413, %v2410
    %v2441 = vpack.c.b16 %v2414, %v2411
    %v2442 = vpack.c.b16 %v2415, %v2412
    %v2443 = vpack.c.b16 %v2419, %v2416
    %v2444 = vpack.c.b16 %v2420, %v2417
    %v2445 = vpack.c.b16 %v2421, %v2418
    %2470 = vmatprep.subr.bf16.mxu0 %v2423
    %2471 = vmatpush1.bf16.msra.mxu0 %v2422
    %2472 = vmatprep.subr.bf16.mxu0 %v2426
    %2473 = vmatpush1.bf16.msra.mxu0 %v2425
    %2474 = vmatprep.subr.bf16.mxu0 %v2429
    %2475 = vmatpush1.bf16.msra.mxu0 %v2428
    %2476 = vmatprep.subr.bf16.mxu0 %v2432
    %2477 = vmatpush1.bf16.msra.mxu0 %v2431
    %2478 = vmatprep.subr.bf16.mxu0 %v2435
    %2479 = vmatpush1.bf16.msra.mxu0 %v2434
    %2480 = vmatprep.subr.bf16.mxu0 %v2438
    %2481 = vmatpush1.bf16.msra.mxu0 %v2437
    %2482 = vmatprep.subr.bf16.mxu0 %v2441
    %2483 = vmatpush1.bf16.msra.mxu0 %v2440
    %2484 = vmatprep.subr.bf16.mxu0 %v2444
    %2485 = vmatpush1.bf16.msra.mxu0 %v2443
    %2486 = vmatprep.subr.bf16.mxu0 0
    %2487 = vmatpush1.bf16.msra.mxu0 0
    %2488 = vmatprep.subr.bf16.mxu0 0
    %2489 = vmatpush1.bf16.msra.mxu0 0
    %2490 = vmatprep.subr.bf16.mxu0 0
    %2491 = vmatpush1.bf16.msra.mxu0 0
    %2492 = vmatprep.subr.bf16.mxu0 0
    %2493 = vmatpush1.bf16.msra.mxu0 0
    %2494 = vmatprep.subr.bf16.mxu0 0
    %2495 = vmatpush1.bf16.msra.mxu0 0
    %2496 = vmatprep.subr.bf16.mxu0 0
    %2497 = vmatpush1.bf16.msra.mxu0 0
    %2498 = vmatprep.subr.bf16.mxu0 0
    %2499 = vmatpush1.bf16.msra.mxu0 0
    %2500 = vmatprep.subr.bf16.mxu0 0
    %2501 = vmatpush1.bf16.msra.mxu0 0
    %2502 = vmatprep.mubr.bf16.mxu0 0
    %2503 = vmatmul.mubr.bf16.gmra.mrb[0].mxu0 %v2291
    %v2504 = vpop.f32.mrb[0].mxu0
    %v2505 = vadd.f32 %v2330, %v2504
    %v2506 = vpop.f32.mrb[0].mxu0
    %v2507 = vadd.f32 %v2334, %v2506
    %v2508 = vpop.f32.mrb[0].mxu0
    %v2509 = vadd.f32 %v2330, %v2508
    %v2510 = vpop.f32.mrb[0].mxu0
    %v2511 = vadd.f32 %v2334, %v2510
    %2512 = vmatprep.mubr.bf16.mxu0 0
    %2513 = vmatmul.mubr.bf16.gmra.mrb[0].mxu0 %v2292
    %v2514 = vpop.f32.mrb[0].mxu0
    %v2515 = vadd.f32 %v2330, %v2514
    %v2516 = vpop.f32.mrb[0].mxu0
    %v2517 = vadd.f32 %v2334, %v2516
    %v2518 = vpop.f32.mrb[0].mxu0
    %v2519 = vadd.f32 %v2330, %v2518
    %v2520 = vpop.f32.mrb[0].mxu0
    %v2521 = vadd.f32 %v2334, %v2520
    %2522 = vdwg.mxu0
    %2523 = vmatprep.subr.bf16.mxu0 0
    %2524 = vmatpush1.bf16.msra.mxu0 %v2424
    %2525 = vmatprep.subr.bf16.mxu0 0
    %2526 = vmatpush1.bf16.msra.mxu0 %v2427
    %2527 = vmatprep.subr.bf16.mxu0 0
    %2528 = vmatpush1.bf16.msra.mxu0 %v2430
    %2529 = vmatprep.subr.bf16.mxu0 0
    %2530 = vmatpush1.bf16.msra.mxu0 %v2433
    %2531 = vmatprep.subr.bf16.mxu0 0
    %2532 = vmatpush1.bf16.msra.mxu0 %v2436
    %2533 = vmatprep.subr.bf16.mxu0 0
    %2534 = vmatpush1.bf16.msra.mxu0 %v2439
    %2535 = vmatprep.subr.bf16.mxu0 0
    %2536 = vmatpush1.bf16.msra.mxu0 %v2442
    %2537 = vmatprep.subr.bf16.mxu0 0
    %2538 = vmatpush1.bf16.msra.mxu0 %v2445
    %2539 = vmatprep.subr.bf16.mxu0 0
    %2540 = vmatpush1.bf16.msra.mxu0 0
    %2541 = vmatprep.subr.bf16.mxu0 0
    %2542 = vmatpush1.bf16.msra.mxu0 0
    %2543 = vmatprep.subr.bf16.mxu0 0
    %2544 = vmatpush1.bf16.msra.mxu0 0
    %2545 = vmatprep.subr.bf16.mxu0 0
    %2546 = vmatpush1.bf16.msra.mxu0 0
    %2547 = vmatprep.subr.bf16.mxu0 0
    %2548 = vmatpush1.bf16.msra.mxu0 0
    %2549 = vmatprep.subr.bf16.mxu0 0
    %2550 = vmatpush1.bf16.msra.mxu0 0
    %2551 = vmatprep.subr.bf16.mxu0 0
    %2552 = vmatpush1.bf16.msra.mxu0 0
    %2553 = vmatprep.subr.bf16.mxu0 0
    %2554 = vmatpush1.bf16.msra.mxu0 0
    %2555 = vmatprep.mubr.bf16.mxu0 0
    %2556 = vmatmul.mubr.bf16.gmra.mrb[0].mxu0 %v2291
    %v2557 = vpop.f32.mrb[0].mxu0
    %v2558 = vadd.f32 %v2338, %v2557
    %v2559 = vpop.f32.mrb[0].mxu0
    %v2560 = vpop.f32.mrb[0].mxu0
    %v2561 = vadd.f32 %v2338, %v2560
    %v2562 = vpop.f32.mrb[0].mxu0
    %2563 = vmatprep.mubr.bf16.mxu0 0
    %2564 = vmatmul.mubr.bf16.gmra.mrb[0].mxu0 %v2292
    %v2565 = vpop.f32.mrb[0].mxu0
    %v2566 = vadd.f32 %v2338, %v2565
    %v2567 = vpop.f32.mrb[0].mxu0
    %v2568 = vpop.f32.mrb[0].mxu0
    %v2569 = vadd.f32 %v2338, %v2568
    %v2570 = vpop.f32.mrb[0].mxu0
    %2571 = vdwg.mxu0
    %v2572 = vmul.f32 %v2505, 0.17677669
    %v2573 = vmul.f32 %v2509, 0.17677669
    %v2574 = vmul.f32 %v2515, 0.17677669
    %v2575 = vmul.f32 %v2519, 0.17677669
    %2580 = vrot.lane.b32.xlu0 %v2572, 96
    %v2581 = vpop.permute.xlu0 %2580
    %2582 = vrot.lane.b32.xlu0 %v2573, 96
    %v2583 = vpop.permute.xlu0 %2582
    %2584 = vrot.lane.b32.xlu0 %v2574, 96
    %v2585 = vpop.permute.xlu0 %2584
    %2586 = vrot.lane.b32.xlu0 %v2575, 96
    %v2587 = vpop.permute.xlu0 %2586
    %2592 = vrot.lane.b32.xlu0 %v2572, 64
    %v2593 = vpop.permute.xlu0 %2592
    %2594 = vrot.lane.b32.xlu0 %v2573, 64
    %v2595 = vpop.permute.xlu0 %2594
    %2596 = vrot.lane.b32.xlu0 %v2574, 64
    %v2597 = vpop.permute.xlu0 %2596
    %2598 = vrot.lane.b32.xlu0 %v2575, 64
    %v2599 = vpop.permute.xlu0 %2598
    %2604 = vrot.lane.b32.xlu0 %v2572, 32
    %v2605 = vpop.permute.xlu0 %2604
    %2606 = vrot.lane.b32.xlu0 %v2573, 32
    %v2607 = vpop.permute.xlu0 %2606
    %2608 = vrot.lane.b32.xlu0 %v2574, 32
    %v2609 = vpop.permute.xlu0 %2608
    %2610 = vrot.lane.b32.xlu0 %v2575, 32
    %v2611 = vpop.permute.xlu0 %2610
    %2620 = vrot.lane.b32.xlu0 %v2507, 96
    %v2621 = vpop.permute.xlu0 %2620
    %2622 = vrot.lane.b32.xlu0 %v2511, 96
    %v2623 = vpop.permute.xlu0 %2622
    %2624 = vrot.lane.b32.xlu0 %v2517, 96
    %v2625 = vpop.permute.xlu0 %2624
    %2626 = vrot.lane.b32.xlu0 %v2521, 96
    %v2627 = vpop.permute.xlu0 %2626
    %2632 = vrot.lane.b32.xlu0 %v2507, 64
    %v2633 = vpop.permute.xlu0 %2632
    %2634 = vrot.lane.b32.xlu0 %v2511, 64
    %v2635 = vpop.permute.xlu0 %2634
    %2636 = vrot.lane.b32.xlu0 %v2517, 64
    %v2637 = vpop.permute.xlu0 %2636
    %2638 = vrot.lane.b32.xlu0 %v2521, 64
    %v2639 = vpop.permute.xlu0 %2638
    %2644 = vrot.lane.b32.xlu0 %v2507, 32
    %v2645 = vpop.permute.xlu0 %2644
    %2646 = vrot.lane.b32.xlu0 %v2511, 32
    %v2647 = vpop.permute.xlu0 %2646
    %2648 = vrot.lane.b32.xlu0 %v2517, 32
    %v2649 = vpop.permute.xlu0 %2648
    %2650 = vrot.lane.b32.xlu0 %v2521, 32
    %v2651 = vpop.permute.xlu0 %2650
    %2660 = vrot.lane.b32.xlu0 %v2558, 96
    %v2661 = vpop.permute.xlu0 %2660
    %2662 = vrot.lane.b32.xlu0 %v2561, 96
    %v2663 = vpop.permute.xlu0 %2662
    %2664 = vrot.lane.b32.xlu0 %v2566, 96
    %v2665 = vpop.permute.xlu0 %2664
    %2666 = vrot.lane.b32.xlu0 %v2569, 96
    %v2667 = vpop.permute.xlu0 %2666
    %2672 = vrot.lane.b32.xlu0 %v2558, 64
    %v2673 = vpop.permute.xlu0 %2672
    %2674 = vrot.lane.b32.xlu0 %v2561, 64
    %v2675 = vpop.permute.xlu0 %2674
    %2676 = vrot.lane.b32.xlu0 %v2566, 64
    %v2677 = vpop.permute.xlu0 %2676
    %2678 = vrot.lane.b32.xlu0 %v2569, 64
    %v2679 = vpop.permute.xlu0 %2678
    %2684 = vrot.lane.b32.xlu0 %v2558, 32
    %v2685 = vpop.permute.xlu0 %2684
    %2686 = vrot.lane.b32.xlu0 %v2561, 32
    %v2687 = vpop.permute.xlu0 %2686
    %2688 = vrot.lane.b32.xlu0 %v2566, 32
    %v2689 = vpop.permute.xlu0 %2688
    %2690 = vrot.lane.b32.xlu0 %v2569, 32
    %v2691 = vpop.permute.xlu0 %2690
    %v2696 = vpack.c.bf16 %v2573, %v2572
    %v2697 = vpack.c.bf16 %v2575, %v2574
    %v2698 = vpack.c.bf16 %v2583, %v2581
    %v2699 = vpack.c.bf16 %v2587, %v2585
    %v2700 = vpack.c.bf16 %v2595, %v2593
    %v2701 = vpack.c.bf16 %v2599, %v2597
    %v2702 = vpack.c.bf16 %v2607, %v2605
    %v2703 = vpack.c.bf16 %v2611, %v2609
    %v2704 = vpack.c.bf16 %v2511, %v2507
    %v2705 = vpack.c.bf16 %v2521, %v2517
    %v2706 = vpack.c.bf16 %v2623, %v2621
    %v2707 = vpack.c.bf16 %v2627, %v2625
    %v2708 = vpack.c.bf16 %v2635, %v2633
    %v2709 = vpack.c.bf16 %v2639, %v2637
    %v2710 = vpack.c.bf16 %v2647, %v2645
    %v2711 = vpack.c.bf16 %v2651, %v2649
    %v2713 = vsel %vm849, %v2696, 0
    %v2716 = vsel %vm849, %v2697, 0
    %v2719 = vsel %vm849, %v2698, 0
    %v2722 = vsel %vm849, %v2699, 0
    %v2725 = vsel %vm849, %v2700, 0
    %v2728 = vsel %vm849, %v2701, 0
    %v2731 = vsel %vm849, %v2702, 0
    %v2734 = vsel %vm849, %v2703, 0
    %v2737 = vsel %vm849, %v2704, 0
    %v2740 = vsel %vm849, %v2705, 0
    %v2743 = vsel %vm849, %v2706, 0
    %v2746 = vsel %vm849, %v2707, 0
    %v2749 = vsel %vm849, %v2708, 0
    %v2752 = vsel %vm849, %v2709, 0
    %v2755 = vsel %vm849, %v2710, 0
    %v2758 = vsel %vm849, %v2711, 0
    %2760 = vmatprep.subr.bf16.mxu0 0
    %2761 = vmatpush1.bf16.xpose.msra.mxu0 %v2737
    %2762 = vmatprep.subr.bf16.mxu0 0
    %2763 = vmatpush1.bf16.xpose.msra.mxu0 %v2740
    %2764 = vmatprep.subr.bf16.mxu0 0
    %2765 = vmatpush1.bf16.xpose.msra.mxu0 %v2743
    %2766 = vmatprep.subr.bf16.mxu0 0
    %2767 = vmatpush1.bf16.xpose.msra.mxu0 %v2746
    %2768 = vmatprep.subr.bf16.mxu0 0
    %2769 = vmatpush1.bf16.xpose.msra.mxu0 %v2749
    %2770 = vmatprep.subr.bf16.mxu0 0
    %2771 = vmatpush1.bf16.xpose.msra.mxu0 %v2752
    %2772 = vmatprep.subr.bf16.mxu0 0
    %2773 = vmatpush1.bf16.xpose.msra.mxu0 %v2755
    %2774 = vmatprep.subr.bf16.mxu0 0
    %2775 = vmatpush1.bf16.xpose.msra.mxu0 %v2758
    %2776 = vmatprep.subr.bf16.mxu0 0
    %2777 = vmatpush1.bf16.xpose.msra.mxu0 0
    %2778 = vmatprep.subr.bf16.mxu0 0
    %2779 = vmatpush1.bf16.xpose.msra.mxu0 0
    %2780 = vmatprep.subr.bf16.mxu0 0
    %2781 = vmatpush1.bf16.xpose.msra.mxu0 0
    %2782 = vmatprep.subr.bf16.mxu0 0
    %2783 = vmatpush1.bf16.xpose.msra.mxu0 0
    %2784 = vmatprep.subr.bf16.mxu0 0
    %2785 = vmatpush1.bf16.xpose.msra.mxu0 0
    %2786 = vmatprep.subr.bf16.mxu0 0
    %2787 = vmatpush1.bf16.xpose.msra.mxu0 0
    %2788 = vmatprep.subr.bf16.mxu0 0
    %2789 = vmatpush1.bf16.xpose.msra.mxu0 0
    %2790 = vmatprep.subr.bf16.mxu0 0
    %2791 = vmatpush1.bf16.xpose.msra.mxu0 0
    %2792 = vmatprep.mubr.bf16.mxu0 0
    %2793 = vmatmul.mubr.bf16.gmra.mrb[0].mxu0 %v2713
    %v2794 = vpop.f32.mrb[0].mxu0
    %v2795 = vadd.f32 %v333, %v2794
    %v2796 = vpop.f32.mrb[0].mxu0
    %v2797 = vpop.f32.mrb[0].mxu0
    %v2798 = vadd.f32 %v334, %v2797
    %v2799 = vpop.f32.mrb[0].mxu0
    %2800 = vmatprep.mubr.bf16.mxu0 0
    %2801 = vmatmul.mubr.bf16.gmra.mrb[0].mxu0 %v2716
    %v2802 = vpop.f32.mrb[0].mxu0
    %v2803 = vadd.f32 %v335, %v2802
    %v2804 = vpop.f32.mrb[0].mxu0
    %v2805 = vpop.f32.mrb[0].mxu0
    %v2806 = vadd.f32 %v336, %v2805
    %v2807 = vpop.f32.mrb[0].mxu0
    %2808 = vmatprep.mubr.bf16.mxu0 0
    %2809 = vmatmul.mubr.bf16.gmra.mrb[0].mxu0 %v2719
    %v2810 = vpop.f32.mrb[0].mxu0
    %v2811 = vadd.f32 %v337, %v2810
    %v2812 = vpop.f32.mrb[0].mxu0
    %v2813 = vpop.f32.mrb[0].mxu0
    %v2814 = vadd.f32 %v338, %v2813
    %v2815 = vpop.f32.mrb[0].mxu0
    %2816 = vmatprep.mubr.bf16.mxu0 0
    %2817 = vmatmul.mubr.bf16.gmra.mrb[0].mxu0 %v2722
    %v2818 = vpop.f32.mrb[0].mxu0
    %v2819 = vadd.f32 %v339, %v2818
    %v2820 = vpop.f32.mrb[0].mxu0
    %v2821 = vpop.f32.mrb[0].mxu0
    %v2822 = vadd.f32 %v340, %v2821
    %v2823 = vpop.f32.mrb[0].mxu0
    %2824 = vmatprep.mubr.bf16.mxu0 0
    %2825 = vmatmul.mubr.bf16.gmra.mrb[0].mxu0 %v2725
    %v2826 = vpop.f32.mrb[0].mxu0
    %v2827 = vadd.f32 %v341, %v2826
    %v2828 = vpop.f32.mrb[0].mxu0
    %v2829 = vpop.f32.mrb[0].mxu0
    %v2830 = vadd.f32 %v342, %v2829
    %v2831 = vpop.f32.mrb[0].mxu0
    %2832 = vmatprep.mubr.bf16.mxu0 0
    %2833 = vmatmul.mubr.bf16.gmra.mrb[0].mxu0 %v2728
    %v2834 = vpop.f32.mrb[0].mxu0
    %v2835 = vadd.f32 %v343, %v2834
    %v2836 = vpop.f32.mrb[0].mxu0
    %v2837 = vpop.f32.mrb[0].mxu0
    %v2838 = vadd.f32 %v344, %v2837
    %v2839 = vpop.f32.mrb[0].mxu0
    %2840 = vmatprep.mubr.bf16.mxu0 0
    %2841 = vmatmul.mubr.bf16.gmra.mrb[0].mxu0 %v2731
    %v2842 = vpop.f32.mrb[0].mxu0
    %v2843 = vadd.f32 %v345, %v2842
    %v2844 = vpop.f32.mrb[0].mxu0
    %v2845 = vpop.f32.mrb[0].mxu0
    %v2846 = vadd.f32 %v346, %v2845
    %v2847 = vpop.f32.mrb[0].mxu0
    %2848 = vmatprep.mubr.bf16.mxu0 0
    %2849 = vmatmul.mubr.bf16.gmra.mrb[0].mxu0 %v2734
    %v2850 = vpop.f32.mrb[0].mxu0
    %v2851 = vadd.f32 %v347, %v2850
    %v2852 = vpop.f32.mrb[0].mxu0
    %v2853 = vpop.f32.mrb[0].mxu0
    %v2854 = vadd.f32 %v348, %v2853
    %v2855 = vpop.f32.mrb[0].mxu0
    %2856 = vdwg.mxu0
    %2857 = vmax.xlane.f32.xlu0 %v2795
    %v2858 = vpop.xlane.xlu0 %2857
    %2859 = vmax.xlane.f32.xlu0 %v2798
    %v2860 = vpop.xlane.xlu0 %2859
    %2861 = vmax.xlane.f32.xlu0 %v2803
    %v2862 = vpop.xlane.xlu0 %2861
    %2863 = vmax.xlane.f32.xlu0 %v2806
    %v2864 = vpop.xlane.xlu0 %2863
    %2865 = vmax.xlane.f32.xlu0 %v2811
    %v2866 = vpop.xlane.xlu0 %2865
    %2867 = vmax.xlane.f32.xlu0 %v2814
    %v2868 = vpop.xlane.xlu0 %2867
    %2869 = vmax.xlane.f32.xlu0 %v2819
    %v2870 = vpop.xlane.xlu0 %2869
    %2871 = vmax.xlane.f32.xlu0 %v2822
    %v2872 = vpop.xlane.xlu0 %2871
    %2873 = vmax.xlane.f32.xlu0 %v2827
    %v2874 = vpop.xlane.xlu0 %2873
    %2875 = vmax.xlane.f32.xlu0 %v2830
    %v2876 = vpop.xlane.xlu0 %2875
    %2877 = vmax.xlane.f32.xlu0 %v2835
    %v2878 = vpop.xlane.xlu0 %2877
    %2879 = vmax.xlane.f32.xlu0 %v2838
    %v2880 = vpop.xlane.xlu0 %2879
    %2881 = vmax.xlane.f32.xlu0 %v2843
    %v2882 = vpop.xlane.xlu0 %2881
    %2883 = vmax.xlane.f32.xlu0 %v2846
    %v2884 = vpop.xlane.xlu0 %2883
    %2885 = vmax.xlane.f32.xlu0 %v2851
    %v2886 = vpop.xlane.xlu0 %2885
    %2887 = vmax.xlane.f32.xlu0 %v2854
    %v2888 = vpop.xlane.xlu0 %2887
    %v2889 = vsub.f32 %v2795, %v2858
    %v2890 = vsub.f32 %v2798, %v2860
    %v2891 = vsub.f32 %v2803, %v2862
    %v2892 = vsub.f32 %v2806, %v2864
    %v2893 = vsub.f32 %v2811, %v2866
    %v2894 = vsub.f32 %v2814, %v2868
    %v2895 = vsub.f32 %v2819, %v2870
    %v2896 = vsub.f32 %v2822, %v2872
    %v2897 = vsub.f32 %v2827, %v2874
    %v2898 = vsub.f32 %v2830, %v2876
    %v2899 = vsub.f32 %v2835, %v2878
    %v2900 = vsub.f32 %v2838, %v2880
    %v2901 = vsub.f32 %v2843, %v2882
    %v2902 = vsub.f32 %v2846, %v2884
    %v2903 = vsub.f32 %v2851, %v2886
    %v2904 = vsub.f32 %v2854, %v2888
    %v2905 = vmul.f32 %v2889, 1.442695
    %v2906 = vpow.pop %v2905
    %v2907 = vmul.f32 %v2890, 1.442695
    %v2908 = vpow.pop %v2907
    %v2909 = vmul.f32 %v2891, 1.442695
    %v2910 = vpow.pop %v2909
    %v2911 = vmul.f32 %v2892, 1.442695
    %v2912 = vpow.pop %v2911
    %v2913 = vmul.f32 %v2893, 1.442695
    %v2914 = vpow.pop %v2913
    %v2915 = vmul.f32 %v2894, 1.442695
    %v2916 = vpow.pop %v2915
    %v2917 = vmul.f32 %v2895, 1.442695
    %v2918 = vpow.pop %v2917
    %v2919 = vmul.f32 %v2896, 1.442695
    %v2920 = vpow.pop %v2919
    %v2921 = vmul.f32 %v2897, 1.442695
    %v2922 = vpow.pop %v2921
    %v2923 = vmul.f32 %v2898, 1.442695
    %v2924 = vpow.pop %v2923
    %v2925 = vmul.f32 %v2899, 1.442695
    %v2926 = vpow.pop %v2925
    %v2927 = vmul.f32 %v2900, 1.442695
    %v2928 = vpow.pop %v2927
    %v2929 = vmul.f32 %v2901, 1.442695
    %v2930 = vpow.pop %v2929
    %v2931 = vmul.f32 %v2902, 1.442695
    %v2932 = vpow.pop %v2931
    %v2933 = vmul.f32 %v2903, 1.442695
    %v2934 = vpow.pop %v2933
    %v2935 = vmul.f32 %v2904, 1.442695
    %v2936 = vpow.pop %v2935
    %2937 = vadd.xlane.f32.xlu0 %v2906
    %v2938 = vpop.xlane.xlu0 %2937
    %2939 = vadd.xlane.f32.xlu0 %v2908
    %v2940 = vpop.xlane.xlu0 %2939
    %2941 = vadd.xlane.f32.xlu0 %v2910
    %v2942 = vpop.xlane.xlu0 %2941
    %2943 = vadd.xlane.f32.xlu0 %v2912
    %v2944 = vpop.xlane.xlu0 %2943
    %2945 = vadd.xlane.f32.xlu0 %v2914
    %v2946 = vpop.xlane.xlu0 %2945
    %2947 = vadd.xlane.f32.xlu0 %v2916
    %v2948 = vpop.xlane.xlu0 %2947
    %2949 = vadd.xlane.f32.xlu0 %v2918
    %v2950 = vpop.xlane.xlu0 %2949
    %2951 = vadd.xlane.f32.xlu0 %v2920
    %v2952 = vpop.xlane.xlu0 %2951
    %2953 = vadd.xlane.f32.xlu0 %v2922
    %v2954 = vpop.xlane.xlu0 %2953
    %2955 = vadd.xlane.f32.xlu0 %v2924
    %v2956 = vpop.xlane.xlu0 %2955
    %2957 = vadd.xlane.f32.xlu0 %v2926
    %v2958 = vpop.xlane.xlu0 %2957
    %2959 = vadd.xlane.f32.xlu0 %v2928
    %v2960 = vpop.xlane.xlu0 %2959
    %2961 = vadd.xlane.f32.xlu0 %v2930
    %v2962 = vpop.xlane.xlu0 %2961
    %2963 = vadd.xlane.f32.xlu0 %v2932
    %v2964 = vpop.xlane.xlu0 %2963
    %2965 = vadd.xlane.f32.xlu0 %v2934
    %v2966 = vpop.xlane.xlu0 %2965
    %2967 = vadd.xlane.f32.xlu0 %v2936
    %v2968 = vpop.xlane.xlu0 %2967
    %v2969 = vrcp.pop %v2938
    %v2970 = vrcp.pop %v2940
    %v2971 = vrcp.pop %v2942
    %v2972 = vrcp.pop %v2944
    %v2973 = vrcp.pop %v2946
    %v2974 = vrcp.pop %v2948
    %v2975 = vrcp.pop %v2950
    %v2976 = vrcp.pop %v2952
    %v2977 = vrcp.pop %v2954
    %v2978 = vrcp.pop %v2956
    %v2979 = vrcp.pop %v2958
    %v2980 = vrcp.pop %v2960
    %v2981 = vrcp.pop %v2962
    %v2982 = vrcp.pop %v2964
    %v2983 = vrcp.pop %v2966
    %v2984 = vrcp.pop %v2968
    %v2985 = vmul.f32 %v2906, %v2969
    %v2986 = vmul.f32 %v2908, %v2970
    %v2987 = vmul.f32 %v2910, %v2971
    %v2988 = vmul.f32 %v2912, %v2972
    %v2989 = vmul.f32 %v2914, %v2973
    %v2990 = vmul.f32 %v2916, %v2974
    %v2991 = vmul.f32 %v2918, %v2975
    %v2992 = vmul.f32 %v2920, %v2976
    %v2993 = vmul.f32 %v2922, %v2977
    %v2994 = vmul.f32 %v2924, %v2978
    %v2995 = vmul.f32 %v2926, %v2979
    %v2996 = vmul.f32 %v2928, %v2980
    %v2997 = vmul.f32 %v2930, %v2981
    %v2998 = vmul.f32 %v2932, %v2982
    %v2999 = vmul.f32 %v2934, %v2983
    %v3000 = vmul.f32 %v2936, %v2984
    %v3001 = vpack.c.bf16 %v2986, %v2985
    %v3002 = vpack.c.bf16 %v2988, %v2987
    %v3003 = vpack.c.bf16 %v2990, %v2989
    %v3004 = vpack.c.bf16 %v2992, %v2991
    %v3005 = vpack.c.bf16 %v2994, %v2993
    %v3006 = vpack.c.bf16 %v2996, %v2995
    %v3007 = vpack.c.bf16 %v2998, %v2997
    %v3008 = vpack.c.bf16 %v3000, %v2999
    %v3009 = vpack.c.bf16 %v2561, %v2558
    %v3010 = vpack.c.bf16 %v2569, %v2566
    %v3011 = vpack.c.bf16 %v2663, %v2661
    %v3012 = vpack.c.bf16 %v2667, %v2665
    %v3013 = vpack.c.bf16 %v2675, %v2673
    %v3014 = vpack.c.bf16 %v2679, %v2677
    %v3015 = vpack.c.bf16 %v2687, %v2685
    %v3016 = vpack.c.bf16 %v2691, %v2689
    %3017 = vmatprep.subr.bf16.mxu0 0
    %3018 = vmatpush1.bf16.msra.mxu0 %v3009
    %3019 = vmatprep.subr.bf16.mxu0 0
    %3020 = vmatpush1.bf16.msra.mxu0 %v3010
    %3021 = vmatprep.subr.bf16.mxu0 0
    %3022 = vmatpush1.bf16.msra.mxu0 %v3011
    %3023 = vmatprep.subr.bf16.mxu0 0
    %3024 = vmatpush1.bf16.msra.mxu0 %v3012
    %3025 = vmatprep.subr.bf16.mxu0 0
    %3026 = vmatpush1.bf16.msra.mxu0 %v3013
    %3027 = vmatprep.subr.bf16.mxu0 0
    %3028 = vmatpush1.bf16.msra.mxu0 %v3014
    %3029 = vmatprep.subr.bf16.mxu0 0
    %3030 = vmatpush1.bf16.msra.mxu0 %v3015
    %3031 = vmatprep.subr.bf16.mxu0 0
    %3032 = vmatpush1.bf16.msra.mxu0 %v3016
    %3033 = vmatprep.subr.bf16.mxu0 0
    %3034 = vmatpush1.bf16.msra.mxu0 0
    %3035 = vmatprep.subr.bf16.mxu0 0
    %3036 = vmatpush1.bf16.msra.mxu0 0
    %3037 = vmatprep.subr.bf16.mxu0 0
    %3038 = vmatpush1.bf16.msra.mxu0 0
    %3039 = vmatprep.subr.bf16.mxu0 0
    %3040 = vmatpush1.bf16.msra.mxu0 0
    %3041 = vmatprep.subr.bf16.mxu0 0
    %3042 = vmatpush1.bf16.msra.mxu0 0
    %3043 = vmatprep.subr.bf16.mxu0 0
    %3044 = vmatpush1.bf16.msra.mxu0 0
    %3045 = vmatprep.subr.bf16.mxu0 0
    %3046 = vmatpush1.bf16.msra.mxu0 0
    %3047 = vmatprep.subr.bf16.mxu0 0
    %3048 = vmatpush1.bf16.msra.mxu0 0
    %3049 = vmatprep.mubr.bf16.mxu0 0
    %3050 = vmatmul.mubr.bf16.gmra.mrb[0].mxu0 %v3001
    %v3051 = vpop.f32.mrb[0].mxu0
    %v3052 = vadd.f32 0.0, %v3051
    %v3053 = vpop.f32.mrb[0].mxu0
    %v3054 = vpop.f32.mrb[0].mxu0
    %v3055 = vadd.f32 0.0, %v3054
    %v3056 = vpop.f32.mrb[0].mxu0
    %3057 = vmatprep.mubr.bf16.mxu0 0
    %3058 = vmatmul.mubr.bf16.gmra.mrb[0].mxu0 %v3002
    %v3059 = vpop.f32.mrb[0].mxu0
    %v3060 = vadd.f32 0.0, %v3059
    %v3061 = vpop.f32.mrb[0].mxu0
    %v3062 = vpop.f32.mrb[0].mxu0
    %v3063 = vadd.f32 0.0, %v3062
    %v3064 = vpop.f32.mrb[0].mxu0
    %3065 = vmatprep.mubr.bf16.mxu0 0
    %3066 = vmatmul.mubr.bf16.gmra.mrb[0].mxu0 %v3003
    %v3067 = vpop.f32.mrb[0].mxu0
    %v3068 = vadd.f32 0.0, %v3067
    %v3069 = vpop.f32.mrb[0].mxu0
    %v3070 = vpop.f32.mrb[0].mxu0
    %v3071 = vadd.f32 0.0, %v3070
    %v3072 = vpop.f32.mrb[0].mxu0
    %3073 = vmatprep.mubr.bf16.mxu0 0
    %3074 = vmatmul.mubr.bf16.gmra.mrb[0].mxu0 %v3004
    %v3075 = vpop.f32.mrb[0].mxu0
    %v3076 = vadd.f32 0.0, %v3075
    %v3077 = vpop.f32.mrb[0].mxu0
    %v3078 = vpop.f32.mrb[0].mxu0
    %v3079 = vadd.f32 0.0, %v3078
    %v3080 = vpop.f32.mrb[0].mxu0
    %3081 = vmatprep.mubr.bf16.mxu0 0
    %3082 = vmatmul.mubr.bf16.gmra.mrb[0].mxu0 %v3005
    %v3083 = vpop.f32.mrb[0].mxu0
    %v3084 = vadd.f32 0.0, %v3083
    %v3085 = vpop.f32.mrb[0].mxu0
    %v3086 = vpop.f32.mrb[0].mxu0
    %v3087 = vadd.f32 0.0, %v3086
    %v3088 = vpop.f32.mrb[0].mxu0
    %3089 = vmatprep.mubr.bf16.mxu0 0
    %3090 = vmatmul.mubr.bf16.gmra.mrb[0].mxu0 %v3006
    %v3091 = vpop.f32.mrb[0].mxu0
    %v3092 = vadd.f32 0.0, %v3091
    %v3093 = vpop.f32.mrb[0].mxu0
    %v3094 = vpop.f32.mrb[0].mxu0
    %v3095 = vadd.f32 0.0, %v3094
    %v3096 = vpop.f32.mrb[0].mxu0
    %3097 = vmatprep.mubr.bf16.mxu0 0
    %3098 = vmatmul.mubr.bf16.gmra.mrb[0].mxu0 %v3007
    %v3099 = vpop.f32.mrb[0].mxu0
    %v3100 = vadd.f32 0.0, %v3099
    %v3101 = vpop.f32.mrb[0].mxu0
    %v3102 = vpop.f32.mrb[0].mxu0
    %v3103 = vadd.f32 0.0, %v3102
    %v3104 = vpop.f32.mrb[0].mxu0
    %3105 = vmatprep.mubr.bf16.mxu0 0
    %3106 = vmatmul.mubr.bf16.gmra.mrb[0].mxu0 %v3008
    %v3107 = vpop.f32.mrb[0].mxu0
    %v3108 = vadd.f32 0.0, %v3107
    %v3109 = vpop.f32.mrb[0].mxu0
    %v3110 = vpop.f32.mrb[0].mxu0
    %v3111 = vadd.f32 0.0, %v3110
    %v3112 = vpop.f32.mrb[0].mxu0
    %3113 = vdwg.mxu0
    %3118 = vrot.lane.b32.xlu0 %v3068, 32
    %v3119 = vpop.permute.xlu0 %3118
    %3120 = vrot.lane.b32.xlu0 %v3071, 32
    %v3121 = vpop.permute.xlu0 %3120
    %3122 = vrot.lane.b32.xlu0 %v3076, 32
    %v3123 = vpop.permute.xlu0 %3122
    %3124 = vrot.lane.b32.xlu0 %v3079, 32
    %v3125 = vpop.permute.xlu0 %3124
    %3134 = vrot.lane.b32.xlu0 %v3084, 64
    %v3135 = vpop.permute.xlu0 %3134
    %3136 = vrot.lane.b32.xlu0 %v3087, 64
    %v3137 = vpop.permute.xlu0 %3136
    %3138 = vrot.lane.b32.xlu0 %v3092, 64
    %v3139 = vpop.permute.xlu0 %3138
    %3140 = vrot.lane.b32.xlu0 %v3095, 64
    %v3141 = vpop.permute.xlu0 %3140
    %3150 = vrot.lane.b32.xlu0 %v3100, 96
    %v3151 = vpop.permute.xlu0 %3150
    %3152 = vrot.lane.b32.xlu0 %v3103, 96
    %v3153 = vpop.permute.xlu0 %3152
    %3154 = vrot.lane.b32.xlu0 %v3108, 96
    %v3155 = vpop.permute.xlu0 %3154
    %3156 = vrot.lane.b32.xlu0 %v3111, 96
    %v3157 = vpop.permute.xlu0 %3156
    %v3162 = vsel %vm849, %v3052, %v3119
    %v3163 = vsel %vm849, %v3055, %v3121
    %v3164 = vsel %vm849, %v3060, %v3123
    %v3165 = vsel %vm849, %v3063, %v3125
    %v3166 = vsel %vm178, %v3162, %v3135
    %v3167 = vsel %vm178, %v3163, %v3137
    %v3168 = vsel %vm178, %v3164, %v3139
    %v3169 = vsel %vm178, %v3165, %v3141
    %v3170 = vsel %vm1308, %v3166, %v3151
    %v3171 = vsel %vm1308, %v3167, %v3153
    %v3172 = vsel %vm1308, %v3168, %v3155
    %v3173 = vsel %vm1308, %v3169, %v3157
    %v3174 = vpack.c.bf16 %v3171, %v3170
    %v3175 = vpack.c.bf16 %v3173, %v3172
    %s3176 = scalar_lea.vmem [#allocation8], 64
    %v3177 = vld [vmem:[%s3176] sm:$0xf]
    %v3178 = vld [vmem:[%s3176 + $0x4] sm:$0xf]
    %v3179 = vld [vmem:[%s3176 + $0x8] sm:$0xf]
    %v3180 = vld [vmem:[%s3176 + $0xc] sm:$0xf]
    %v3181 = vld [vmem:[%s3176 + $0x10] sm:$0xf]
    %v3182 = vld [vmem:[%s3176 + $0x14] sm:$0xf]
    %v3183 = vld [vmem:[%s3176 + $0x18] sm:$0xf]
    %v3184 = vld [vmem:[%s3176 + $0x1c] sm:$0xf]
    %v3185 = vld [vmem:[%s3176 + $0x20] sm:$0xf]
    %v3186 = vld [vmem:[%s3176 + $0x24] sm:$0xf]
    %v3187 = vld [vmem:[%s3176 + $0x28] sm:$0xf]
    %v3188 = vld [vmem:[%s3176 + $0x2c] sm:$0xf]
    %v3189 = vld [vmem:[%s3176 + $0x30] sm:$0xf]
    %v3190 = vld [vmem:[%s3176 + $0x34] sm:$0xf]
    %v3191 = vld [vmem:[%s3176 + $0x38] sm:$0xf]
    %v3192 = vld [vmem:[%s3176 + $0x3c] sm:$0xf]
    %v3194 = vlaneseq
    %v3195 = vshrl.u32 %v3194, 7
    %v3196 = vsub.s32 0, %v3195
    %v3197 = vrot.slane %v2220, %v3196
    %v3215 = vunpack.c.l.b16 %v3177
    %v3216 = vunpack.c.l.b16 %v3178
    %v3217 = vunpack.c.l.b16 %v3179
    %v3218 = vunpack.c.l.b16 %v3180
    %v3219 = vunpack.c.l.b16 %v3181
    %v3220 = vunpack.c.l.b16 %v3182
    %v3221 = vunpack.c.l.b16 %v3183
    %v3222 = vunpack.c.l.b16 %v3184
    %v3223 = vunpack.c.l.b16 %v3185
    %v3224 = vunpack.c.l.b16 %v3186
    %v3225 = vunpack.c.l.b16 %v3187
    %v3226 = vunpack.c.l.b16 %v3188
    %v3227 = vunpack.c.l.b16 %v3189
    %v3228 = vunpack.c.l.b16 %v3190
    %v3229 = vunpack.c.l.b16 %v3191
    %v3230 = vunpack.c.l.b16 %v3192
    %v3231 = vpack.c.b16 %v3216, %v3215
    %v3232 = vpack.c.b16 %v3218, %v3217
    %v3233 = vpack.c.b16 %v3220, %v3219
    %v3234 = vpack.c.b16 %v3222, %v3221
    %v3235 = vpack.c.b16 %v3224, %v3223
    %v3236 = vpack.c.b16 %v3226, %v3225
    %v3237 = vpack.c.b16 %v3228, %v3227
    %v3238 = vpack.c.b16 %v3230, %v3229
    %3247 = vmatprep.subr.bf16.mxu0 0
    %3248 = vmatpush1.bf16.msra.mxu0 %v3231
    %3249 = vmatprep.subr.bf16.mxu0 0
    %3250 = vmatpush1.bf16.msra.mxu0 %v3232
    %3251 = vmatprep.subr.bf16.mxu0 0
    %3252 = vmatpush1.bf16.msra.mxu0 %v3233
    %3253 = vmatprep.subr.bf16.mxu0 0
    %3254 = vmatpush1.bf16.msra.mxu0 %v3234
    %3255 = vmatprep.subr.bf16.mxu0 0
    %3256 = vmatpush1.bf16.msra.mxu0 %v3235
    %3257 = vmatprep.subr.bf16.mxu0 0
    %3258 = vmatpush1.bf16.msra.mxu0 %v3236
    %3259 = vmatprep.subr.bf16.mxu0 0
    %3260 = vmatpush1.bf16.msra.mxu0 %v3237
    %3261 = vmatprep.subr.bf16.mxu0 0
    %3262 = vmatpush1.bf16.msra.mxu0 %v3238
    %3263 = vmatprep.subr.bf16.mxu0 0
    %3264 = vmatpush1.bf16.msra.mxu0 0
    %3265 = vmatprep.subr.bf16.mxu0 0
    %3266 = vmatpush1.bf16.msra.mxu0 0
    %3267 = vmatprep.subr.bf16.mxu0 0
    %3268 = vmatpush1.bf16.msra.mxu0 0
    %3269 = vmatprep.subr.bf16.mxu0 0
    %3270 = vmatpush1.bf16.msra.mxu0 0
    %3271 = vmatprep.subr.bf16.mxu0 0
    %3272 = vmatpush1.bf16.msra.mxu0 0
    %3273 = vmatprep.subr.bf16.mxu0 0
    %3274 = vmatpush1.bf16.msra.mxu0 0
    %3275 = vmatprep.subr.bf16.mxu0 0
    %3276 = vmatpush1.bf16.msra.mxu0 0
    %3277 = vmatprep.subr.bf16.mxu0 0
    %3278 = vmatpush1.bf16.msra.mxu0 0
    %3279 = vmatprep.mubr.bf16.mxu0 0
    %3280 = vmatmul.mubr.bf16.gmra.mrb[0].mxu0 %v3174
    %v3281 = vpop.f32.mrb[0].mxu0
    %v3282 = vadd.f32 %v3197, %v3281
    %v3283 = vpop.f32.mrb[0].mxu0
    %v3284 = vpop.f32.mrb[0].mxu0
    %v3285 = vadd.f32 %v3197, %v3284
    %v3286 = vpop.f32.mrb[0].mxu0
    %3287 = vmatprep.mubr.bf16.mxu0 0
    %3288 = vmatmul.mubr.bf16.gmra.mrb[0].mxu0 %v3175
    %v3289 = vpop.f32.mrb[0].mxu0
    %v3290 = vadd.f32 %v3197, %v3289
    %v3291 = vpop.f32.mrb[0].mxu0
    %v3292 = vpop.f32.mrb[0].mxu0
    %v3293 = vadd.f32 %v3197, %v3292
    %v3294 = vpop.f32.mrb[0].mxu0
    %3295 = vdwg.mxu0
    %v3296 = vadd.f32 %v2207, %v3282
    %v3297 = vadd.f32 %v2208, %v3285
    %v3298 = vadd.f32 %v2209, %v3290
    %v3299 = vadd.f32 %v2210, %v3293
    %3300 = vadd.xlane.f32.xlu0 %v3296
    %v3301 = vpop.xlane.xlu0 %3300
    %3302 = vadd.xlane.f32.xlu0 %v3297
    %v3303 = vpop.xlane.xlu0 %3302
    %3304 = vadd.xlane.f32.xlu0 %v3298
    %v3305 = vpop.xlane.xlu0 %3304
    %3306 = vadd.xlane.f32.xlu0 %v3299
    %v3307 = vpop.xlane.xlu0 %3306
    %v3308 = vmul.f32 %v3301, %v372
    %v3309 = vmul.f32 %v3303, %v372
    %v3310 = vmul.f32 %v3305, %v372
    %v3311 = vmul.f32 %v3307, %v372
    %v3312 = vsub.f32 %v3296, %v3308
    %v3313 = vsub.f32 %v3297, %v3309
    %v3314 = vsub.f32 %v3298, %v3310
    %v3315 = vsub.f32 %v3299, %v3311
    %v3316 = vmul.f32 %v3312, %v3312
    %v3317 = vmul.f32 %v3313, %v3313
    %v3318 = vmul.f32 %v3314, %v3314
    %v3319 = vmul.f32 %v3315, %v3315
    %3320 = vadd.xlane.f32.xlu0 %v3316
    %v3321 = vpop.xlane.xlu0 %3320
    %3322 = vadd.xlane.f32.xlu0 %v3317
    %v3323 = vpop.xlane.xlu0 %3322
    %3324 = vadd.xlane.f32.xlu0 %v3318
    %v3325 = vpop.xlane.xlu0 %3324
    %3326 = vadd.xlane.f32.xlu0 %v3319
    %v3327 = vpop.xlane.xlu0 %3326
    %v3328 = vmul.f32 %v3321, %v372
    %v3329 = vmul.f32 %v3323, %v372
    %v3330 = vmul.f32 %v3325, %v372
    %v3331 = vmul.f32 %v3327, %v372
    %v3332 = vadd.f32 %v3328, 1e-05
    %v3333 = vadd.f32 %v3329, 1e-05
    %v3334 = vadd.f32 %v3330, 1e-05
    %v3335 = vadd.f32 %v3331, 1e-05
    %v3336 = vrsqrt.pop %v3332
    %v3337 = vrsqrt.pop %v3333
    %v3338 = vrsqrt.pop %v3334
    %v3339 = vrsqrt.pop %v3335
    %v3340 = vmul.f32 %v3312, %v3336
    %v3341 = vmul.f32 %v3313, %v3337
    %v3342 = vmul.f32 %v3314, %v3338
    %v3343 = vmul.f32 %v3315, %v3339
    %v3345 = vlaneseq
    %v3346 = vshrl.u32 %v3345, 7
    %v3347 = vsub.s32 0, %v3346
    %v3348 = vrot.slane %v2216, %v3347
    %v3350 = vmul.f32 %v3340, %v3348
    %v3351 = vmul.f32 %v3341, %v3348
    %v3352 = vmul.f32 %v3342, %v3348
    %v3353 = vmul.f32 %v3343, %v3348
    %v3355 = vlaneseq
    %v3356 = vshrl.u32 %v3355, 7
    %v3357 = vsub.s32 0, %v3356
    %v3358 = vrot.slane %v2218, %v3357
    %v3360 = vadd.f32 %v3350, %v3358
    %v3361 = vadd.f32 %v3351, %v3358
    %v3362 = vadd.f32 %v3352, %v3358
    %v3363 = vadd.f32 %v3353, %v3358
    %v3364 = vpack.c.bf16 %v3361, %v3360
    %v3365 = vpack.c.bf16 %v3363, %v3362
    %s3366 = scalar_lea.vmem [#allocation10], 256
    %v3367 = vld [vmem:[%s3366] sm:$0xff]
    %v3368 = vld [vmem:[%s3366 + $0x8] sm:$0xff]
    %v3369 = vld [vmem:[%s3366 + $0x10] sm:$0xff]
    %v3370 = vld [vmem:[%s3366 + $0x18] sm:$0xff]
    %v3371 = vld [vmem:[%s3366 + $0x20] sm:$0xff]
    %v3372 = vld [vmem:[%s3366 + $0x28] sm:$0xff]
    %v3373 = vld [vmem:[%s3366 + $0x30] sm:$0xff]
    %v3374 = vld [vmem:[%s3366 + $0x38] sm:$0xff]
    %v3375 = vld [vmem:[%s3366 + $0x40] sm:$0xff]
    %v3376 = vld [vmem:[%s3366 + $0x48] sm:$0xff]
    %v3377 = vld [vmem:[%s3366 + $0x50] sm:$0xff]
    %v3378 = vld [vmem:[%s3366 + $0x58] sm:$0xff]
    %v3379 = vld [vmem:[%s3366 + $0x60] sm:$0xff]
    %v3380 = vld [vmem:[%s3366 + $0x68] sm:$0xff]
    %v3381 = vld [vmem:[%s3366 + $0x70] sm:$0xff]
    %v3382 = vld [vmem:[%s3366 + $0x78] sm:$0xff]
    %v3383 = vld [vmem:[%s3366 + $0x80] sm:$0xff]
    %v3384 = vld [vmem:[%s3366 + $0x88] sm:$0xff]
    %v3385 = vld [vmem:[%s3366 + $0x90] sm:$0xff]
    %v3386 = vld [vmem:[%s3366 + $0x98] sm:$0xff]
    %v3387 = vld [vmem:[%s3366 + $0xa0] sm:$0xff]
    %v3388 = vld [vmem:[%s3366 + $0xa8] sm:$0xff]
    %v3389 = vld [vmem:[%s3366 + $0xb0] sm:$0xff]
    %v3390 = vld [vmem:[%s3366 + $0xb8] sm:$0xff]
    %v3391 = vld [vmem:[%s3366 + $0xc0] sm:$0xff]
    %v3392 = vld [vmem:[%s3366 + $0xc8] sm:$0xff]
    %v3393 = vld [vmem:[%s3366 + $0xd0] sm:$0xff]
    %v3394 = vld [vmem:[%s3366 + $0xd8] sm:$0xff]
    %v3395 = vld [vmem:[%s3366 + $0xe0] sm:$0xff]
    %v3396 = vld [vmem:[%s3366 + $0xe8] sm:$0xff]
    %v3397 = vld [vmem:[%s3366 + $0xf0] sm:$0xff]
    %v3398 = vld [vmem:[%s3366 + $0xf8] sm:$0xff]
    %v3400 = vlaneseq
    %v3401 = vshrl.u32 %v3400, 7
    %v3402 = vsub.s32 0, %v3401
    %v3403 = vrot.slane %v2226, %v3402
    %v3404 = vlaneseq
    %v3405 = vshrl.u32 %v3404, 7
    %v3406 = vsub.s32 1, %v3405
    %v3407 = vrot.slane %v2226, %v3406
    %v3408 = vlaneseq
    %v3409 = vshrl.u32 %v3408, 7
    %v3410 = vsub.s32 2, %v3409
    %v3411 = vrot.slane %v2226, %v3410
    %v3412 = vlaneseq
    %v3413 = vshrl.u32 %v3412, 7
    %v3414 = vsub.s32 3, %v3413
    %v3415 = vrot.slane %v2226, %v3414
    %v3452 = vunpack.c.l.b16 %v3367
    %v3453 = vunpack.c.h.b16 %v3367
    %v3454 = vunpack.c.l.b16 %v3368
    %v3455 = vunpack.c.h.b16 %v3368
    %v3456 = vunpack.c.l.b16 %v3369
    %v3457 = vunpack.c.h.b16 %v3369
    %v3458 = vunpack.c.l.b16 %v3370
    %v3459 = vunpack.c.h.b16 %v3370
    %v3460 = vunpack.c.l.b16 %v3371
    %v3461 = vunpack.c.h.b16 %v3371
    %v3462 = vunpack.c.l.b16 %v3372
    %v3463 = vunpack.c.h.b16 %v3372
    %v3464 = vunpack.c.l.b16 %v3373
    %v3465 = vunpack.c.h.b16 %v3373
    %v3466 = vunpack.c.l.b16 %v3374
    %v3467 = vunpack.c.h.b16 %v3374
    %v3468 = vunpack.c.l.b16 %v3375
    %v3469 = vunpack.c.h.b16 %v3375
    %v3470 = vunpack.c.l.b16 %v3376
    %v3471 = vunpack.c.h.b16 %v3376
    %v3472 = vunpack.c.l.b16 %v3377
    %v3473 = vunpack.c.h.b16 %v3377
    %v3474 = vunpack.c.l.b16 %v3378
    %v3475 = vunpack.c.h.b16 %v3378
    %v3476 = vunpack.c.l.b16 %v3379
    %v3477 = vunpack.c.h.b16 %v3379
    %v3478 = vunpack.c.l.b16 %v3380
    %v3479 = vunpack.c.h.b16 %v3380
    %v3480 = vunpack.c.l.b16 %v3381
    %v3481 = vunpack.c.h.b16 %v3381
    %v3482 = vunpack.c.l.b16 %v3382
    %v3483 = vunpack.c.h.b16 %v3382
    %v3484 = vunpack.c.l.b16 %v3383
    %v3485 = vunpack.c.h.b16 %v3383
    %v3486 = vunpack.c.l.b16 %v3384
    %v3487 = vunpack.c.h.b16 %v3384
    %v3488 = vunpack.c.l.b16 %v3385
    %v3489 = vunpack.c.h.b16 %v3385
    %v3490 = vunpack.c.l.b16 %v3386
    %v3491 = vunpack.c.h.b16 %v3386
    %v3492 = vunpack.c.l.b16 %v3387
    %v3493 = vunpack.c.h.b16 %v3387
    %v3494 = vunpack.c.l.b16 %v3388
    %v3495 = vunpack.c.h.b16 %v3388
    %v3496 = vunpack.c.l.b16 %v3389
    %v3497 = vunpack.c.h.b16 %v3389
    %v3498 = vunpack.c.l.b16 %v3390
    %v3499 = vunpack.c.h.b16 %v3390
    %v3500 = vunpack.c.l.b16 %v3391
    %v3501 = vunpack.c.h.b16 %v3391
    %v3502 = vunpack.c.l.b16 %v3392
    %v3503 = vunpack.c.h.b16 %v3392
    %v3504 = vunpack.c.l.b16 %v3393
    %v3505 = vunpack.c.h.b16 %v3393
    %v3506 = vunpack.c.l.b16 %v3394
    %v3507 = vunpack.c.h.b16 %v3394
    %v3508 = vunpack.c.l.b16 %v3395
    %v3509 = vunpack.c.h.b16 %v3395
    %v3510 = vunpack.c.l.b16 %v3396
    %v3511 = vunpack.c.h.b16 %v3396
    %v3512 = vunpack.c.l.b16 %v3397
    %v3513 = vunpack.c.h.b16 %v3397
    %v3514 = vunpack.c.l.b16 %v3398
    %v3515 = vunpack.c.h.b16 %v3398
    %v3516 = vpack.c.b16 %v3456, %v3452
    %v3517 = vpack.c.b16 %v3457, %v3453
    %v3518 = vpack.c.b16 %v3458, %v3454
    %v3519 = vpack.c.b16 %v3459, %v3455
    %v3520 = vpack.c.b16 %v3464, %v3460
    %v3521 = vpack.c.b16 %v3465, %v3461
    %v3522 = vpack.c.b16 %v3466, %v3462
    %v3523 = vpack.c.b16 %v3467, %v3463
    %v3524 = vpack.c.b16 %v3472, %v3468
    %v3525 = vpack.c.b16 %v3473, %v3469
    %v3526 = vpack.c.b16 %v3474, %v3470
    %v3527 = vpack.c.b16 %v3475, %v3471
    %v3528 = vpack.c.b16 %v3480, %v3476
    %v3529 = vpack.c.b16 %v3481, %v3477
    %v3530 = vpack.c.b16 %v3482, %v3478
    %v3531 = vpack.c.b16 %v3483, %v3479
    %v3532 = vpack.c.b16 %v3488, %v3484
    %v3533 = vpack.c.b16 %v3489, %v3485
    %v3534 = vpack.c.b16 %v3490, %v3486
    %v3535 = vpack.c.b16 %v3491, %v3487
    %v3536 = vpack.c.b16 %v3496, %v3492
    %v3537 = vpack.c.b16 %v3497, %v3493
    %v3538 = vpack.c.b16 %v3498, %v3494
    %v3539 = vpack.c.b16 %v3499, %v3495
    %v3540 = vpack.c.b16 %v3504, %v3500
    %v3541 = vpack.c.b16 %v3505, %v3501
    %v3542 = vpack.c.b16 %v3506, %v3502
    %v3543 = vpack.c.b16 %v3507, %v3503
    %v3544 = vpack.c.b16 %v3512, %v3508
    %v3545 = vpack.c.b16 %v3513, %v3509
    %v3546 = vpack.c.b16 %v3514, %v3510
    %v3547 = vpack.c.b16 %v3515, %v3511
    %3580 = vmatprep.subr.bf16.mxu0 %v3517
    %3581 = vmatpush1.bf16.msra.mxu0 %v3516
    %3582 = vmatprep.subr.bf16.mxu0 %v3521
    %3583 = vmatpush1.bf16.msra.mxu0 %v3520
    %3584 = vmatprep.subr.bf16.mxu0 %v3525
    %3585 = vmatpush1.bf16.msra.mxu0 %v3524
    %3586 = vmatprep.subr.bf16.mxu0 %v3529
    %3587 = vmatpush1.bf16.msra.mxu0 %v3528
    %3588 = vmatprep.subr.bf16.mxu0 %v3533
    %3589 = vmatpush1.bf16.msra.mxu0 %v3532
    %3590 = vmatprep.subr.bf16.mxu0 %v3537
    %3591 = vmatpush1.bf16.msra.mxu0 %v3536
    %3592 = vmatprep.subr.bf16.mxu0 %v3541
    %3593 = vmatpush1.bf16.msra.mxu0 %v3540
    %3594 = vmatprep.subr.bf16.mxu0 %v3545
    %3595 = vmatpush1.bf16.msra.mxu0 %v3544
    %3596 = vmatprep.subr.bf16.mxu0 0
    %3597 = vmatpush1.bf16.msra.mxu0 0
    %3598 = vmatprep.subr.bf16.mxu0 0
    %3599 = vmatpush1.bf16.msra.mxu0 0
    %3600 = vmatprep.subr.bf16.mxu0 0
    %3601 = vmatpush1.bf16.msra.mxu0 0
    %3602 = vmatprep.subr.bf16.mxu0 0
    %3603 = vmatpush1.bf16.msra.mxu0 0
    %3604 = vmatprep.subr.bf16.mxu0 0
    %3605 = vmatpush1.bf16.msra.mxu0 0
    %3606 = vmatprep.subr.bf16.mxu0 0
    %3607 = vmatpush1.bf16.msra.mxu0 0
    %3608 = vmatprep.subr.bf16.mxu0 0
    %3609 = vmatpush1.bf16.msra.mxu0 0
    %3610 = vmatprep.subr.bf16.mxu0 0
    %3611 = vmatpush1.bf16.msra.mxu0 0
    %3612 = vmatprep.mubr.bf16.mxu0 0
    %3613 = vmatmul.mubr.bf16.gmra.mrb[0].mxu0 %v3364
    %v3614 = vpop.f32.mrb[0].mxu0
    %v3615 = vadd.f32 %v3403, %v3614
    %v3616 = vpop.f32.mrb[0].mxu0
    %v3617 = vadd.f32 %v3407, %v3616
    %v3618 = vpop.f32.mrb[0].mxu0
    %v3619 = vadd.f32 %v3403, %v3618
    %v3620 = vpop.f32.mrb[0].mxu0
    %v3621 = vadd.f32 %v3407, %v3620
    %3622 = vmatprep.mubr.bf16.mxu0 0
    %3623 = vmatmul.mubr.bf16.gmra.mrb[0].mxu0 %v3365
    %v3624 = vpop.f32.mrb[0].mxu0
    %v3625 = vadd.f32 %v3403, %v3624
    %v3626 = vpop.f32.mrb[0].mxu0
    %v3627 = vadd.f32 %v3407, %v3626
    %v3628 = vpop.f32.mrb[0].mxu0
    %v3629 = vadd.f32 %v3403, %v3628
    %v3630 = vpop.f32.mrb[0].mxu0
    %v3631 = vadd.f32 %v3407, %v3630
    %3632 = vdwg.mxu0
    %3633 = vmatprep.subr.bf16.mxu0 %v3519
    %3634 = vmatpush1.bf16.msra.mxu0 %v3518
    %3635 = vmatprep.subr.bf16.mxu0 %v3523
    %3636 = vmatpush1.bf16.msra.mxu0 %v3522
    %3637 = vmatprep.subr.bf16.mxu0 %v3527
    %3638 = vmatpush1.bf16.msra.mxu0 %v3526
    %3639 = vmatprep.subr.bf16.mxu0 %v3531
    %3640 = vmatpush1.bf16.msra.mxu0 %v3530
    %3641 = vmatprep.subr.bf16.mxu0 %v3535
    %3642 = vmatpush1.bf16.msra.mxu0 %v3534
    %3643 = vmatprep.subr.bf16.mxu0 %v3539
    %3644 = vmatpush1.bf16.msra.mxu0 %v3538
    %3645 = vmatprep.subr.bf16.mxu0 %v3543
    %3646 = vmatpush1.bf16.msra.mxu0 %v3542
    %3647 = vmatprep.subr.bf16.mxu0 %v3547
    %3648 = vmatpush1.bf16.msra.mxu0 %v3546
    %3649 = vmatprep.subr.bf16.mxu0 0
    %3650 = vmatpush1.bf16.msra.mxu0 0
    %3651 = vmatprep.subr.bf16.mxu0 0
    %3652 = vmatpush1.bf16.msra.mxu0 0
    %3653 = vmatprep.subr.bf16.mxu0 0
    %3654 = vmatpush1.bf16.msra.mxu0 0
    %3655 = vmatprep.subr.bf16.mxu0 0
    %3656 = vmatpush1.bf16.msra.mxu0 0
    %3657 = vmatprep.subr.bf16.mxu0 0
    %3658 = vmatpush1.bf16.msra.mxu0 0
    %3659 = vmatprep.subr.bf16.mxu0 0
    %3660 = vmatpush1.bf16.msra.mxu0 0
    %3661 = vmatprep.subr.bf16.mxu0 0
    %3662 = vmatpush1.bf16.msra.mxu0 0
    %3663 = vmatprep.subr.bf16.mxu0 0
    %3664 = vmatpush1.bf16.msra.mxu0 0
    %3665 = vmatprep.mubr.bf16.mxu0 0
    %3666 = vmatmul.mubr.bf16.gmra.mrb[0].mxu0 %v3364
    %v3667 = vpop.f32.mrb[0].mxu0
    %v3668 = vadd.f32 %v3411, %v3667
    %v3669 = vpop.f32.mrb[0].mxu0
    %v3670 = vadd.f32 %v3415, %v3669
    %v3671 = vpop.f32.mrb[0].mxu0
    %v3672 = vadd.f32 %v3411, %v3671
    %v3673 = vpop.f32.mrb[0].mxu0
    %v3674 = vadd.f32 %v3415, %v3673
    %3675 = vmatprep.mubr.bf16.mxu0 0
    %3676 = vmatmul.mubr.bf16.gmra.mrb[0].mxu0 %v3365
    %v3677 = vpop.f32.mrb[0].mxu0
    %v3678 = vadd.f32 %v3411, %v3677
    %v3679 = vpop.f32.mrb[0].mxu0
    %v3680 = vadd.f32 %v3415, %v3679
    %v3681 = vpop.f32.mrb[0].mxu0
    %v3682 = vadd.f32 %v3411, %v3681
    %v3683 = vpop.f32.mrb[0].mxu0
    %v3684 = vadd.f32 %v3415, %v3683
    %3685 = vdwg.mxu0
    %v3686 = vmax.f32 %v3615, 0.0
    %v3687 = vmax.f32 %v3617, 0.0
    %v3688 = vmax.f32 %v3668, 0.0
    %v3689 = vmax.f32 %v3670, 0.0
    %v3690 = vmax.f32 %v3619, 0.0
    %v3691 = vmax.f32 %v3621, 0.0
    %v3692 = vmax.f32 %v3672, 0.0
    %v3693 = vmax.f32 %v3674, 0.0
    %v3694 = vmax.f32 %v3625, 0.0
    %v3695 = vmax.f32 %v3627, 0.0
    %v3696 = vmax.f32 %v3678, 0.0
    %v3697 = vmax.f32 %v3680, 0.0
    %v3698 = vmax.f32 %v3629, 0.0
    %v3699 = vmax.f32 %v3631, 0.0
    %v3700 = vmax.f32 %v3682, 0.0
    %v3701 = vmax.f32 %v3684, 0.0
    %v3702 = vpack.c.bf16 %v3690, %v3686
    %v3703 = vpack.c.bf16 %v3691, %v3687
    %v3704 = vpack.c.bf16 %v3692, %v3688
    %v3705 = vpack.c.bf16 %v3693, %v3689
    %v3706 = vpack.c.bf16 %v3698, %v3694
    %v3707 = vpack.c.bf16 %v3699, %v3695
    %v3708 = vpack.c.bf16 %v3700, %v3696
    %v3709 = vpack.c.bf16 %v3701, %v3697
    %s3710 = scalar_lea.vmem [#allocation11], 256
    %v3711 = vld [vmem:[%s3710] sm:$0xf]
    %v3712 = vld [vmem:[%s3710 + $0x4] sm:$0xf]
    %v3713 = vld [vmem:[%s3710 + $0x8] sm:$0xf]
    %v3714 = vld [vmem:[%s3710 + $0xc] sm:$0xf]
    %v3715 = vld [vmem:[%s3710 + $0x10] sm:$0xf]
    %v3716 = vld [vmem:[%s3710 + $0x14] sm:$0xf]
    %v3717 = vld [vmem:[%s3710 + $0x18] sm:$0xf]
    %v3718 = vld [vmem:[%s3710 + $0x1c] sm:$0xf]
    %v3719 = vld [vmem:[%s3710 + $0x20] sm:$0xf]
    %v3720 = vld [vmem:[%s3710 + $0x24] sm:$0xf]
    %v3721 = vld [vmem:[%s3710 + $0x28] sm:$0xf]
    %v3722 = vld [vmem:[%s3710 + $0x2c] sm:$0xf]
    %v3723 = vld [vmem:[%s3710 + $0x30] sm:$0xf]
    %v3724 = vld [vmem:[%s3710 + $0x34] sm:$0xf]
    %v3725 = vld [vmem:[%s3710 + $0x38] sm:$0xf]
    %v3726 = vld [vmem:[%s3710 + $0x3c] sm:$0xf]
    %v3727 = vld [vmem:[%s3710 + $0x40] sm:$0xf]
    %v3728 = vld [vmem:[%s3710 + $0x44] sm:$0xf]
    %v3729 = vld [vmem:[%s3710 + $0x48] sm:$0xf]
    %v3730 = vld [vmem:[%s3710 + $0x4c] sm:$0xf]
    %v3731 = vld [vmem:[%s3710 + $0x50] sm:$0xf]
    %v3732 = vld [vmem:[%s3710 + $0x54] sm:$0xf]
    %v3733 = vld [vmem:[%s3710 + $0x58] sm:$0xf]
    %v3734 = vld [vmem:[%s3710 + $0x5c] sm:$0xf]
    %v3735 = vld [vmem:[%s3710 + $0x60] sm:$0xf]
    %v3736 = vld [vmem:[%s3710 + $0x64] sm:$0xf]
    %v3737 = vld [vmem:[%s3710 + $0x68] sm:$0xf]
    %v3738 = vld [vmem:[%s3710 + $0x6c] sm:$0xf]
    %v3739 = vld [vmem:[%s3710 + $0x70] sm:$0xf]
    %v3740 = vld [vmem:[%s3710 + $0x74] sm:$0xf]
    %v3741 = vld [vmem:[%s3710 + $0x78] sm:$0xf]
    %v3742 = vld [vmem:[%s3710 + $0x7c] sm:$0xf]
    %v3743 = vld [vmem:[%s3710 + $0x80] sm:$0xf]
    %v3744 = vld [vmem:[%s3710 + $0x84] sm:$0xf]
    %v3745 = vld [vmem:[%s3710 + $0x88] sm:$0xf]
    %v3746 = vld [vmem:[%s3710 + $0x8c] sm:$0xf]
    %v3747 = vld [vmem:[%s3710 + $0x90] sm:$0xf]
    %v3748 = vld [vmem:[%s3710 + $0x94] sm:$0xf]
    %v3749 = vld [vmem:[%s3710 + $0x98] sm:$0xf]
    %v3750 = vld [vmem:[%s3710 + $0x9c] sm:$0xf]
    %v3751 = vld [vmem:[%s3710 + $0xa0] sm:$0xf]
    %v3752 = vld [vmem:[%s3710 + $0xa4] sm:$0xf]
    %v3753 = vld [vmem:[%s3710 + $0xa8] sm:$0xf]
    %v3754 = vld [vmem:[%s3710 + $0xac] sm:$0xf]
    %v3755 = vld [vmem:[%s3710 + $0xb0] sm:$0xf]
    %v3756 = vld [vmem:[%s3710 + $0xb4] sm:$0xf]
    %v3757 = vld [vmem:[%s3710 + $0xb8] sm:$0xf]
    %v3758 = vld [vmem:[%s3710 + $0xbc] sm:$0xf]
    %v3759 = vld [vmem:[%s3710 + $0xc0] sm:$0xf]
    %v3760 = vld [vmem:[%s3710 + $0xc4] sm:$0xf]
    %v3761 = vld [vmem:[%s3710 + $0xc8] sm:$0xf]
    %v3762 = vld [vmem:[%s3710 + $0xcc] sm:$0xf]
    %v3763 = vld [vmem:[%s3710 + $0xd0] sm:$0xf]
    %v3764 = vld [vmem:[%s3710 + $0xd4] sm:$0xf]
    %v3765 = vld [vmem:[%s3710 + $0xd8] sm:$0xf]
    %v3766 = vld [vmem:[%s3710 + $0xdc] sm:$0xf]
    %v3767 = vld [vmem:[%s3710 + $0xe0] sm:$0xf]
    %v3768 = vld [vmem:[%s3710 + $0xe4] sm:$0xf]
    %v3769 = vld [vmem:[%s3710 + $0xe8] sm:$0xf]
    %v3770 = vld [vmem:[%s3710 + $0xec] sm:$0xf]
    %v3771 = vld [vmem:[%s3710 + $0xf0] sm:$0xf]
    %v3772 = vld [vmem:[%s3710 + $0xf4] sm:$0xf]
    %v3773 = vld [vmem:[%s3710 + $0xf8] sm:$0xf]
    %v3774 = vld [vmem:[%s3710 + $0xfc] sm:$0xf]
    %v3776 = vlaneseq
    %v3777 = vshrl.u32 %v3776, 7
    %v3778 = vsub.s32 0, %v3777
    %v3779 = vrot.slane %v2222, %v3778
    %v3845 = vunpack.c.l.b16 %v3711
    %v3846 = vunpack.c.l.b16 %v3712
    %v3847 = vunpack.c.l.b16 %v3713
    %v3848 = vunpack.c.l.b16 %v3714
    %v3849 = vunpack.c.l.b16 %v3715
    %v3850 = vunpack.c.l.b16 %v3716
    %v3851 = vunpack.c.l.b16 %v3717
    %v3852 = vunpack.c.l.b16 %v3718
    %v3853 = vunpack.c.l.b16 %v3719
    %v3854 = vunpack.c.l.b16 %v3720
    %v3855 = vunpack.c.l.b16 %v3721
    %v3856 = vunpack.c.l.b16 %v3722
    %v3857 = vunpack.c.l.b16 %v3723
    %v3858 = vunpack.c.l.b16 %v3724
    %v3859 = vunpack.c.l.b16 %v3725
    %v3860 = vunpack.c.l.b16 %v3726
    %v3861 = vunpack.c.l.b16 %v3727
    %v3862 = vunpack.c.l.b16 %v3728
    %v3863 = vunpack.c.l.b16 %v3729
    %v3864 = vunpack.c.l.b16 %v3730
    %v3865 = vunpack.c.l.b16 %v3731
    %v3866 = vunpack.c.l.b16 %v3732
    %v3867 = vunpack.c.l.b16 %v3733
    %v3868 = vunpack.c.l.b16 %v3734
    %v3869 = vunpack.c.l.b16 %v3735
    %v3870 = vunpack.c.l.b16 %v3736
    %v3871 = vunpack.c.l.b16 %v3737
    %v3872 = vunpack.c.l.b16 %v3738
    %v3873 = vunpack.c.l.b16 %v3739
    %v3874 = vunpack.c.l.b16 %v3740
    %v3875 = vunpack.c.l.b16 %v3741
    %v3876 = vunpack.c.l.b16 %v3742
    %v3877 = vunpack.c.l.b16 %v3743
    %v3878 = vunpack.c.l.b16 %v3744
    %v3879 = vunpack.c.l.b16 %v3745
    %v3880 = vunpack.c.l.b16 %v3746
    %v3881 = vunpack.c.l.b16 %v3747
    %v3882 = vunpack.c.l.b16 %v3748
    %v3883 = vunpack.c.l.b16 %v3749
    %v3884 = vunpack.c.l.b16 %v3750
    %v3885 = vunpack.c.l.b16 %v3751
    %v3886 = vunpack.c.l.b16 %v3752
    %v3887 = vunpack.c.l.b16 %v3753
    %v3888 = vunpack.c.l.b16 %v3754
    %v3889 = vunpack.c.l.b16 %v3755
    %v3890 = vunpack.c.l.b16 %v3756
    %v3891 = vunpack.c.l.b16 %v3757
    %v3892 = vunpack.c.l.b16 %v3758
    %v3893 = vunpack.c.l.b16 %v3759
    %v3894 = vunpack.c.l.b16 %v3760
    %v3895 = vunpack.c.l.b16 %v3761
    %v3896 = vunpack.c.l.b16 %v3762
    %v3897 = vunpack.c.l.b16 %v3763
    %v3898 = vunpack.c.l.b16 %v3764
    %v3899 = vunpack.c.l.b16 %v3765
    %v3900 = vunpack.c.l.b16 %v3766
    %v3901 = vunpack.c.l.b16 %v3767
    %v3902 = vunpack.c.l.b16 %v3768
    %v3903 = vunpack.c.l.b16 %v3769
    %v3904 = vunpack.c.l.b16 %v3770
    %v3905 = vunpack.c.l.b16 %v3771
    %v3906 = vunpack.c.l.b16 %v3772
    %v3907 = vunpack.c.l.b16 %v3773
    %v3908 = vunpack.c.l.b16 %v3774
    %v3909 = vpack.c.b16 %v3846, %v3845
    %v3910 = vpack.c.b16 %v3848, %v3847
    %v3911 = vpack.c.b16 %v3850, %v3849
    %v3912 = vpack.c.b16 %v3852, %v3851
    %v3913 = vpack.c.b16 %v3854, %v3853
    %v3914 = vpack.c.b16 %v3856, %v3855
    %v3915 = vpack.c.b16 %v3858, %v3857
    %v3916 = vpack.c.b16 %v3860, %v3859
    %v3917 = vpack.c.b16 %v3862, %v3861
    %v3918 = vpack.c.b16 %v3864, %v3863
    %v3919 = vpack.c.b16 %v3866, %v3865
    %v3920 = vpack.c.b16 %v3868, %v3867
    %v3921 = vpack.c.b16 %v3870, %v3869
    %v3922 = vpack.c.b16 %v3872, %v3871
    %v3923 = vpack.c.b16 %v3874, %v3873
    %v3924 = vpack.c.b16 %v3876, %v3875
    %v3925 = vpack.c.b16 %v3878, %v3877
    %v3926 = vpack.c.b16 %v3880, %v3879
    %v3927 = vpack.c.b16 %v3882, %v3881
    %v3928 = vpack.c.b16 %v3884, %v3883
    %v3929 = vpack.c.b16 %v3886, %v3885
    %v3930 = vpack.c.b16 %v3888, %v3887
    %v3931 = vpack.c.b16 %v3890, %v3889
    %v3932 = vpack.c.b16 %v3892, %v3891
    %v3933 = vpack.c.b16 %v3894, %v3893
    %v3934 = vpack.c.b16 %v3896, %v3895
    %v3935 = vpack.c.b16 %v3898, %v3897
    %v3936 = vpack.c.b16 %v3900, %v3899
    %v3937 = vpack.c.b16 %v3902, %v3901
    %v3938 = vpack.c.b16 %v3904, %v3903
    %v3939 = vpack.c.b16 %v3906, %v3905
    %v3940 = vpack.c.b16 %v3908, %v3907
    %3973 = vmatprep.subr.bf16.mxu0 0
    %3974 = vmatpush1.bf16.msra.mxu0 %v3909
    %3975 = vmatprep.subr.bf16.mxu0 0
    %3976 = vmatpush1.bf16.msra.mxu0 %v3910
    %3977 = vmatprep.subr.bf16.mxu0 0
    %3978 = vmatpush1.bf16.msra.mxu0 %v3911
    %3979 = vmatprep.subr.bf16.mxu0 0
    %3980 = vmatpush1.bf16.msra.mxu0 %v3912
    %3981 = vmatprep.subr.bf16.mxu0 0
    %3982 = vmatpush1.bf16.msra.mxu0 %v3913
    %3983 = vmatprep.subr.bf16.mxu0 0
    %3984 = vmatpush1.bf16.msra.mxu0 %v3914
    %3985 = vmatprep.subr.bf16.mxu0 0
    %3986 = vmatpush1.bf16.msra.mxu0 %v3915
    %3987 = vmatprep.subr.bf16.mxu0 0
    %3988 = vmatpush1.bf16.msra.mxu0 %v3916
    %3989 = vmatprep.subr.bf16.mxu0 0
    %3990 = vmatpush1.bf16.msra.mxu0 %v3917
    %3991 = vmatprep.subr.bf16.mxu0 0
    %3992 = vmatpush1.bf16.msra.mxu0 %v3918
    %3993 = vmatprep.subr.bf16.mxu0 0
    %3994 = vmatpush1.bf16.msra.mxu0 %v3919
    %3995 = vmatprep.subr.bf16.mxu0 0
    %3996 = vmatpush1.bf16.msra.mxu0 %v3920
    %3997 = vmatprep.subr.bf16.mxu0 0
    %3998 = vmatpush1.bf16.msra.mxu0 %v3921
    %3999 = vmatprep.subr.bf16.mxu0 0
    %4000 = vmatpush1.bf16.msra.mxu0 %v3922
    %4001 = vmatprep.subr.bf16.mxu0 0
    %4002 = vmatpush1.bf16.msra.mxu0 %v3923
    %4003 = vmatprep.subr.bf16.mxu0 0
    %4004 = vmatpush1.bf16.msra.mxu0 %v3924
    %4005 = vmatprep.mubr.bf16.mxu0 %v3703
    %4006 = vmatmul.mubr.bf16.gmra.mrb[0].mxu0 %v3702
    %v4007 = vpop.f32.mrb[0].mxu0
    %v4008 = vadd.f32 %v3779, %v4007
    %v4009 = vpop.f32.mrb[0].mxu0
    %v4010 = vpop.f32.mrb[0].mxu0
    %v4011 = vadd.f32 %v3779, %v4010
    %v4012 = vpop.f32.mrb[0].mxu0
    %4013 = vmatprep.mubr.bf16.mxu0 %v3707
    %4014 = vmatmul.mubr.bf16.gmra.mrb[0].mxu0 %v3706
    %v4015 = vpop.f32.mrb[0].mxu0
    %v4016 = vadd.f32 %v3779, %v4015
    %v4017 = vpop.f32.mrb[0].mxu0
    %v4018 = vpop.f32.mrb[0].mxu0
    %v4019 = vadd.f32 %v3779, %v4018
    %v4020 = vpop.f32.mrb[0].mxu0
    %4021 = vdwg.mxu0
    %4022 = vmatprep.subr.bf16.mxu0 0
    %4023 = vmatpush1.bf16.msra.mxu0 %v3925
    %4024 = vmatprep.subr.bf16.mxu0 0
    %4025 = vmatpush1.bf16.msra.mxu0 %v3926
    %4026 = vmatprep.subr.bf16.mxu0 0
    %4027 = vmatpush1.bf16.msra.mxu0 %v3927
    %4028 = vmatprep.subr.bf16.mxu0 0
    %4029 = vmatpush1.bf16.msra.mxu0 %v3928
    %4030 = vmatprep.subr.bf16.mxu0 0
    %4031 = vmatpush1.bf16.msra.mxu0 %v3929
    %4032 = vmatprep.subr.bf16.mxu0 0
    %4033 = vmatpush1.bf16.msra.mxu0 %v3930
    %4034 = vmatprep.subr.bf16.mxu0 0
    %4035 = vmatpush1.bf16.msra.mxu0 %v3931
    %4036 = vmatprep.subr.bf16.mxu0 0
    %4037 = vmatpush1.bf16.msra.mxu0 %v3932
    %4038 = vmatprep.subr.bf16.mxu0 0
    %4039 = vmatpush1.bf16.msra.mxu0 %v3933
    %4040 = vmatprep.subr.bf16.mxu0 0
    %4041 = vmatpush1.bf16.msra.mxu0 %v3934
    %4042 = vmatprep.subr.bf16.mxu0 0
    %4043 = vmatpush1.bf16.msra.mxu0 %v3935
    %4044 = vmatprep.subr.bf16.mxu0 0
    %4045 = vmatpush1.bf16.msra.mxu0 %v3936
    %4046 = vmatprep.subr.bf16.mxu0 0
    %4047 = vmatpush1.bf16.msra.mxu0 %v3937
    %4048 = vmatprep.subr.bf16.mxu0 0
    %4049 = vmatpush1.bf16.msra.mxu0 %v3938
    %4050 = vmatprep.subr.bf16.mxu0 0
    %4051 = vmatpush1.bf16.msra.mxu0 %v3939
    %4052 = vmatprep.subr.bf16.mxu0 0
    %4053 = vmatpush1.bf16.msra.mxu0 %v3940
    %4054 = vmatprep.mubr.bf16.mxu0 %v3705
    %4055 = vmatmul.mubr.bf16.gmra.mrb[0].mxu0 %v3704
    %v4056 = vpop.f32.mrb[0].mxu0
    %v4057 = vadd.f32 %v4008, %v4056
    %v4058 = vpop.f32.mrb[0].mxu0
    %v4059 = vpop.f32.mrb[0].mxu0
    %v4060 = vadd.f32 %v4011, %v4059
    %v4061 = vpop.f32.mrb[0].mxu0
    %4062 = vmatprep.mubr.bf16.mxu0 %v3709
    %4063 = vmatmul.mubr.bf16.gmra.mrb[0].mxu0 %v3708
    %v4064 = vpop.f32.mrb[0].mxu0
    %v4065 = vadd.f32 %v4016, %v4064
    %v4066 = vpop.f32.mrb[0].mxu0
    %v4067 = vpop.f32.mrb[0].mxu0
    %v4068 = vadd.f32 %v4019, %v4067
    %v4069 = vpop.f32.mrb[0].mxu0
    %4070 = vdwg.mxu0
    %v4071 = vadd.f32 %v3296, %v4057
    %v4072 = vadd.f32 %v3297, %v4060
    %v4073 = vadd.f32 %v3298, %v4065
    %v4074 = vadd.f32 %v3299, %v4068
    %s4075 = scalar_lea.vmem [#allocation5], 64
    %v4076 = vld [vmem:[%s4075] ss:$8 sm:$0xf]
    %s4077 = scalar_lea.vmem [#allocation5], 65
    %v4078 = vld [vmem:[%s4077] ss:$8 sm:$0xf]
    %s4079 = scalar_lea.vmem [#allocation5], 66
    %v4080 = vld [vmem:[%s4079] ss:$8 sm:$0xf]
    %4081 = vadd.xlane.f32.xlu0 %v4071
    %v4082 = vpop.xlane.xlu0 %4081
    %4083 = vadd.xlane.f32.xlu0 %v4072
    %v4084 = vpop.xlane.xlu0 %4083
    %4085 = vadd.xlane.f32.xlu0 %v4073
    %v4086 = vpop.xlane.xlu0 %4085
    %4087 = vadd.xlane.f32.xlu0 %v4074
    %v4088 = vpop.xlane.xlu0 %4087
    %v4089 = vmul.f32 %v4082, %v372
    %v4090 = vmul.f32 %v4084, %v372
    %v4091 = vmul.f32 %v4086, %v372
    %v4092 = vmul.f32 %v4088, %v372
    %v4093 = vsub.f32 %v4071, %v4089
    %v4094 = vsub.f32 %v4072, %v4090
    %v4095 = vsub.f32 %v4073, %v4091
    %v4096 = vsub.f32 %v4074, %v4092
    %v4097 = vmul.f32 %v4093, %v4093
    %v4098 = vmul.f32 %v4094, %v4094
    %v4099 = vmul.f32 %v4095, %v4095
    %v4100 = vmul.f32 %v4096, %v4096
    %4101 = vadd.xlane.f32.xlu0 %v4097
    %v4102 = vpop.xlane.xlu0 %4101
    %4103 = vadd.xlane.f32.xlu0 %v4098
    %v4104 = vpop.xlane.xlu0 %4103
    %4105 = vadd.xlane.f32.xlu0 %v4099
    %v4106 = vpop.xlane.xlu0 %4105
    %4107 = vadd.xlane.f32.xlu0 %v4100
    %v4108 = vpop.xlane.xlu0 %4107
    %v4109 = vmul.f32 %v4102, %v372
    %v4110 = vmul.f32 %v4104, %v372
    %v4111 = vmul.f32 %v4106, %v372
    %v4112 = vmul.f32 %v4108, %v372
    %v4113 = vadd.f32 %v4109, 1e-05
    %v4114 = vadd.f32 %v4110, 1e-05
    %v4115 = vadd.f32 %v4111, 1e-05
    %v4116 = vadd.f32 %v4112, 1e-05
    %v4117 = vrsqrt.pop %v4113
    %v4118 = vrsqrt.pop %v4114
    %v4119 = vrsqrt.pop %v4115
    %v4120 = vrsqrt.pop %v4116
    %v4121 = vmul.f32 %v4093, %v4117
    %v4122 = vmul.f32 %v4094, %v4118
    %v4123 = vmul.f32 %v4095, %v4119
    %v4124 = vmul.f32 %v4096, %v4120
    %v4126 = vlaneseq
    %v4127 = vshrl.u32 %v4126, 7
    %v4128 = vsub.s32 0, %v4127
    %v4129 = vrot.slane %v4076, %v4128
    %v4131 = vmul.f32 %v4121, %v4129
    %v4132 = vmul.f32 %v4122, %v4129
    %v4133 = vmul.f32 %v4123, %v4129
    %v4134 = vmul.f32 %v4124, %v4129
    %v4136 = vlaneseq
    %v4137 = vshrl.u32 %v4136, 7
    %v4138 = vsub.s32 0, %v4137
    %v4139 = vrot.slane %v4078, %v4138
    %v4141 = vadd.f32 %v4131, %v4139
    %v4142 = vadd.f32 %v4132, %v4139
    %v4143 = vadd.f32 %v4133, %v4139
    %v4144 = vadd.f32 %v4134, %v4139
    %v4145 = vpack.c.bf16 %v4142, %v4141
    %v4146 = vpack.c.bf16 %v4144, %v4143
    %v4147 = vld [vmem:[%s8] sm:$0xf]
    %v4148 = vld [vmem:[%s8 + $0x4] sm:$0xf]
    %v4149 = vld [vmem:[%s8 + $0x8] sm:$0xf]
    %v4150 = vld [vmem:[%s8 + $0xc] sm:$0xf]
    %v4151 = vld [vmem:[%s8 + $0x10] sm:$0xf]
    %v4152 = vld [vmem:[%s8 + $0x14] sm:$0xf]
    %v4153 = vld [vmem:[%s8 + $0x18] sm:$0xf]
    %v4154 = vld [vmem:[%s8 + $0x1c] sm:$0xf]
    %v4155 = vld [vmem:[%s8 + $0x20] sm:$0xf]
    %v4156 = vld [vmem:[%s8 + $0x24] sm:$0xf]
    %v4157 = vld [vmem:[%s8 + $0x28] sm:$0xf]
    %v4158 = vld [vmem:[%s8 + $0x2c] sm:$0xf]
    %v4159 = vld [vmem:[%s8 + $0x30] sm:$0xf]
    %v4160 = vld [vmem:[%s8 + $0x34] sm:$0xf]
    %v4161 = vld [vmem:[%s8 + $0x38] sm:$0xf]
    %v4162 = vld [vmem:[%s8 + $0x3c] sm:$0xf]
    %v4164 = vlaneseq
    %v4165 = vshrl.u32 %v4164, 7
    %v4166 = vsub.s32 0, %v4165
    %v4167 = vrot.slane %v4080, %v4166
    %v4185 = vunpack.c.l.b16 %v4147
    %v4186 = vunpack.c.l.b16 %v4148
    %v4187 = vunpack.c.l.b16 %v4149
    %v4188 = vunpack.c.l.b16 %v4150
    %v4189 = vunpack.c.l.b16 %v4151
    %v4190 = vunpack.c.l.b16 %v4152
    %v4191 = vunpack.c.l.b16 %v4153
    %v4192 = vunpack.c.l.b16 %v4154
    %v4193 = vunpack.c.l.b16 %v4155
    %v4194 = vunpack.c.l.b16 %v4156
    %v4195 = vunpack.c.l.b16 %v4157
    %v4196 = vunpack.c.l.b16 %v4158
    %v4197 = vunpack.c.l.b16 %v4159
    %v4198 = vunpack.c.l.b16 %v4160
    %v4199 = vunpack.c.l.b16 %v4161
    %v4200 = vunpack.c.l.b16 %v4162
    %v4201 = vpack.c.b16 %v4186, %v4185
    %v4202 = vpack.c.b16 %v4188, %v4187
    %v4203 = vpack.c.b16 %v4190, %v4189
    %v4204 = vpack.c.b16 %v4192, %v4191
    %v4205 = vpack.c.b16 %v4194, %v4193
    %v4206 = vpack.c.b16 %v4196, %v4195
    %v4207 = vpack.c.b16 %v4198, %v4197
    %v4208 = vpack.c.b16 %v4200, %v4199
    %4217 = vmatprep.subr.bf16.mxu0 0
    %4218 = vmatpush1.bf16.msra.mxu0 %v4201
    %4219 = vmatprep.subr.bf16.mxu0 0
    %4220 = vmatpush1.bf16.msra.mxu0 %v4202
    %4221 = vmatprep.subr.bf16.mxu0 0
    %4222 = vmatpush1.bf16.msra.mxu0 %v4203
    %4223 = vmatprep.subr.bf16.mxu0 0
    %4224 = vmatpush1.bf16.msra.mxu0 %v4204
    %4225 = vmatprep.subr.bf16.mxu0 0
    %4226 = vmatpush1.bf16.msra.mxu0 %v4205
    %4227 = vmatprep.subr.bf16.mxu0 0
    %4228 = vmatpush1.bf16.msra.mxu0 %v4206
    %4229 = vmatprep.subr.bf16.mxu0 0
    %4230 = vmatpush1.bf16.msra.mxu0 %v4207
    %4231 = vmatprep.subr.bf16.mxu0 0
    %4232 = vmatpush1.bf16.msra.mxu0 %v4208
    %4233 = vmatprep.subr.bf16.mxu0 0
    %4234 = vmatpush1.bf16.msra.mxu0 0
    %4235 = vmatprep.subr.bf16.mxu0 0
    %4236 = vmatpush1.bf16.msra.mxu0 0
    %4237 = vmatprep.subr.bf16.mxu0 0
    %4238 = vmatpush1.bf16.msra.mxu0 0
    %4239 = vmatprep.subr.bf16.mxu0 0
    %4240 = vmatpush1.bf16.msra.mxu0 0
    %4241 = vmatprep.subr.bf16.mxu0 0
    %4242 = vmatpush1.bf16.msra.mxu0 0
    %4243 = vmatprep.subr.bf16.mxu0 0
    %4244 = vmatpush1.bf16.msra.mxu0 0
    %4245 = vmatprep.subr.bf16.mxu0 0
    %4246 = vmatpush1.bf16.msra.mxu0 0
    %4247 = vmatprep.subr.bf16.mxu0 0
    %4248 = vmatpush1.bf16.msra.mxu0 0
    %4249 = vmatprep.mubr.bf16.mxu0 0
    %4250 = vmatmul.mubr.bf16.gmra.mrb[0].mxu0 %v4145
    %v4251 = vpop.f32.mrb[0].mxu0
    %v4252 = vadd.f32 %v4167, %v4251
    %v4253 = vpop.f32.mrb[0].mxu0
    %v4254 = vpop.f32.mrb[0].mxu0
    %v4255 = vadd.f32 %v4167, %v4254
    %v4256 = vpop.f32.mrb[0].mxu0
    %4257 = vmatprep.mubr.bf16.mxu0 0
    %4258 = vmatmul.mubr.bf16.gmra.mrb[0].mxu0 %v4146
    %v4259 = vpop.f32.mrb[0].mxu0
    %v4260 = vadd.f32 %v4167, %v4259
    %v4261 = vpop.f32.mrb[0].mxu0
    %v4262 = vpop.f32.mrb[0].mxu0
    %v4263 = vadd.f32 %v4167, %v4262
    %v4264 = vpop.f32.mrb[0].mxu0
    %4265 = vdwg.mxu0
    %4266 = vst [vmem:[#allocation13] sm:$0xff] %v4252
    %4267 = vst [vmem:[#allocation13 + $0x8] sm:$0xff] %v4255
    %4268 = vst [vmem:[#allocation13 + $0x10] sm:$0xff] %v4260
    %4269 = vst [vmem:[#allocation13 + $0x18] sm:$0xff] %v4263
    // Predicated region
    $region62: #{fused_forward.1} parent=1 // pred_check
      _
    $region63: #{fused_forward.1} parent=1 // pred_check_branch
      %4271 = sbr.rel (0) target = $region65
    $region64: #{fused_forward.1} parent=1 // pred_region
      %s4273 = ssub.s32 512, 512
      %4274 = vsyncadd [#allocation4], %s4273
      %s4275 = sshll.u32 [#allocation13], 4
      %s4276 = int_to_ptr.vmem [resolvable:$true] %s4275
      %4281 = dma.vmem_to_hbm [thread:$0]  %s4276, 512, %s9, [#allocation4], 128, 128, 8
    $region65: #{fused_forward.1} parent=1 // pred_fallthru
      _
    // Predicated region
    $region66: #{fused_forward.1} parent=1 // pred_check
      _
    $region67: #{fused_forward.1} parent=1 // pred_check_branch
      %4283 = sbr.rel (0) target = $region69
    $region68: #{fused_forward.1} parent=1 // pred_region
      %4284 = dma.done [#allocation4], 512
    $region69: #{fused_forward.1} parent=1 // pred_fallthru
      _
    %4285 = vsyncpa [#allocation3], 1
    %4286 = vsyncpa [#allocation6], 1
    %4287 = vsyncpa [#allocation9], 1
    %4288 = vsyncpa [#allocation12], 1
    %4289 = vsyncpa [#allocation4], 1

</llo_original>
